<compile_context>
chip_gen: v6e
topology: v6e:2x2x1
jax: 0.10.0
libtpu: 0.0.40
codegen_flags: <defaults>
</compile_context>

<pallas_src>
import functools

import jax
import jax.numpy as jnp
from jax.experimental import pallas as pl
from jax.experimental.pallas import tpu as pltpu

# ----------------------------- config (small) -----------------------------
HIDDEN = 32
NUM_HEADS = 4
NUM_KV_HEADS = 2                       # multi_query_group_num
HEAD_DIM = HIDDEN // NUM_HEADS         # kv_channels (= 8)
FFN_HIDDEN = 64
NUM_LAYERS = 2
VOCAB = 128                            # padded_vocab_size
SEQ_LEN = 8
EPS = 1e-5
ROPE_THETA = 10000.0
ROTARY_DIM = HEAD_DIM // 2             # RotaryEmbedding(head_dim, head_dim // 2, ...)
Q_SIZE = NUM_HEADS * HEAD_DIM          # 32
KV_SIZE = NUM_KV_HEADS * HEAD_DIM      # 16
QKV_OUT = Q_SIZE + 2 * KV_SIZE         # 64
SCALE = HEAD_DIM ** -0.5

LANES = 128                            # TPU vreg lane width
HP = LANES                             # lane-dense (padded) hidden size
QKV_REGION = LANES                     # each of Q / K / V padded to 128 lanes
FFN_PAD = LANES                        # padded ffn_hidden


# ----------------------------- fused kernel -----------------------------
def _glm_stack_kernel(h0_ref, cos_ref, sin_ref, ln1_ref, qkvw_ref, qkvb_ref,
                      densew_ref, ln2_ref, upw_ref, downw_ref, flnw_ref, o_ref,
                      *, num_layers, eps, scale, num_heads, num_kv_heads,
                      head_dim, hidden, qkv_region, ffn_pad):
    """Whole GLMTransformer (all layers + final RMSNorm) in one invocation.

    All activations are (T, 128) lane-dense; padding lanes carry exact zeros
    throughout (zero-padded weights), so RMSNorm divides by the real HIDDEN.
    """
    f32 = jnp.float32
    bf16 = jnp.bfloat16

    h = h0_ref[...]                                   # (T, 128) f32 residual
    t, hp = h.shape

    # -------- hoisted one-time prep (identical for every layer) --------
    row = jax.lax.broadcasted_iota(jnp.int32, (t, t), 0)
    col = jax.lax.broadcasted_iota(jnp.int32, (t, t), 1)
    causal = col <= row

    # RoPE interleaved pair swap on the XLU: partner(j) = j ^ 1.  A rolled
    # lane-iota tells us (independently of the rotate-direction convention)
    # which of the two rotates delivers lane j+1, so the per-lane sin tables
    # are assigned direction-proof.  Pass-through / padding lanes have
    # cos = 1, sin = 0.
    lane = jax.lax.broadcasted_iota(jnp.int32, (t, hp), 1)
    partner = jnp.where(lane % 2 == 0, lane + 1, lane - 1)
    from_plus1 = pltpu.roll(lane, hp - 1, axis=1) == partner
    cos = cos_ref[...]
    sin_sgn = sin_ref[...]
    sin_a = jnp.where(from_plus1, sin_sgn, 0.0)       # multiplies roll(x, hp-1)
    sin_b = jnp.where(from_plus1, 0.0, sin_sgn)       # multiplies roll(x, 1)

    def rope(x):                                      # x*cos + x[j^1]*signed_sin
        return (x * cos
                + pltpu.roll(x, hp - 1, axis=1) * sin_a
                + pltpu.roll(x, 1, axis=1) * sin_b)

    def rms(x, w):                                    # RMSNorm over real lanes
        var = jnp.sum(x * x, axis=-1, keepdims=True) * (1.0 / hidden)
        return x * jax.lax.rsqrt(var + eps) * w

    group = num_heads // num_kv_heads

    for l in range(num_layers):        # static unroll; weights VMEM resident
        # ---------------- self-attention ----------------
        ln1 = rms(h, ln1_ref[l])
        qkv = jnp.dot(ln1.astype(bf16), qkvw_ref[l],
                      preferred_element_type=f32) + qkvb_ref[l]   # (T, 384)
        q = rope(qkv[:, :qkv_region])                  # 128-aligned slices
        k = rope(qkv[:, qkv_region:2 * qkv_region])
        v = qkv[:, 2 * qkv_region:]

        dw = densew_ref[l]                             # (Q_SIZE, 128) bf16
        attn_acc = jnp.zeros((t, hp), f32)
        for hh in range(num_heads):                    # 4 tiny heads, static
            kvh = hh // group                          # GQA by index, no repeat
            qh = q[:, hh * head_dim:(hh + 1) * head_dim].astype(bf16)
            kh = k[:, kvh * head_dim:(kvh + 1) * head_dim].astype(bf16)
            vh = v[:, kvh * head_dim:(kvh + 1) * head_dim].astype(bf16)
            s = jax.lax.dot_general(qh, kh, (((1,), (1,)), ((), ())),
                                    preferred_element_type=f32) * scale
            s = jnp.where(causal, s, -1e30)
            m = jnp.max(s, axis=-1, keepdims=True)
            p = jnp.exp(s - m)
            denom = jnp.sum(p, axis=-1, keepdims=True)
            oh = jnp.dot(p.astype(bf16), vh, preferred_element_type=f32) / denom
            # Fold this head straight into the dense projection; the (8,128)
            # weight slice is sublane-tile aligned, so no head concat needed.
            attn_acc = attn_acc + jnp.dot(
                oh.astype(bf16), dw[hh * head_dim:(hh + 1) * head_dim, :],
                preferred_element_type=f32)
        # apply_residual_connection_post_layernorm = False (standard ChatGLM)
        h = h + attn_acc

        # ---------------- MLP (SiluAndMul) ----------------
        ln2 = rms(h, ln2_ref[l])
        gu = jnp.dot(ln2.astype(bf16), upw_ref[l],
                     preferred_element_type=f32)        # (T, 256)
        gate = gu[:, :ffn_pad]                          # 128-aligned slices
        up = gu[:, ffn_pad:]
        inter = gate * jax.nn.sigmoid(gate) * up
        h = h + jnp.dot(inter.astype(bf16), downw_ref[l],
                        preferred_element_type=f32)

    # post_layer_norm fused; (T, 128) full-vreg store.
    o_ref[...] = rms(h, flnw_ref[...])


# ----------------------------- glue (plain JAX) -----------------------------
def _rope_tables(positions):
    """Per-lane cos / signed-sin for the interleaved (GPT-J style) partial
    rotary, laid out for the 128-lane padded head-major q/k blocks
    (pass-through and padding lanes: cos=1, sin=0)."""
    t = positions.shape[0]
    inv_freq = 1.0 / (ROPE_THETA ** (
        jnp.arange(0, ROTARY_DIM, 2, dtype=jnp.float32) / ROTARY_DIM))
    freqs = positions.astype(jnp.float32)[:, None] * inv_freq[None, :]  # (T, rd/2)
    cos = jnp.repeat(jnp.cos(freqs), 2, axis=-1)                        # (T, rd)
    sin = jnp.repeat(jnp.sin(freqs), 2, axis=-1)
    sign = jnp.tile(jnp.array([-1.0, 1.0], jnp.float32), ROTARY_DIM // 2)
    sin = sin * sign[None, :]
    cos_head = jnp.concatenate(
        [cos, jnp.ones((t, HEAD_DIM - ROTARY_DIM), jnp.float32)], axis=-1)
    sin_head = jnp.concatenate(
        [sin, jnp.zeros((t, HEAD_DIM - ROTARY_DIM), jnp.float32)], axis=-1)
    cos_q = jnp.tile(cos_head, (1, NUM_HEADS))                          # (T, 32)
    sin_q = jnp.tile(sin_head, (1, NUM_HEADS))
    cos_full = jnp.concatenate(
        [cos_q, jnp.ones((t, HP - Q_SIZE), jnp.float32)], axis=-1)      # (T, 128)
    sin_full = jnp.concatenate(
        [sin_q, jnp.zeros((t, HP - Q_SIZE), jnp.float32)], axis=-1)
    return cos_full, sin_full


def chatglm_forward(pp, tokens, positions):
    """pp = padded params (see pad_params)."""
    # TODO(synk): the embedding row gather is data-dependent and stays in
    #             plain JAX; a Pallas version would need per-token DMA.
    h0 = jnp.take(pp["embedding"], tokens, axis=0)        # (T, 128), pads = 0
    cos, sin = _rope_tables(positions)
    t = tokens.shape[0]

    kernel = functools.partial(
        _glm_stack_kernel,
        num_layers=NUM_LAYERS, eps=EPS, scale=SCALE, num_heads=NUM_HEADS,
        num_kv_heads=NUM_KV_HEADS, head_dim=HEAD_DIM, hidden=HIDDEN,
        qkv_region=QKV_REGION, ffn_pad=FFN_PAD)

    out = pl.pallas_call(
        kernel,
        out_shape=jax.ShapeDtypeStruct((t, HP), jnp.float32),
        # Single invocation: default whole-array VMEM blocks for every operand
        # (total weights + activations ~0.2 MiB).
    )(h0, cos, sin, pp["input_ln"], pp["qkv_w"], pp["qkv_b"], pp["dense_w"],
      pp["post_ln"], pp["h_to_4h_w"], pp["4h_to_h_w"], pp["final_ln"])
    return out[:, :HIDDEN]


# ----------------------------- params -----------------------------
def init_params(key):
    """Logical (unpadded) weights; big linears stored bf16, pre-transposed
    to (in, out)."""
    def normal(k, shape, s=0.02):
        return s * jax.random.normal(k, shape, dtype=jnp.float32)

    keys = jax.random.split(key, 6)
    bf16 = jnp.bfloat16
    return {
        "embedding": normal(keys[0], (VOCAB, HIDDEN)),
        "final_ln": jnp.ones((1, HIDDEN), jnp.float32),
        "input_ln": jnp.ones((NUM_LAYERS, 1, HIDDEN), jnp.float32),
        "post_ln": jnp.ones((NUM_LAYERS, 1, HIDDEN), jnp.float32),
        "qkv_w": normal(keys[1], (NUM_LAYERS, HIDDEN, QKV_OUT)).astype(bf16),
        "qkv_b": normal(keys[2], (NUM_LAYERS, 1, QKV_OUT)),   # add_qkv_bias=True
        "dense_w": normal(keys[3], (NUM_LAYERS, Q_SIZE, HIDDEN)).astype(bf16),
        "h_to_4h_w": normal(keys[4], (NUM_LAYERS, HIDDEN, 2 * FFN_HIDDEN)).astype(bf16),
        "4h_to_h_w": normal(keys[5], (NUM_LAYERS, FFN_HIDDEN, HIDDEN)).astype(bf16),
    }


def pad_params(p):
    """Zero-pad to the lane-dense kernel layout (done once at init time)."""
    def padded(w, rows, cols):
        pad = [(0, 0)] * (w.ndim - 2) + [(0, rows - w.shape[-2]),
                                         (0, cols - w.shape[-1])]
        return jnp.pad(w, pad)

    qw = p["qkv_w"][:, :, :Q_SIZE]
    kw = p["qkv_w"][:, :, Q_SIZE:Q_SIZE + KV_SIZE]
    vw = p["qkv_w"][:, :, Q_SIZE + KV_SIZE:]
    qb = p["qkv_b"][:, :, :Q_SIZE]
    kb = p["qkv_b"][:, :, Q_SIZE:Q_SIZE + KV_SIZE]
    vb = p["qkv_b"][:, :, Q_SIZE + KV_SIZE:]
    gw = p["h_to_4h_w"][:, :, :FFN_HIDDEN]
    uw = p["h_to_4h_w"][:, :, FFN_HIDDEN:]
    return {
        "embedding": padded(p["embedding"], VOCAB, HP),
        "final_ln": padded(p["final_ln"], 1, HP),
        "input_ln": padded(p["input_ln"], 1, HP),
        "post_ln": padded(p["post_ln"], 1, HP),
        "qkv_w": jnp.concatenate(
            [padded(qw, HP, QKV_REGION), padded(kw, HP, QKV_REGION),
             padded(vw, HP, QKV_REGION)], axis=-1),            # (L, 128, 384)
        "qkv_b": jnp.concatenate(
            [padded(qb, 1, QKV_REGION), padded(kb, 1, QKV_REGION),
             padded(vb, 1, QKV_REGION)], axis=-1),              # (L, 1, 384)
        "dense_w": padded(p["dense_w"], Q_SIZE, HP),            # (L, 32, 128)
        "h_to_4h_w": jnp.concatenate(
            [padded(gw, HP, FFN_PAD), padded(uw, HP, FFN_PAD)], axis=-1),
        "4h_to_h_w": padded(p["4h_to_h_w"], FFN_PAD, HP),       # (L, 128, 128)
    }


# ----------------------------- pure-JAX reference -----------------------------
def chatglm_reference(params, tokens, positions):
    """Mirrors the kernel numerics (bf16 matmul operands, f32 accumulation)."""
    f32, bf16 = jnp.float32, jnp.bfloat16

    def rms(x, w):
        var = jnp.mean(x * x, axis=-1, keepdims=True)
        return x * jax.lax.rsqrt(var + EPS) * w

    def rope(x):
        t, n = x.shape[0], x.shape[1] // HEAD_DIM
        x = x.reshape(t, n, HEAD_DIM)
        xr, xp = x[..., :ROTARY_DIM], x[..., ROTARY_DIM:]
        inv_freq = 1.0 / ROPE_THETA ** (
            jnp.arange(0, ROTARY_DIM, 2, dtype=f32) / ROTARY_DIM)
        f = positions.astype(f32)[:, None] * inv_freq[None, :]
        c, s = jnp.cos(f)[:, None, :], jnp.sin(f)[:, None, :]
        x1, x2 = xr[..., 0::2], xr[..., 1::2]
        o = jnp.stack([x1 * c - x2 * s, x2 * c + x1 * s], axis=-1)
        o = o.reshape(t, n, ROTARY_DIM)
        return jnp.concatenate([o, xp], axis=-1).reshape(t, n * HEAD_DIM)

    def mm(x, w):
        return jnp.dot(x.astype(bf16), w.astype(bf16), preferred_element_type=f32)

    h = jnp.take(params["embedding"], tokens, axis=0).astype(f32)
    group = NUM_HEADS // NUM_KV_HEADS
    causal = jnp.tril(jnp.ones((SEQ_LEN, SEQ_LEN), bool))
    for l in range(NUM_LAYERS):
        ln1 = rms(h, params["input_ln"][l])
        qkv = mm(ln1, params["qkv_w"][l]) + params["qkv_b"][l]
        q = rope(qkv[:, :Q_SIZE])
        k = rope(qkv[:, Q_SIZE:Q_SIZE + KV_SIZE])
        v = qkv[:, Q_SIZE + KV_SIZE:]
        outs = []
        for hh in range(NUM_HEADS):
            kvh = hh // group
            qh = q[:, hh * HEAD_DIM:(hh + 1) * HEAD_DIM]
            kh = k[:, kvh * HEAD_DIM:(kvh + 1) * HEAD_DIM]
            vh = v[:, kvh * HEAD_DIM:(kvh + 1) * HEAD_DIM]
            s = jnp.dot(qh.astype(bf16), kh.astype(bf16).T,
                        preferred_element_type=f32) * SCALE
            s = jnp.where(causal, s, -1e30)
            p = jnp.exp(s - jnp.max(s, axis=-1, keepdims=True))
            p = p / jnp.sum(p, axis=-1, keepdims=True)
            outs.append(jnp.dot(p.astype(bf16), vh.astype(bf16),
                                preferred_element_type=f32))
        attn = jnp.concatenate(outs, axis=-1)
        h = h + mm(attn, params["dense_w"][l])
        ln2 = rms(h, params["post_ln"][l])
        gu = mm(ln2, params["h_to_4h_w"][l])
        gate, up = gu[:, :FFN_HIDDEN], gu[:, FFN_HIDDEN:]
        inter = gate * jax.nn.sigmoid(gate) * up
        h = h + mm(inter, params["4h_to_h_w"][l])
    return rms(h, params["final_ln"])


# ----------------------------- main -----------------------------
if __name__ == "__main__":
    key = jax.random.PRNGKey(0)
    pkey, tkey = jax.random.split(key)
    logical = init_params(pkey)
    padded = pad_params(logical)
    tokens = jax.random.randint(tkey, (SEQ_LEN,), 0, VOCAB, dtype=jnp.int32)
    positions = jnp.arange(SEQ_LEN, dtype=jnp.int32)

    fwd = jax.jit(chatglm_forward)
    out = jax.block_until_ready(fwd(padded, tokens, positions))

    assert out.shape == (SEQ_LEN, HIDDEN), out.shape
    assert bool(jnp.all(jnp.isfinite(out)))

    ref = jax.jit(chatglm_reference)(logical, tokens, positions)
    err = float(jnp.max(jnp.abs(out - ref)))
    assert err < 5e-2, f"kernel vs pure-JAX reference mismatch: max|diff|={err}"
    print("KERNEL_OK")
</pallas_src>

<mosaic_0001>
module attributes {stable_mosaic.version = 11 : i64} {
  func.func @_glm_stack_kernel(%arg0: memref<8x128xf32, #tpu.memory_space<vmem>>, %arg1: memref<8x128xf32, #tpu.memory_space<vmem>>, %arg2: memref<8x128xf32, #tpu.memory_space<vmem>>, %arg3: memref<2x1x128xf32, #tpu.memory_space<vmem>>, %arg4: memref<2x128x384xbf16, #tpu.memory_space<vmem>>, %arg5: memref<2x1x384xf32, #tpu.memory_space<vmem>>, %arg6: memref<2x32x128xbf16, #tpu.memory_space<vmem>>, %arg7: memref<2x1x128xf32, #tpu.memory_space<vmem>>, %arg8: memref<2x128x256xbf16, #tpu.memory_space<vmem>>, %arg9: memref<2x128x128xbf16, #tpu.memory_space<vmem>>, %arg10: memref<1x128xf32, #tpu.memory_space<vmem>>, %arg11: memref<8x128xf32, #tpu.memory_space<vmem>>) attributes {dimension_semantics = [], scalar_prefetch = 0 : i64, scratch_operands = 0 : i64, tpu.core_type = #tpu.core_type<tc>} {
    %c0 = arith.constant 0 : index
    %c0_0 = arith.constant 0 : index
    %0 = vector.load %arg0[%c0, %c0_0] : memref<8x128xf32, #tpu.memory_space<vmem>>, vector<8x128xf32>
    %1 = tpu.iota {dimensions = array<i32: 0>} : vector<8x8xi32>
    %2 = tpu.iota {dimensions = array<i32: 1>} : vector<8x8xi32>
    %3 = arith.cmpi sle, %2, %1 : vector<8x8xi32>
    %4 = tpu.iota {dimensions = array<i32: 1>} : vector<8x128xi32>
    %c2_i32 = arith.constant 2 : i32
    %c0_i32 = arith.constant 0 : i32
    %5 = arith.cmpi eq, %c2_i32, %c0_i32 : i32
    %c1_i32 = arith.constant 1 : i32
    %6 = arith.select %5, %c1_i32, %c2_i32 : i32
    %7 = vector.broadcast %6 : i32 to vector<8x128xi32>
    %8 = arith.remsi %4, %7 : vector<8x128xi32>
    %c0_i32_1 = arith.constant 0 : i32
    %9 = vector.broadcast %c0_i32_1 : i32 to vector<8x128xi32>
    %10 = arith.cmpi ne, %8, %9 : vector<8x128xi32>
    %c0_i32_2 = arith.constant 0 : i32
    %11 = vector.broadcast %c0_i32_2 : i32 to vector<8x128xi32>
    %12 = arith.cmpi slt, %8, %11 : vector<8x128xi32>
    %c0_i32_3 = arith.constant 0 : i32
    %13 = arith.cmpi slt, %6, %c0_i32_3 : i32
    %14 = vector.broadcast %13 : i1 to vector<8x128xi1>
    %15 = vector.broadcast %14 : vector<8x128xi1> to vector<8x128xi1>
    %16 = arith.xori %12, %15 : vector<8x128xi1>
    %17 = arith.andi %16, %10 : vector<8x128xi1>
    %18 = vector.broadcast %6 : i32 to vector<8x128xi32>
    %19 = arith.addi %8, %18 : vector<8x128xi32>
    %20 = arith.select %17, %19, %8 : vector<8x128xi1>, vector<8x128xi32>
    %c0_i32_4 = arith.constant 0 : i32
    %21 = vector.broadcast %c0_i32_4 : i32 to vector<8x128xi32>
    %22 = arith.cmpi eq, %20, %21 : vector<8x128xi32>
    %c1_i32_5 = arith.constant 1 : i32
    %23 = vector.broadcast %c1_i32_5 : i32 to vector<8x128xi32>
    %24 = arith.addi %4, %23 : vector<8x128xi32>
    %c1_i32_6 = arith.constant 1 : i32
    %25 = vector.broadcast %c1_i32_6 : i32 to vector<8x128xi32>
    %26 = arith.subi %4, %25 : vector<8x128xi32>
    %27 = arith.select %22, %24, %26 : vector<8x128xi1>, vector<8x128xi32>
    %c127_i32 = arith.constant 127 : i32
    %28 = tpu.dynamic_rotate %4 by %c127_i32 dim 1 : vector<8x128xi32>, i32 -> vector<8x128xi32>
    %29 = arith.cmpi eq, %28, %27 : vector<8x128xi32>
    %c0_7 = arith.constant 0 : index
    %c0_8 = arith.constant 0 : index
    %30 = vector.load %arg1[%c0_7, %c0_8] : memref<8x128xf32, #tpu.memory_space<vmem>>, vector<8x128xf32>
    %c0_9 = arith.constant 0 : index
    %c0_10 = arith.constant 0 : index
    %31 = vector.load %arg2[%c0_9, %c0_10] : memref<8x128xf32, #tpu.memory_space<vmem>>, vector<8x128xf32>
    %cst = arith.constant 0.000000e+00 : f32
    %32 = vector.broadcast %cst : f32 to vector<8x128xf32>
    %33 = arith.select %29, %31, %32 : vector<8x128xi1>, vector<8x128xf32>
    %cst_11 = arith.constant 0.000000e+00 : f32
    %34 = vector.broadcast %cst_11 : f32 to vector<8x128xf32>
    %35 = arith.select %29, %34, %31 : vector<8x128xi1>, vector<8x128xf32>
    %c0_12 = arith.constant 0 : index
    %c0_13 = arith.constant 0 : index
    %c0_14 = arith.constant 0 : index
    %36 = vector.load %arg3[%c0_12, %c0_13, %c0_14] : memref<2x1x128xf32, #tpu.memory_space<vmem>>, vector<1x1x128xf32>
    %37 = vector.shape_cast %36 : vector<1x1x128xf32> to vector<1x128xf32>
    %38 = arith.mulf %0, %0 : vector<8x128xf32>
    %cst_15 = arith.constant dense<0.000000e+00> : vector<8xf32>
    %39 = vector.multi_reduction <add>, %38, %cst_15 [1] : vector<8x128xf32> to vector<8xf32>
    %40 = vector.shape_cast %39 : vector<8xf32> to vector<8x1xf32>
    %cst_16 = arith.constant 3.125000e-02 : f32
    %41 = vector.broadcast %cst_16 : f32 to vector<8x1xf32>
    %42 = arith.mulf %40, %41 : vector<8x1xf32>
    %cst_17 = arith.constant 9.99999974E-6 : f32
    %43 = vector.broadcast %cst_17 : f32 to vector<8x1xf32>
    %44 = arith.addf %42, %43 : vector<8x1xf32>
    %45 = math.rsqrt %44 : vector<8x1xf32>
    %46 = vector.broadcast %45 : vector<8x1xf32> to vector<8x128xf32>
    %47 = arith.mulf %0, %46 : vector<8x128xf32>
    %48 = vector.broadcast %37 : vector<1x128xf32> to vector<8x128xf32>
    %49 = arith.mulf %47, %48 : vector<8x128xf32>
    %50 = arith.truncf %49 : vector<8x128xf32> to vector<8x128xbf16>
    %c0_18 = arith.constant 0 : index
    %c0_19 = arith.constant 0 : index
    %c0_20 = arith.constant 0 : index
    %51 = vector.load %arg4[%c0_18, %c0_19, %c0_20] : memref<2x128x384xbf16, #tpu.memory_space<vmem>>, vector<1x128x384xbf16>
    %52 = vector.shape_cast %51 : vector<1x128x384xbf16> to vector<128x384xbf16>
    %cst_21 = arith.constant dense<0.000000e+00> : vector<8x384xf32>
    %53 = tpu.matmul %50, %52, %cst_21 {dimension_numbers = #tpu.dot_dimension_numbers<[1], [0], [0], [1], [0, 0, 1, 1], [], []>} : vector<8x128xbf16>, vector<128x384xbf16>, vector<8x384xf32> -> vector<8x384xf32>
    %c0_22 = arith.constant 0 : index
    %c0_23 = arith.constant 0 : index
    %c0_24 = arith.constant 0 : index
    %54 = vector.load %arg5[%c0_22, %c0_23, %c0_24] : memref<2x1x384xf32, #tpu.memory_space<vmem>>, vector<1x1x384xf32>
    %55 = vector.shape_cast %54 : vector<1x1x384xf32> to vector<1x384xf32>
    %56 = vector.broadcast %55 : vector<1x384xf32> to vector<8x384xf32>
    %57 = arith.addf %53, %56 : vector<8x384xf32>
    %58 = vector.extract_strided_slice %57 {offsets = [0, 0], sizes = [8, 128], strides = [1, 1]} : vector<8x384xf32> to vector<8x128xf32>
    %59 = arith.mulf %58, %30 : vector<8x128xf32>
    %c127_i32_25 = arith.constant 127 : i32
    %60 = tpu.dynamic_rotate %58 by %c127_i32_25 dim 1 : vector<8x128xf32>, i32 -> vector<8x128xf32>
    %61 = arith.mulf %60, %33 : vector<8x128xf32>
    %62 = arith.addf %59, %61 : vector<8x128xf32>
    %c1_i32_26 = arith.constant 1 : i32
    %63 = tpu.dynamic_rotate %58 by %c1_i32_26 dim 1 : vector<8x128xf32>, i32 -> vector<8x128xf32>
    %64 = arith.mulf %63, %35 : vector<8x128xf32>
    %65 = arith.addf %62, %64 : vector<8x128xf32>
    %66 = vector.extract_strided_slice %57 {offsets = [0, 128], sizes = [8, 128], strides = [1, 1]} : vector<8x384xf32> to vector<8x128xf32>
    %67 = arith.mulf %66, %30 : vector<8x128xf32>
    %c127_i32_27 = arith.constant 127 : i32
    %68 = tpu.dynamic_rotate %66 by %c127_i32_27 dim 1 : vector<8x128xf32>, i32 -> vector<8x128xf32>
    %69 = arith.mulf %68, %33 : vector<8x128xf32>
    %70 = arith.addf %67, %69 : vector<8x128xf32>
    %c1_i32_28 = arith.constant 1 : i32
    %71 = tpu.dynamic_rotate %66 by %c1_i32_28 dim 1 : vector<8x128xf32>, i32 -> vector<8x128xf32>
    %72 = arith.mulf %71, %35 : vector<8x128xf32>
    %73 = arith.addf %70, %72 : vector<8x128xf32>
    %74 = vector.extract_strided_slice %57 {offsets = [0, 256], sizes = [8, 128], strides = [1, 1]} : vector<8x384xf32> to vector<8x128xf32>
    %c0_29 = arith.constant 0 : index
    %c0_30 = arith.constant 0 : index
    %c0_31 = arith.constant 0 : index
    %75 = vector.load %arg6[%c0_29, %c0_30, %c0_31] : memref<2x32x128xbf16, #tpu.memory_space<vmem>>, vector<1x32x128xbf16>
    %76 = vector.shape_cast %75 : vector<1x32x128xbf16> to vector<32x128xbf16>
    %cst_32 = arith.constant 0.000000e+00 : f32
    %77 = vector.broadcast %cst_32 : f32 to vector<8x128xf32>
    %78 = vector.extract_strided_slice %65 {offsets = [0, 0], sizes = [8, 8], strides = [1, 1]} : vector<8x128xf32> to vector<8x8xf32>
    %79 = arith.truncf %78 : vector<8x8xf32> to vector<8x8xbf16>
    %80 = vector.extract_strided_slice %73 {offsets = [0, 0], sizes = [8, 8], strides = [1, 1]} : vector<8x128xf32> to vector<8x8xf32>
    %81 = arith.truncf %80 : vector<8x8xf32> to vector<8x8xbf16>
    %82 = vector.extract_strided_slice %74 {offsets = [0, 0], sizes = [8, 8], strides = [1, 1]} : vector<8x128xf32> to vector<8x8xf32>
    %83 = arith.truncf %82 : vector<8x8xf32> to vector<8x8xbf16>
    %cst_33 = arith.constant dense<0.000000e+00> : vector<8x8xf32>
    %84 = tpu.matmul %79, %81, %cst_33 {dimension_numbers = #tpu.dot_dimension_numbers<[1], [1], [0], [0], [0, 0, 1, 0], [], []>} : vector<8x8xbf16>, vector<8x8xbf16>, vector<8x8xf32> -> vector<8x8xf32>
    %cst_34 = arith.constant 0.353553385 : f32
    %85 = vector.broadcast %cst_34 : f32 to vector<8x8xf32>
    %86 = arith.mulf %84, %85 : vector<8x8xf32>
    %cst_35 = arith.constant -1.000000e+30 : f32
    %87 = vector.broadcast %cst_35 : f32 to vector<8x8xf32>
    %88 = arith.select %3, %86, %87 : vector<8x8xi1>, vector<8x8xf32>
    %cst_36 = arith.constant dense<0xFF800000> : vector<8xf32>
    %89 = vector.multi_reduction <maximumf>, %88, %cst_36 [1] : vector<8x8xf32> to vector<8xf32>
    %90 = vector.shape_cast %89 : vector<8xf32> to vector<8x1xf32>
    %91 = vector.broadcast %90 : vector<8x1xf32> to vector<8x8xf32>
    %92 = arith.subf %88, %91 : vector<8x8xf32>
    %93 = math.exp %92 : vector<8x8xf32>
    %cst_37 = arith.constant dense<0.000000e+00> : vector<8xf32>
    %94 = vector.multi_reduction <add>, %93, %cst_37 [1] : vector<8x8xf32> to vector<8xf32>
    %95 = vector.shape_cast %94 : vector<8xf32> to vector<8x1xf32>
    %96 = arith.truncf %93 : vector<8x8xf32> to vector<8x8xbf16>
    %cst_38 = arith.constant dense<0.000000e+00> : vector<8x8xf32>
    %97 = tpu.matmul %96, %83, %cst_38 {dimension_numbers = #tpu.dot_dimension_numbers<[1], [0], [0], [1], [0, 0, 1, 1], [], []>} : vector<8x8xbf16>, vector<8x8xbf16>, vector<8x8xf32> -> vector<8x8xf32>
    %98 = vector.broadcast %95 : vector<8x1xf32> to vector<8x8xf32>
    %99 = arith.divf %97, %98 : vector<8x8xf32>
    %100 = arith.truncf %99 : vector<8x8xf32> to vector<8x8xbf16>
    %101 = vector.extract_strided_slice %76 {offsets = [0, 0], sizes = [8, 128], strides = [1, 1]} : vector<32x128xbf16> to vector<8x128xbf16>
    %cst_39 = arith.constant dense<0.000000e+00> : vector<8x128xf32>
    %102 = tpu.matmul %100, %101, %cst_39 {dimension_numbers = #tpu.dot_dimension_numbers<[1], [0], [0], [1], [0, 0, 1, 1], [], []>} : vector<8x8xbf16>, vector<8x128xbf16>, vector<8x128xf32> -> vector<8x128xf32>
    %103 = arith.addf %77, %102 : vector<8x128xf32>
    %104 = vector.extract_strided_slice %65 {offsets = [0, 8], sizes = [8, 8], strides = [1, 1]} : vector<8x128xf32> to vector<8x8xf32>
    %105 = arith.truncf %104 : vector<8x8xf32> to vector<8x8xbf16>
    %106 = vector.extract_strided_slice %73 {offsets = [0, 0], sizes = [8, 8], strides = [1, 1]} : vector<8x128xf32> to vector<8x8xf32>
    %107 = arith.truncf %106 : vector<8x8xf32> to vector<8x8xbf16>
    %108 = vector.extract_strided_slice %74 {offsets = [0, 0], sizes = [8, 8], strides = [1, 1]} : vector<8x128xf32> to vector<8x8xf32>
    %109 = arith.truncf %108 : vector<8x8xf32> to vector<8x8xbf16>
    %cst_40 = arith.constant dense<0.000000e+00> : vector<8x8xf32>
    %110 = tpu.matmul %105, %107, %cst_40 {dimension_numbers = #tpu.dot_dimension_numbers<[1], [1], [0], [0], [0, 0, 1, 0], [], []>} : vector<8x8xbf16>, vector<8x8xbf16>, vector<8x8xf32> -> vector<8x8xf32>
    %cst_41 = arith.constant 0.353553385 : f32
    %111 = vector.broadcast %cst_41 : f32 to vector<8x8xf32>
    %112 = arith.mulf %110, %111 : vector<8x8xf32>
    %cst_42 = arith.constant -1.000000e+30 : f32
    %113 = vector.broadcast %cst_42 : f32 to vector<8x8xf32>
    %114 = arith.select %3, %112, %113 : vector<8x8xi1>, vector<8x8xf32>
    %cst_43 = arith.constant dense<0xFF800000> : vector<8xf32>
    %115 = vector.multi_reduction <maximumf>, %114, %cst_43 [1] : vector<8x8xf32> to vector<8xf32>
    %116 = vector.shape_cast %115 : vector<8xf32> to vector<8x1xf32>
    %117 = vector.broadcast %116 : vector<8x1xf32> to vector<8x8xf32>
    %118 = arith.subf %114, %117 : vector<8x8xf32>
    %119 = math.exp %118 : vector<8x8xf32>
    %cst_44 = arith.constant dense<0.000000e+00> : vector<8xf32>
    %120 = vector.multi_reduction <add>, %119, %cst_44 [1] : vector<8x8xf32> to vector<8xf32>
    %121 = vector.shape_cast %120 : vector<8xf32> to vector<8x1xf32>
    %122 = arith.truncf %119 : vector<8x8xf32> to vector<8x8xbf16>
    %cst_45 = arith.constant dense<0.000000e+00> : vector<8x8xf32>
    %123 = tpu.matmul %122, %109, %cst_45 {dimension_numbers = #tpu.dot_dimension_numbers<[1], [0], [0], [1], [0, 0, 1, 1], [], []>} : vector<8x8xbf16>, vector<8x8xbf16>, vector<8x8xf32> -> vector<8x8xf32>
    %124 = vector.broadcast %121 : vector<8x1xf32> to vector<8x8xf32>
    %125 = arith.divf %123, %124 : vector<8x8xf32>
    %126 = arith.truncf %125 : vector<8x8xf32> to vector<8x8xbf16>
    %127 = vector.extract_strided_slice %76 {offsets = [8, 0], sizes = [8, 128], strides = [1, 1]} : vector<32x128xbf16> to vector<8x128xbf16>
    %cst_46 = arith.constant dense<0.000000e+00> : vector<8x128xf32>
    %128 = tpu.matmul %126, %127, %cst_46 {dimension_numbers = #tpu.dot_dimension_numbers<[1], [0], [0], [1], [0, 0, 1, 1], [], []>} : vector<8x8xbf16>, vector<8x128xbf16>, vector<8x128xf32> -> vector<8x128xf32>
    %129 = arith.addf %103, %128 : vector<8x128xf32>
    %130 = vector.extract_strided_slice %65 {offsets = [0, 16], sizes = [8, 8], strides = [1, 1]} : vector<8x128xf32> to vector<8x8xf32>
    %131 = arith.truncf %130 : vector<8x8xf32> to vector<8x8xbf16>
    %132 = vector.extract_strided_slice %73 {offsets = [0, 8], sizes = [8, 8], strides = [1, 1]} : vector<8x128xf32> to vector<8x8xf32>
    %133 = arith.truncf %132 : vector<8x8xf32> to vector<8x8xbf16>
    %134 = vector.extract_strided_slice %74 {offsets = [0, 8], sizes = [8, 8], strides = [1, 1]} : vector<8x128xf32> to vector<8x8xf32>
    %135 = arith.truncf %134 : vector<8x8xf32> to vector<8x8xbf16>
    %cst_47 = arith.constant dense<0.000000e+00> : vector<8x8xf32>
    %136 = tpu.matmul %131, %133, %cst_47 {dimension_numbers = #tpu.dot_dimension_numbers<[1], [1], [0], [0], [0, 0, 1, 0], [], []>} : vector<8x8xbf16>, vector<8x8xbf16>, vector<8x8xf32> -> vector<8x8xf32>
    %cst_48 = arith.constant 0.353553385 : f32
    %137 = vector.broadcast %cst_48 : f32 to vector<8x8xf32>
    %138 = arith.mulf %136, %137 : vector<8x8xf32>
    %cst_49 = arith.constant -1.000000e+30 : f32
    %139 = vector.broadcast %cst_49 : f32 to vector<8x8xf32>
    %140 = arith.select %3, %138, %139 : vector<8x8xi1>, vector<8x8xf32>
    %cst_50 = arith.constant dense<0xFF800000> : vector<8xf32>
    %141 = vector.multi_reduction <maximumf>, %140, %cst_50 [1] : vector<8x8xf32> to vector<8xf32>
    %142 = vector.shape_cast %141 : vector<8xf32> to vector<8x1xf32>
    %143 = vector.broadcast %142 : vector<8x1xf32> to vector<8x8xf32>
    %144 = arith.subf %140, %143 : vector<8x8xf32>
    %145 = math.exp %144 : vector<8x8xf32>
    %cst_51 = arith.constant dense<0.000000e+00> : vector<8xf32>
    %146 = vector.multi_reduction <add>, %145, %cst_51 [1] : vector<8x8xf32> to vector<8xf32>
    %147 = vector.shape_cast %146 : vector<8xf32> to vector<8x1xf32>
    %148 = arith.truncf %145 : vector<8x8xf32> to vector<8x8xbf16>
    %cst_52 = arith.constant dense<0.000000e+00> : vector<8x8xf32>
    %149 = tpu.matmul %148, %135, %cst_52 {dimension_numbers = #tpu.dot_dimension_numbers<[1], [0], [0], [1], [0, 0, 1, 1], [], []>} : vector<8x8xbf16>, vector<8x8xbf16>, vector<8x8xf32> -> vector<8x8xf32>
    %150 = vector.broadcast %147 : vector<8x1xf32> to vector<8x8xf32>
    %151 = arith.divf %149, %150 : vector<8x8xf32>
    %152 = arith.truncf %151 : vector<8x8xf32> to vector<8x8xbf16>
    %153 = vector.extract_strided_slice %76 {offsets = [16, 0], sizes = [8, 128], strides = [1, 1]} : vector<32x128xbf16> to vector<8x128xbf16>
    %cst_53 = arith.constant dense<0.000000e+00> : vector<8x128xf32>
    %154 = tpu.matmul %152, %153, %cst_53 {dimension_numbers = #tpu.dot_dimension_numbers<[1], [0], [0], [1], [0, 0, 1, 1], [], []>} : vector<8x8xbf16>, vector<8x128xbf16>, vector<8x128xf32> -> vector<8x128xf32>
    %155 = arith.addf %129, %154 : vector<8x128xf32>
    %156 = vector.extract_strided_slice %65 {offsets = [0, 24], sizes = [8, 8], strides = [1, 1]} : vector<8x128xf32> to vector<8x8xf32>
    %157 = arith.truncf %156 : vector<8x8xf32> to vector<8x8xbf16>
    %158 = vector.extract_strided_slice %73 {offsets = [0, 8], sizes = [8, 8], strides = [1, 1]} : vector<8x128xf32> to vector<8x8xf32>
    %159 = arith.truncf %158 : vector<8x8xf32> to vector<8x8xbf16>
    %160 = vector.extract_strided_slice %74 {offsets = [0, 8], sizes = [8, 8], strides = [1, 1]} : vector<8x128xf32> to vector<8x8xf32>
    %161 = arith.truncf %160 : vector<8x8xf32> to vector<8x8xbf16>
    %cst_54 = arith.constant dense<0.000000e+00> : vector<8x8xf32>
    %162 = tpu.matmul %157, %159, %cst_54 {dimension_numbers = #tpu.dot_dimension_numbers<[1], [1], [0], [0], [0, 0, 1, 0], [], []>} : vector<8x8xbf16>, vector<8x8xbf16>, vector<8x8xf32> -> vector<8x8xf32>
    %cst_55 = arith.constant 0.353553385 : f32
    %163 = vector.broadcast %cst_55 : f32 to vector<8x8xf32>
    %164 = arith.mulf %162, %163 : vector<8x8xf32>
    %cst_56 = arith.constant -1.000000e+30 : f32
    %165 = vector.broadcast %cst_56 : f32 to vector<8x8xf32>
    %166 = arith.select %3, %164, %165 : vector<8x8xi1>, vector<8x8xf32>
    %cst_57 = arith.constant dense<0xFF800000> : vector<8xf32>
    %167 = vector.multi_reduction <maximumf>, %166, %cst_57 [1] : vector<8x8xf32> to vector<8xf32>
    %168 = vector.shape_cast %167 : vector<8xf32> to vector<8x1xf32>
    %169 = vector.broadcast %168 : vector<8x1xf32> to vector<8x8xf32>
    %170 = arith.subf %166, %169 : vector<8x8xf32>
    %171 = math.exp %170 : vector<8x8xf32>
    %cst_58 = arith.constant dense<0.000000e+00> : vector<8xf32>
    %172 = vector.multi_reduction <add>, %171, %cst_58 [1] : vector<8x8xf32> to vector<8xf32>
    %173 = vector.shape_cast %172 : vector<8xf32> to vector<8x1xf32>
    %174 = arith.truncf %171 : vector<8x8xf32> to vector<8x8xbf16>
    %cst_59 = arith.constant dense<0.000000e+00> : vector<8x8xf32>
    %175 = tpu.matmul %174, %161, %cst_59 {dimension_numbers = #tpu.dot_dimension_numbers<[1], [0], [0], [1], [0, 0, 1, 1], [], []>} : vector<8x8xbf16>, vector<8x8xbf16>, vector<8x8xf32> -> vector<8x8xf32>
    %176 = vector.broadcast %173 : vector<8x1xf32> to vector<8x8xf32>
    %177 = arith.divf %175, %176 : vector<8x8xf32>
    %178 = arith.truncf %177 : vector<8x8xf32> to vector<8x8xbf16>
    %179 = vector.extract_strided_slice %76 {offsets = [24, 0], sizes = [8, 128], strides = [1, 1]} : vector<32x128xbf16> to vector<8x128xbf16>
    %cst_60 = arith.constant dense<0.000000e+00> : vector<8x128xf32>
    %180 = tpu.matmul %178, %179, %cst_60 {dimension_numbers = #tpu.dot_dimension_numbers<[1], [0], [0], [1], [0, 0, 1, 1], [], []>} : vector<8x8xbf16>, vector<8x128xbf16>, vector<8x128xf32> -> vector<8x128xf32>
    %181 = arith.addf %155, %180 : vector<8x128xf32>
    %182 = arith.addf %0, %181 : vector<8x128xf32>
    %c0_61 = arith.constant 0 : index
    %c0_62 = arith.constant 0 : index
    %c0_63 = arith.constant 0 : index
    %183 = vector.load %arg7[%c0_61, %c0_62, %c0_63] : memref<2x1x128xf32, #tpu.memory_space<vmem>>, vector<1x1x128xf32>
    %184 = vector.shape_cast %183 : vector<1x1x128xf32> to vector<1x128xf32>
    %185 = arith.mulf %182, %182 : vector<8x128xf32>
    %cst_64 = arith.constant dense<0.000000e+00> : vector<8xf32>
    %186 = vector.multi_reduction <add>, %185, %cst_64 [1] : vector<8x128xf32> to vector<8xf32>
    %187 = vector.shape_cast %186 : vector<8xf32> to vector<8x1xf32>
    %cst_65 = arith.constant 3.125000e-02 : f32
    %188 = vector.broadcast %cst_65 : f32 to vector<8x1xf32>
    %189 = arith.mulf %187, %188 : vector<8x1xf32>
    %cst_66 = arith.constant 9.99999974E-6 : f32
    %190 = vector.broadcast %cst_66 : f32 to vector<8x1xf32>
    %191 = arith.addf %189, %190 : vector<8x1xf32>
    %192 = math.rsqrt %191 : vector<8x1xf32>
    %193 = vector.broadcast %192 : vector<8x1xf32> to vector<8x128xf32>
    %194 = arith.mulf %182, %193 : vector<8x128xf32>
    %195 = vector.broadcast %184 : vector<1x128xf32> to vector<8x128xf32>
    %196 = arith.mulf %194, %195 : vector<8x128xf32>
    %197 = arith.truncf %196 : vector<8x128xf32> to vector<8x128xbf16>
    %c0_67 = arith.constant 0 : index
    %c0_68 = arith.constant 0 : index
    %c0_69 = arith.constant 0 : index
    %198 = vector.load %arg8[%c0_67, %c0_68, %c0_69] : memref<2x128x256xbf16, #tpu.memory_space<vmem>>, vector<1x128x256xbf16>
    %199 = vector.shape_cast %198 : vector<1x128x256xbf16> to vector<128x256xbf16>
    %cst_70 = arith.constant dense<0.000000e+00> : vector<8x256xf32>
    %200 = tpu.matmul %197, %199, %cst_70 {dimension_numbers = #tpu.dot_dimension_numbers<[1], [0], [0], [1], [0, 0, 1, 1], [], []>} : vector<8x128xbf16>, vector<128x256xbf16>, vector<8x256xf32> -> vector<8x256xf32>
    %201 = vector.extract_strided_slice %200 {offsets = [0, 0], sizes = [8, 128], strides = [1, 1]} : vector<8x256xf32> to vector<8x128xf32>
    %202 = vector.extract_strided_slice %200 {offsets = [0, 128], sizes = [8, 128], strides = [1, 1]} : vector<8x256xf32> to vector<8x128xf32>
    %203 = arith.negf %201 : vector<8x128xf32>
    %204 = math.exp %203 : vector<8x128xf32>
    %cst_71 = arith.constant 1.000000e+00 : f32
    %205 = vector.broadcast %cst_71 : f32 to vector<8x128xf32>
    %206 = arith.addf %205, %204 : vector<8x128xf32>
    %207 = arith.divf %205, %206 : vector<8x128xf32>
    %208 = arith.mulf %201, %207 : vector<8x128xf32>
    %209 = arith.mulf %208, %202 : vector<8x128xf32>
    %210 = arith.truncf %209 : vector<8x128xf32> to vector<8x128xbf16>
    %c0_72 = arith.constant 0 : index
    %c0_73 = arith.constant 0 : index
    %c0_74 = arith.constant 0 : index
    %211 = vector.load %arg9[%c0_72, %c0_73, %c0_74] : memref<2x128x128xbf16, #tpu.memory_space<vmem>>, vector<1x128x128xbf16>
    %212 = vector.shape_cast %211 : vector<1x128x128xbf16> to vector<128x128xbf16>
    %cst_75 = arith.constant dense<0.000000e+00> : vector<8x128xf32>
    %213 = tpu.matmul %210, %212, %cst_75 {dimension_numbers = #tpu.dot_dimension_numbers<[1], [0], [0], [1], [0, 0, 1, 1], [], []>} : vector<8x128xbf16>, vector<128x128xbf16>, vector<8x128xf32> -> vector<8x128xf32>
    %214 = arith.addf %182, %213 : vector<8x128xf32>
    %c1 = arith.constant 1 : index
    %c0_76 = arith.constant 0 : index
    %c0_77 = arith.constant 0 : index
    %215 = vector.load %arg3[%c1, %c0_76, %c0_77] : memref<2x1x128xf32, #tpu.memory_space<vmem>>, vector<1x1x128xf32>
    %216 = vector.shape_cast %215 : vector<1x1x128xf32> to vector<1x128xf32>
    %217 = arith.mulf %214, %214 : vector<8x128xf32>
    %cst_78 = arith.constant dense<0.000000e+00> : vector<8xf32>
    %218 = vector.multi_reduction <add>, %217, %cst_78 [1] : vector<8x128xf32> to vector<8xf32>
    %219 = vector.shape_cast %218 : vector<8xf32> to vector<8x1xf32>
    %cst_79 = arith.constant 3.125000e-02 : f32
    %220 = vector.broadcast %cst_79 : f32 to vector<8x1xf32>
    %221 = arith.mulf %219, %220 : vector<8x1xf32>
    %cst_80 = arith.constant 9.99999974E-6 : f32
    %222 = vector.broadcast %cst_80 : f32 to vector<8x1xf32>
    %223 = arith.addf %221, %222 : vector<8x1xf32>
    %224 = math.rsqrt %223 : vector<8x1xf32>
    %225 = vector.broadcast %224 : vector<8x1xf32> to vector<8x128xf32>
    %226 = arith.mulf %214, %225 : vector<8x128xf32>
    %227 = vector.broadcast %216 : vector<1x128xf32> to vector<8x128xf32>
    %228 = arith.mulf %226, %227 : vector<8x128xf32>
    %229 = arith.truncf %228 : vector<8x128xf32> to vector<8x128xbf16>
    %c1_81 = arith.constant 1 : index
    %c0_82 = arith.constant 0 : index
    %c0_83 = arith.constant 0 : index
    %230 = vector.load %arg4[%c1_81, %c0_82, %c0_83] : memref<2x128x384xbf16, #tpu.memory_space<vmem>>, vector<1x128x384xbf16>
    %231 = vector.shape_cast %230 : vector<1x128x384xbf16> to vector<128x384xbf16>
    %cst_84 = arith.constant dense<0.000000e+00> : vector<8x384xf32>
    %232 = tpu.matmul %229, %231, %cst_84 {dimension_numbers = #tpu.dot_dimension_numbers<[1], [0], [0], [1], [0, 0, 1, 1], [], []>} : vector<8x128xbf16>, vector<128x384xbf16>, vector<8x384xf32> -> vector<8x384xf32>
    %c1_85 = arith.constant 1 : index
    %c0_86 = arith.constant 0 : index
    %c0_87 = arith.constant 0 : index
    %233 = vector.load %arg5[%c1_85, %c0_86, %c0_87] : memref<2x1x384xf32, #tpu.memory_space<vmem>>, vector<1x1x384xf32>
    %234 = vector.shape_cast %233 : vector<1x1x384xf32> to vector<1x384xf32>
    %235 = vector.broadcast %234 : vector<1x384xf32> to vector<8x384xf32>
    %236 = arith.addf %232, %235 : vector<8x384xf32>
    %237 = vector.extract_strided_slice %236 {offsets = [0, 0], sizes = [8, 128], strides = [1, 1]} : vector<8x384xf32> to vector<8x128xf32>
    %238 = arith.mulf %237, %30 : vector<8x128xf32>
    %c127_i32_88 = arith.constant 127 : i32
    %239 = tpu.dynamic_rotate %237 by %c127_i32_88 dim 1 : vector<8x128xf32>, i32 -> vector<8x128xf32>
    %240 = arith.mulf %239, %33 : vector<8x128xf32>
    %241 = arith.addf %238, %240 : vector<8x128xf32>
    %c1_i32_89 = arith.constant 1 : i32
    %242 = tpu.dynamic_rotate %237 by %c1_i32_89 dim 1 : vector<8x128xf32>, i32 -> vector<8x128xf32>
    %243 = arith.mulf %242, %35 : vector<8x128xf32>
    %244 = arith.addf %241, %243 : vector<8x128xf32>
    %245 = vector.extract_strided_slice %236 {offsets = [0, 128], sizes = [8, 128], strides = [1, 1]} : vector<8x384xf32> to vector<8x128xf32>
    %246 = arith.mulf %245, %30 : vector<8x128xf32>
    %c127_i32_90 = arith.constant 127 : i32
    %247 = tpu.dynamic_rotate %245 by %c127_i32_90 dim 1 : vector<8x128xf32>, i32 -> vector<8x128xf32>
    %248 = arith.mulf %247, %33 : vector<8x128xf32>
    %249 = arith.addf %246, %248 : vector<8x128xf32>
    %c1_i32_91 = arith.constant 1 : i32
    %250 = tpu.dynamic_rotate %245 by %c1_i32_91 dim 1 : vector<8x128xf32>, i32 -> vector<8x128xf32>
    %251 = arith.mulf %250, %35 : vector<8x128xf32>
    %252 = arith.addf %249, %251 : vector<8x128xf32>
    %253 = vector.extract_strided_slice %236 {offsets = [0, 256], sizes = [8, 128], strides = [1, 1]} : vector<8x384xf32> to vector<8x128xf32>
    %c1_92 = arith.constant 1 : index
    %c0_93 = arith.constant 0 : index
    %c0_94 = arith.constant 0 : index
    %254 = vector.load %arg6[%c1_92, %c0_93, %c0_94] : memref<2x32x128xbf16, #tpu.memory_space<vmem>>, vector<1x32x128xbf16>
    %255 = vector.shape_cast %254 : vector<1x32x128xbf16> to vector<32x128xbf16>
    %cst_95 = arith.constant 0.000000e+00 : f32
    %256 = vector.broadcast %cst_95 : f32 to vector<8x128xf32>
    %257 = vector.extract_strided_slice %244 {offsets = [0, 0], sizes = [8, 8], strides = [1, 1]} : vector<8x128xf32> to vector<8x8xf32>
    %258 = arith.truncf %257 : vector<8x8xf32> to vector<8x8xbf16>
    %259 = vector.extract_strided_slice %252 {offsets = [0, 0], sizes = [8, 8], strides = [1, 1]} : vector<8x128xf32> to vector<8x8xf32>
    %260 = arith.truncf %259 : vector<8x8xf32> to vector<8x8xbf16>
    %261 = vector.extract_strided_slice %253 {offsets = [0, 0], sizes = [8, 8], strides = [1, 1]} : vector<8x128xf32> to vector<8x8xf32>
    %262 = arith.truncf %261 : vector<8x8xf32> to vector<8x8xbf16>
    %cst_96 = arith.constant dense<0.000000e+00> : vector<8x8xf32>
    %263 = tpu.matmul %258, %260, %cst_96 {dimension_numbers = #tpu.dot_dimension_numbers<[1], [1], [0], [0], [0, 0, 1, 0], [], []>} : vector<8x8xbf16>, vector<8x8xbf16>, vector<8x8xf32> -> vector<8x8xf32>
    %cst_97 = arith.constant 0.353553385 : f32
    %264 = vector.broadcast %cst_97 : f32 to vector<8x8xf32>
    %265 = arith.mulf %263, %264 : vector<8x8xf32>
    %cst_98 = arith.constant -1.000000e+30 : f32
    %266 = vector.broadcast %cst_98 : f32 to vector<8x8xf32>
    %267 = arith.select %3, %265, %266 : vector<8x8xi1>, vector<8x8xf32>
    %cst_99 = arith.constant dense<0xFF800000> : vector<8xf32>
    %268 = vector.multi_reduction <maximumf>, %267, %cst_99 [1] : vector<8x8xf32> to vector<8xf32>
    %269 = vector.shape_cast %268 : vector<8xf32> to vector<8x1xf32>
    %270 = vector.broadcast %269 : vector<8x1xf32> to vector<8x8xf32>
    %271 = arith.subf %267, %270 : vector<8x8xf32>
    %272 = math.exp %271 : vector<8x8xf32>
    %cst_100 = arith.constant dense<0.000000e+00> : vector<8xf32>
    %273 = vector.multi_reduction <add>, %272, %cst_100 [1] : vector<8x8xf32> to vector<8xf32>
    %274 = vector.shape_cast %273 : vector<8xf32> to vector<8x1xf32>
    %275 = arith.truncf %272 : vector<8x8xf32> to vector<8x8xbf16>
    %cst_101 = arith.constant dense<0.000000e+00> : vector<8x8xf32>
    %276 = tpu.matmul %275, %262, %cst_101 {dimension_numbers = #tpu.dot_dimension_numbers<[1], [0], [0], [1], [0, 0, 1, 1], [], []>} : vector<8x8xbf16>, vector<8x8xbf16>, vector<8x8xf32> -> vector<8x8xf32>
    %277 = vector.broadcast %274 : vector<8x1xf32> to vector<8x8xf32>
    %278 = arith.divf %276, %277 : vector<8x8xf32>
    %279 = arith.truncf %278 : vector<8x8xf32> to vector<8x8xbf16>
    %280 = vector.extract_strided_slice %255 {offsets = [0, 0], sizes = [8, 128], strides = [1, 1]} : vector<32x128xbf16> to vector<8x128xbf16>
    %cst_102 = arith.constant dense<0.000000e+00> : vector<8x128xf32>
    %281 = tpu.matmul %279, %280, %cst_102 {dimension_numbers = #tpu.dot_dimension_numbers<[1], [0], [0], [1], [0, 0, 1, 1], [], []>} : vector<8x8xbf16>, vector<8x128xbf16>, vector<8x128xf32> -> vector<8x128xf32>
    %282 = arith.addf %256, %281 : vector<8x128xf32>
    %283 = vector.extract_strided_slice %244 {offsets = [0, 8], sizes = [8, 8], strides = [1, 1]} : vector<8x128xf32> to vector<8x8xf32>
    %284 = arith.truncf %283 : vector<8x8xf32> to vector<8x8xbf16>
    %285 = vector.extract_strided_slice %252 {offsets = [0, 0], sizes = [8, 8], strides = [1, 1]} : vector<8x128xf32> to vector<8x8xf32>
    %286 = arith.truncf %285 : vector<8x8xf32> to vector<8x8xbf16>
    %287 = vector.extract_strided_slice %253 {offsets = [0, 0], sizes = [8, 8], strides = [1, 1]} : vector<8x128xf32> to vector<8x8xf32>
    %288 = arith.truncf %287 : vector<8x8xf32> to vector<8x8xbf16>
    %cst_103 = arith.constant dense<0.000000e+00> : vector<8x8xf32>
    %289 = tpu.matmul %284, %286, %cst_103 {dimension_numbers = #tpu.dot_dimension_numbers<[1], [1], [0], [0], [0, 0, 1, 0], [], []>} : vector<8x8xbf16>, vector<8x8xbf16>, vector<8x8xf32> -> vector<8x8xf32>
    %cst_104 = arith.constant 0.353553385 : f32
    %290 = vector.broadcast %cst_104 : f32 to vector<8x8xf32>
    %291 = arith.mulf %289, %290 : vector<8x8xf32>
    %cst_105 = arith.constant -1.000000e+30 : f32
    %292 = vector.broadcast %cst_105 : f32 to vector<8x8xf32>
    %293 = arith.select %3, %291, %292 : vector<8x8xi1>, vector<8x8xf32>
    %cst_106 = arith.constant dense<0xFF800000> : vector<8xf32>
    %294 = vector.multi_reduction <maximumf>, %293, %cst_106 [1] : vector<8x8xf32> to vector<8xf32>
    %295 = vector.shape_cast %294 : vector<8xf32> to vector<8x1xf32>
    %296 = vector.broadcast %295 : vector<8x1xf32> to vector<8x8xf32>
    %297 = arith.subf %293, %296 : vector<8x8xf32>
    %298 = math.exp %297 : vector<8x8xf32>
    %cst_107 = arith.constant dense<0.000000e+00> : vector<8xf32>
    %299 = vector.multi_reduction <add>, %298, %cst_107 [1] : vector<8x8xf32> to vector<8xf32>
    %300 = vector.shape_cast %299 : vector<8xf32> to vector<8x1xf32>
    %301 = arith.truncf %298 : vector<8x8xf32> to vector<8x8xbf16>
    %cst_108 = arith.constant dense<0.000000e+00> : vector<8x8xf32>
    %302 = tpu.matmul %301, %288, %cst_108 {dimension_numbers = #tpu.dot_dimension_numbers<[1], [0], [0], [1], [0, 0, 1, 1], [], []>} : vector<8x8xbf16>, vector<8x8xbf16>, vector<8x8xf32> -> vector<8x8xf32>
    %303 = vector.broadcast %300 : vector<8x1xf32> to vector<8x8xf32>
    %304 = arith.divf %302, %303 : vector<8x8xf32>
    %305 = arith.truncf %304 : vector<8x8xf32> to vector<8x8xbf16>
    %306 = vector.extract_strided_slice %255 {offsets = [8, 0], sizes = [8, 128], strides = [1, 1]} : vector<32x128xbf16> to vector<8x128xbf16>
    %cst_109 = arith.constant dense<0.000000e+00> : vector<8x128xf32>
    %307 = tpu.matmul %305, %306, %cst_109 {dimension_numbers = #tpu.dot_dimension_numbers<[1], [0], [0], [1], [0, 0, 1, 1], [], []>} : vector<8x8xbf16>, vector<8x128xbf16>, vector<8x128xf32> -> vector<8x128xf32>
    %308 = arith.addf %282, %307 : vector<8x128xf32>
    %309 = vector.extract_strided_slice %244 {offsets = [0, 16], sizes = [8, 8], strides = [1, 1]} : vector<8x128xf32> to vector<8x8xf32>
    %310 = arith.truncf %309 : vector<8x8xf32> to vector<8x8xbf16>
    %311 = vector.extract_strided_slice %252 {offsets = [0, 8], sizes = [8, 8], strides = [1, 1]} : vector<8x128xf32> to vector<8x8xf32>
    %312 = arith.truncf %311 : vector<8x8xf32> to vector<8x8xbf16>
    %313 = vector.extract_strided_slice %253 {offsets = [0, 8], sizes = [8, 8], strides = [1, 1]} : vector<8x128xf32> to vector<8x8xf32>
    %314 = arith.truncf %313 : vector<8x8xf32> to vector<8x8xbf16>
    %cst_110 = arith.constant dense<0.000000e+00> : vector<8x8xf32>
    %315 = tpu.matmul %310, %312, %cst_110 {dimension_numbers = #tpu.dot_dimension_numbers<[1], [1], [0], [0], [0, 0, 1, 0], [], []>} : vector<8x8xbf16>, vector<8x8xbf16>, vector<8x8xf32> -> vector<8x8xf32>
    %cst_111 = arith.constant 0.353553385 : f32
    %316 = vector.broadcast %cst_111 : f32 to vector<8x8xf32>
    %317 = arith.mulf %315, %316 : vector<8x8xf32>
    %cst_112 = arith.constant -1.000000e+30 : f32
    %318 = vector.broadcast %cst_112 : f32 to vector<8x8xf32>
    %319 = arith.select %3, %317, %318 : vector<8x8xi1>, vector<8x8xf32>
    %cst_113 = arith.constant dense<0xFF800000> : vector<8xf32>
    %320 = vector.multi_reduction <maximumf>, %319, %cst_113 [1] : vector<8x8xf32> to vector<8xf32>
    %321 = vector.shape_cast %320 : vector<8xf32> to vector<8x1xf32>
    %322 = vector.broadcast %321 : vector<8x1xf32> to vector<8x8xf32>
    %323 = arith.subf %319, %322 : vector<8x8xf32>
    %324 = math.exp %323 : vector<8x8xf32>
    %cst_114 = arith.constant dense<0.000000e+00> : vector<8xf32>
    %325 = vector.multi_reduction <add>, %324, %cst_114 [1] : vector<8x8xf32> to vector<8xf32>
    %326 = vector.shape_cast %325 : vector<8xf32> to vector<8x1xf32>
    %327 = arith.truncf %324 : vector<8x8xf32> to vector<8x8xbf16>
    %cst_115 = arith.constant dense<0.000000e+00> : vector<8x8xf32>
    %328 = tpu.matmul %327, %314, %cst_115 {dimension_numbers = #tpu.dot_dimension_numbers<[1], [0], [0], [1], [0, 0, 1, 1], [], []>} : vector<8x8xbf16>, vector<8x8xbf16>, vector<8x8xf32> -> vector<8x8xf32>
    %329 = vector.broadcast %326 : vector<8x1xf32> to vector<8x8xf32>
    %330 = arith.divf %328, %329 : vector<8x8xf32>
    %331 = arith.truncf %330 : vector<8x8xf32> to vector<8x8xbf16>
    %332 = vector.extract_strided_slice %255 {offsets = [16, 0], sizes = [8, 128], strides = [1, 1]} : vector<32x128xbf16> to vector<8x128xbf16>
    %cst_116 = arith.constant dense<0.000000e+00> : vector<8x128xf32>
    %333 = tpu.matmul %331, %332, %cst_116 {dimension_numbers = #tpu.dot_dimension_numbers<[1], [0], [0], [1], [0, 0, 1, 1], [], []>} : vector<8x8xbf16>, vector<8x128xbf16>, vector<8x128xf32> -> vector<8x128xf32>
    %334 = arith.addf %308, %333 : vector<8x128xf32>
    %335 = vector.extract_strided_slice %244 {offsets = [0, 24], sizes = [8, 8], strides = [1, 1]} : vector<8x128xf32> to vector<8x8xf32>
    %336 = arith.truncf %335 : vector<8x8xf32> to vector<8x8xbf16>
    %337 = vector.extract_strided_slice %252 {offsets = [0, 8], sizes = [8, 8], strides = [1, 1]} : vector<8x128xf32> to vector<8x8xf32>
    %338 = arith.truncf %337 : vector<8x8xf32> to vector<8x8xbf16>
    %339 = vector.extract_strided_slice %253 {offsets = [0, 8], sizes = [8, 8], strides = [1, 1]} : vector<8x128xf32> to vector<8x8xf32>
    %340 = arith.truncf %339 : vector<8x8xf32> to vector<8x8xbf16>
    %cst_117 = arith.constant dense<0.000000e+00> : vector<8x8xf32>
    %341 = tpu.matmul %336, %338, %cst_117 {dimension_numbers = #tpu.dot_dimension_numbers<[1], [1], [0], [0], [0, 0, 1, 0], [], []>} : vector<8x8xbf16>, vector<8x8xbf16>, vector<8x8xf32> -> vector<8x8xf32>
    %cst_118 = arith.constant 0.353553385 : f32
    %342 = vector.broadcast %cst_118 : f32 to vector<8x8xf32>
    %343 = arith.mulf %341, %342 : vector<8x8xf32>
    %cst_119 = arith.constant -1.000000e+30 : f32
    %344 = vector.broadcast %cst_119 : f32 to vector<8x8xf32>
    %345 = arith.select %3, %343, %344 : vector<8x8xi1>, vector<8x8xf32>
    %cst_120 = arith.constant dense<0xFF800000> : vector<8xf32>
    %346 = vector.multi_reduction <maximumf>, %345, %cst_120 [1] : vector<8x8xf32> to vector<8xf32>
    %347 = vector.shape_cast %346 : vector<8xf32> to vector<8x1xf32>
    %348 = vector.broadcast %347 : vector<8x1xf32> to vector<8x8xf32>
    %349 = arith.subf %345, %348 : vector<8x8xf32>
    %350 = math.exp %349 : vector<8x8xf32>
    %cst_121 = arith.constant dense<0.000000e+00> : vector<8xf32>
    %351 = vector.multi_reduction <add>, %350, %cst_121 [1] : vector<8x8xf32> to vector<8xf32>
    %352 = vector.shape_cast %351 : vector<8xf32> to vector<8x1xf32>
    %353 = arith.truncf %350 : vector<8x8xf32> to vector<8x8xbf16>
    %cst_122 = arith.constant dense<0.000000e+00> : vector<8x8xf32>
    %354 = tpu.matmul %353, %340, %cst_122 {dimension_numbers = #tpu.dot_dimension_numbers<[1], [0], [0], [1], [0, 0, 1, 1], [], []>} : vector<8x8xbf16>, vector<8x8xbf16>, vector<8x8xf32> -> vector<8x8xf32>
    %355 = vector.broadcast %352 : vector<8x1xf32> to vector<8x8xf32>
    %356 = arith.divf %354, %355 : vector<8x8xf32>
    %357 = arith.truncf %356 : vector<8x8xf32> to vector<8x8xbf16>
    %358 = vector.extract_strided_slice %255 {offsets = [24, 0], sizes = [8, 128], strides = [1, 1]} : vector<32x128xbf16> to vector<8x128xbf16>
    %cst_123 = arith.constant dense<0.000000e+00> : vector<8x128xf32>
    %359 = tpu.matmul %357, %358, %cst_123 {dimension_numbers = #tpu.dot_dimension_numbers<[1], [0], [0], [1], [0, 0, 1, 1], [], []>} : vector<8x8xbf16>, vector<8x128xbf16>, vector<8x128xf32> -> vector<8x128xf32>
    %360 = arith.addf %334, %359 : vector<8x128xf32>
    %361 = arith.addf %214, %360 : vector<8x128xf32>
    %c1_124 = arith.constant 1 : index
    %c0_125 = arith.constant 0 : index
    %c0_126 = arith.constant 0 : index
    %362 = vector.load %arg7[%c1_124, %c0_125, %c0_126] : memref<2x1x128xf32, #tpu.memory_space<vmem>>, vector<1x1x128xf32>
    %363 = vector.shape_cast %362 : vector<1x1x128xf32> to vector<1x128xf32>
    %364 = arith.mulf %361, %361 : vector<8x128xf32>
    %cst_127 = arith.constant dense<0.000000e+00> : vector<8xf32>
    %365 = vector.multi_reduction <add>, %364, %cst_127 [1] : vector<8x128xf32> to vector<8xf32>
    %366 = vector.shape_cast %365 : vector<8xf32> to vector<8x1xf32>
    %cst_128 = arith.constant 3.125000e-02 : f32
    %367 = vector.broadcast %cst_128 : f32 to vector<8x1xf32>
    %368 = arith.mulf %366, %367 : vector<8x1xf32>
    %cst_129 = arith.constant 9.99999974E-6 : f32
    %369 = vector.broadcast %cst_129 : f32 to vector<8x1xf32>
    %370 = arith.addf %368, %369 : vector<8x1xf32>
    %371 = math.rsqrt %370 : vector<8x1xf32>
    %372 = vector.broadcast %371 : vector<8x1xf32> to vector<8x128xf32>
    %373 = arith.mulf %361, %372 : vector<8x128xf32>
    %374 = vector.broadcast %363 : vector<1x128xf32> to vector<8x128xf32>
    %375 = arith.mulf %373, %374 : vector<8x128xf32>
    %376 = arith.truncf %375 : vector<8x128xf32> to vector<8x128xbf16>
    %c1_130 = arith.constant 1 : index
    %c0_131 = arith.constant 0 : index
    %c0_132 = arith.constant 0 : index
    %377 = vector.load %arg8[%c1_130, %c0_131, %c0_132] : memref<2x128x256xbf16, #tpu.memory_space<vmem>>, vector<1x128x256xbf16>
    %378 = vector.shape_cast %377 : vector<1x128x256xbf16> to vector<128x256xbf16>
    %cst_133 = arith.constant dense<0.000000e+00> : vector<8x256xf32>
    %379 = tpu.matmul %376, %378, %cst_133 {dimension_numbers = #tpu.dot_dimension_numbers<[1], [0], [0], [1], [0, 0, 1, 1], [], []>} : vector<8x128xbf16>, vector<128x256xbf16>, vector<8x256xf32> -> vector<8x256xf32>
    %380 = vector.extract_strided_slice %379 {offsets = [0, 0], sizes = [8, 128], strides = [1, 1]} : vector<8x256xf32> to vector<8x128xf32>
    %381 = vector.extract_strided_slice %379 {offsets = [0, 128], sizes = [8, 128], strides = [1, 1]} : vector<8x256xf32> to vector<8x128xf32>
    %382 = arith.negf %380 : vector<8x128xf32>
    %383 = math.exp %382 : vector<8x128xf32>
    %cst_134 = arith.constant 1.000000e+00 : f32
    %384 = vector.broadcast %cst_134 : f32 to vector<8x128xf32>
    %385 = arith.addf %384, %383 : vector<8x128xf32>
    %386 = arith.divf %384, %385 : vector<8x128xf32>
    %387 = arith.mulf %380, %386 : vector<8x128xf32>
    %388 = arith.mulf %387, %381 : vector<8x128xf32>
    %389 = arith.truncf %388 : vector<8x128xf32> to vector<8x128xbf16>
    %c1_135 = arith.constant 1 : index
    %c0_136 = arith.constant 0 : index
    %c0_137 = arith.constant 0 : index
    %390 = vector.load %arg9[%c1_135, %c0_136, %c0_137] : memref<2x128x128xbf16, #tpu.memory_space<vmem>>, vector<1x128x128xbf16>
    %391 = vector.shape_cast %390 : vector<1x128x128xbf16> to vector<128x128xbf16>
    %cst_138 = arith.constant dense<0.000000e+00> : vector<8x128xf32>
    %392 = tpu.matmul %389, %391, %cst_138 {dimension_numbers = #tpu.dot_dimension_numbers<[1], [0], [0], [1], [0, 0, 1, 1], [], []>} : vector<8x128xbf16>, vector<128x128xbf16>, vector<8x128xf32> -> vector<8x128xf32>
    %393 = arith.addf %361, %392 : vector<8x128xf32>
    %c0_139 = arith.constant 0 : index
    %c0_140 = arith.constant 0 : index
    %394 = vector.load %arg10[%c0_139, %c0_140] : memref<1x128xf32, #tpu.memory_space<vmem>>, vector<1x128xf32>
    %395 = arith.mulf %393, %393 : vector<8x128xf32>
    %cst_141 = arith.constant dense<0.000000e+00> : vector<8xf32>
    %396 = vector.multi_reduction <add>, %395, %cst_141 [1] : vector<8x128xf32> to vector<8xf32>
    %397 = vector.shape_cast %396 : vector<8xf32> to vector<8x1xf32>
    %cst_142 = arith.constant 3.125000e-02 : f32
    %398 = vector.broadcast %cst_142 : f32 to vector<8x1xf32>
    %399 = arith.mulf %397, %398 : vector<8x1xf32>
    %cst_143 = arith.constant 9.99999974E-6 : f32
    %400 = vector.broadcast %cst_143 : f32 to vector<8x1xf32>
    %401 = arith.addf %399, %400 : vector<8x1xf32>
    %402 = math.rsqrt %401 : vector<8x1xf32>
    %403 = vector.broadcast %402 : vector<8x1xf32> to vector<8x128xf32>
    %404 = arith.mulf %393, %403 : vector<8x128xf32>
    %405 = vector.broadcast %394 : vector<1x128xf32> to vector<8x128xf32>
    %406 = arith.mulf %404, %405 : vector<8x128xf32>
    %c0_144 = arith.constant 0 : index
    %c0_145 = arith.constant 0 : index
    %407 = vector.load %arg11[%c0_144, %c0_145] : memref<8x128xf32, #tpu.memory_space<vmem>>, vector<8x128xf32>
    tpu.vector_store %arg11[%c0_144, %c0_145], %406 {strides = array<i32>} : memref<8x128xf32, #tpu.memory_space<vmem>>, vector<8x128xf32>,
    return
  }
}

</mosaic_0001>

<llo_original>
// kernel: tile.16
$region0: #{tile.16}
  #allocation0 [shape = 's32[1]{0}', space=sflag, size = 0x4, scoped, tag = 'scoped memory for tile.16']
  %s0 = inlined_call_operand.vmem [shape: f32[2], index: 0, kind: input, shape index: {}]
  %s1 = inlined_call_operand.vmem [shape: f32[2,2], index: 1, kind: output, shape index: {}]
  // Predicated region
  $region2: #{tile.16} parent=0 // pred_check
    _
  $region3: #{tile.16} parent=0 // pred_check_branch
    %3 = sbr.rel (0) target = $region5
  $region4: #{tile.16} parent=0 // pred_region
    _
  $region5: #{tile.16} parent=0 // pred_fallthru
    _
  %v4 = vld [vmem:[%s0] ss:$0 sm:$0xff]
  %5 = vst [vmem:[%s1] sm:$0x3] %v4

// kernel: mul.21
$region0: #{mul.21}
  %s0 = inlined_call_operand.vmem [shape: f32[2,2], index: 0, kind: input, shape index: {}]
  %s1 = inlined_call_operand.vmem [shape: f32[4], index: 1, kind: output, shape index: {}]
  $region1: #{mul.21} parent=0
    #allocation0 [shape = 'u8[4096]{0}', space=vmem, size = 0x1000, scoped, tag = 'scoped mem for output reshape']
    #allocation1 [shape = 'u8[4096]{0}', space=vmem, size = 0x1000, scoped, tag = 'scoped mem for input reshape']
    %s3 = sshll.u32 1, 2
    %s4 = ssub.s32 %s3, 1
    %v5 = vld [vmem:[%s0] sm:%s4]
    %6 = vst [vmem:[#allocation1] sm:%s4] %v5
    %v7 = vld [vmem:[#allocation1] sm:$0x1]
    %vm8 = vcmask 15360
    %9 = vst.msk [vmem:[#allocation0] sm:$0x1] %vm8, %v7
    %s10 = scalar_lea.vmem [#allocation1], 1
    %v11 = vld [vmem:[%s10] sm:$0x1]
    %12 = vrot.lane.b32.xlu0 %v11, 2
    %v13 = vpop.permute.xlu0 %12
    %vm14 = vcmask 31760
    %15 = vst.msk [vmem:[#allocation0] sm:$0x1] %vm14, %v13
    %s17 = sshll.u32 1, 1
    %s18 = ssub.s32 %s17, 1
    %v20 = vld [vmem:[#allocation0] sm:%s18]
    %s21 = sshll.u32 1, 1
    %s22 = ssub.s32 %s21, 1
    %23 = vst [vmem:[%s1] sm:%s22] %v20

// kernel: tile.27
$region0: #{tile.27}
  %s0 = inlined_call_operand.vmem [shape: f32[8,4,8], index: 0, kind: input, shape index: {}]
  %s1 = inlined_call_operand.vmem [shape: f32[8,32], index: 1, kind: output, shape index: {}]
  $region1: #{tile.27} parent=0
    #allocation0 [shape = 'u8[32768]{0}', space=vmem, size = 0x8000, scoped, tag = 'scoped mem for input reshape']
    %s3 = sshll.u32 1, 4
    %s4 = ssub.s32 %s3, 1
    %s5 = smul.addr 4, 7
    %s6 = scalar_lea.vmem %s0, %s5
    %v7 = vld [vmem:[%s6] sm:%s4]
    %s8 = scalar_lea.vmem [#allocation0], 56
    %9 = vst [vmem:[%s8] sm:%s4] %v7
    %s10 = smul.addr 4, 6
    %s11 = scalar_lea.vmem %s0, %s10
    %v12 = vld [vmem:[%s11] sm:%s4]
    %s13 = scalar_lea.vmem [#allocation0], 48
    %14 = vst [vmem:[%s13] sm:%s4] %v12
    %s15 = smul.addr 4, 5
    %s16 = scalar_lea.vmem %s0, %s15
    %v17 = vld [vmem:[%s16] sm:%s4]
    %s18 = scalar_lea.vmem [#allocation0], 40
    %19 = vst [vmem:[%s18] sm:%s4] %v17
    %s20 = smul.addr 4, 4
    %s21 = scalar_lea.vmem %s0, %s20
    %v22 = vld [vmem:[%s21] sm:%s4]
    %s23 = scalar_lea.vmem [#allocation0], 32
    %24 = vst [vmem:[%s23] sm:%s4] %v22
    %s25 = smul.addr 4, 3
    %s26 = scalar_lea.vmem %s0, %s25
    %v27 = vld [vmem:[%s26] sm:%s4]
    %s28 = scalar_lea.vmem [#allocation0], 24
    %29 = vst [vmem:[%s28] sm:%s4] %v27
    %s30 = smul.addr 4, 2
    %s31 = scalar_lea.vmem %s0, %s30
    %v32 = vld [vmem:[%s31] sm:%s4]
    %s33 = scalar_lea.vmem [#allocation0], 16
    %34 = vst [vmem:[%s33] sm:%s4] %v32
    %s35 = scalar_lea.vmem %s0, 4
    %v36 = vld [vmem:[%s35] sm:%s4]
    %s37 = scalar_lea.vmem [#allocation0], 8
    %38 = vst [vmem:[%s37] sm:%s4] %v36
    %v39 = vld [vmem:[%s0] sm:%s4]
    %40 = vst [vmem:[#allocation0] sm:%s4] %v39
    %v41 = vld [vmem:[#allocation0] ss:$8 sm:$0xf]
    %v42 = vld [vmem:[#allocation0] ss:$8 sm:$0xf0]
    %vm43 = vcmask 1047556
    %v44 = vsel %vm43, %v42, %v41
    %vm45 = vcmask 64512
    %46 = vst.msk [vmem:[%s1] sm:$0xff] %vm45, %v44
    %s47 = scalar_lea.vmem [#allocation0], 3
    %v48 = vld [vmem:[%s47] ss:$8 sm:$0xf]
    %s49 = scalar_lea.vmem [#allocation0], 3
    %v50 = vld [vmem:[%s49] ss:$8 sm:$0xf0]
    %vm51 = vcmask 1047556
    %v52 = vsel %vm51, %v50, %v48
    %53 = vrot.lane.b32.xlu0 %v52, 24
    %v54 = vpop.permute.xlu0 %53
    %vm55 = vcmask 261312
    %56 = vst.msk [vmem:[%s1] sm:$0xff] %vm55, %v54
    %s57 = scalar_lea.vmem [#allocation0], 2
    %v58 = vld [vmem:[%s57] ss:$8 sm:$0xf]
    %s59 = scalar_lea.vmem [#allocation0], 2
    %v60 = vld [vmem:[%s59] ss:$8 sm:$0xf0]
    %vm61 = vcmask 1047556
    %v62 = vsel %vm61, %v60, %v58
    %63 = vrot.lane.b32.xlu0 %v62, 16
    %v64 = vpop.permute.xlu0 %63
    %vm65 = vcmask 195712
    %66 = vst.msk [vmem:[%s1] sm:$0xff] %vm65, %v64
    %s67 = scalar_lea.vmem [#allocation0], 1
    %v68 = vld [vmem:[%s67] ss:$8 sm:$0xf]
    %s69 = scalar_lea.vmem [#allocation0], 1
    %v70 = vld [vmem:[%s69] ss:$8 sm:$0xf0]
    %vm71 = vcmask 1047556
    %v72 = vsel %vm71, %v70, %v68
    %73 = vrot.lane.b32.xlu0 %v72, 8
    %v74 = vpop.permute.xlu0 %73
    %vm75 = vcmask 130112
    %76 = vst.msk [vmem:[%s1] sm:$0xff] %vm75, %v74

// kernel: chatglm_forward.1
$region0: #{chatglm_forward.1}
  #allocation0 [shape = 'u32[]', space=smem, size = 0x4, offset = 0x4, fixed_abs, tag = 'smem constant byte address 0x4 - core index']
  #allocation1 [shape = 'u32[144,128]{1,0:T(1,128)}', space=vmem, size = 0x12000, scoped, tag = 'internal scratch']
  %s0 = inlined_call_operand.vmem [shape: f32[8,128], index: 0, kind: input, shape index: {}]
  %s1 = inlined_call_operand.vmem [shape: f32[8,128], index: 1, kind: input, shape index: {}]
  %s2 = inlined_call_operand.vmem [shape: f32[8,128], index: 2, kind: input, shape index: {}]
  %s3 = inlined_call_operand.vmem [shape: f32[2,1,128], index: 3, kind: input, shape index: {}]
  %s4 = inlined_call_operand.vmem [shape: bf16[2,128,384], index: 4, kind: input, shape index: {}]
  %s5 = inlined_call_operand.vmem [shape: f32[2,1,384], index: 5, kind: input, shape index: {}]
  %s6 = inlined_call_operand.hbm [shape: bf16[2,32,128], index: 6, kind: input, shape index: {}]
  %s7 = inlined_call_operand.vmem [shape: f32[2,1,128], index: 7, kind: input, shape index: {}]
  %s8 = inlined_call_operand.hbm [shape: bf16[2,128,256], index: 8, kind: input, shape index: {}]
  %s9 = inlined_call_operand.hbm [shape: bf16[2,128,128], index: 9, kind: input, shape index: {}]
  %s10 = inlined_call_operand.vmem [shape: f32[1,128], index: 10, kind: input, shape index: {}]
  %s11 = inlined_call_operand.hbm [shape: f32[8,128], index: 11, kind: output, shape index: {}]
  %s12 = sld [smem:[#allocation0]]
  $region66: #{chatglm_forward.1} parent=0
    _
  %s14 = ssub.s32 1, %s12
  %s15 = scalar_select 0, %s14, %s12
  $region1: #{chatglm_forward.1} parent=0
    #allocation2 [shape = 'u8[16384]{0}', space=vmem, size = 0x4000, scoped, tag = 'input window, operand 6, single buffered']
    #allocation3 [shape = 's32[1]{0}', space=sflag, size = 0x4, scoped, tag = 'scoped memory for chatglm_forward.1']
    #allocation4 [shape = 's32[1]{0}', space=sflag, size = 0x4, scoped, tag = 'scoped memory for chatglm_forward.1']
    #allocation5 [shape = 'u8[131072]{0}', space=vmem, size = 0x20000, scoped, tag = 'input window, operand 8, single buffered']
    #allocation6 [shape = 's32[1]{0}', space=sflag, size = 0x4, scoped, tag = 'scoped memory for chatglm_forward.1']
    #allocation7 [shape = 'u8[65536]{0}', space=vmem, size = 0x10000, scoped, tag = 'input window, operand 9, single buffered']
    #allocation8 [shape = 'u8[4096]{0}', space=vmem, size = 0x1000, scoped, tag = 'output window, operand 0, single buffered']
    %16 = vsyncpa [#allocation3], 0
    %17 = vsyncpa [#allocation6], 0
    %18 = vsyncpa [#allocation4], 0
    // Predicated region
    $region2: #{chatglm_forward.1} parent=1 // pred_check
      _
    $region3: #{chatglm_forward.1} parent=1 // pred_check_branch
      %20 = sbr.rel (0) target = $region5
    $region4: #{chatglm_forward.1} parent=1 // pred_region
      _
    $region5: #{chatglm_forward.1} parent=1 // pred_fallthru
      _
    // Predicated region
    $region6: #{chatglm_forward.1} parent=1 // pred_check
      _
    $region7: #{chatglm_forward.1} parent=1 // pred_check_branch
      %22 = sbr.rel (0) target = $region9
    $region8: #{chatglm_forward.1} parent=1 // pred_region
      _
    $region9: #{chatglm_forward.1} parent=1 // pred_fallthru
      _
    // Predicated region
    $region10: #{chatglm_forward.1} parent=1 // pred_check
      _
    $region11: #{chatglm_forward.1} parent=1 // pred_check_branch
      %24 = sbr.rel (0) target = $region13
    $region12: #{chatglm_forward.1} parent=1 // pred_region
      _
    $region13: #{chatglm_forward.1} parent=1 // pred_fallthru
      _
    // Predicated region
    $region14: #{chatglm_forward.1} parent=1 // pred_check
      _
    $region15: #{chatglm_forward.1} parent=1 // pred_check_branch
      %26 = sbr.rel (0) target = $region17
    $region16: #{chatglm_forward.1} parent=1 // pred_region
      _
    $region17: #{chatglm_forward.1} parent=1 // pred_fallthru
      _
    // Predicated region
    $region18: #{chatglm_forward.1} parent=1 // pred_check
      _
    $region19: #{chatglm_forward.1} parent=1 // pred_check_branch
      %28 = sbr.rel (0) target = $region21
    $region20: #{chatglm_forward.1} parent=1 // pred_region
      _
    $region21: #{chatglm_forward.1} parent=1 // pred_fallthru
      _
    // Predicated region
    $region22: #{chatglm_forward.1} parent=1 // pred_check
      _
    $region23: #{chatglm_forward.1} parent=1 // pred_check_branch
      %30 = sbr.rel (0) target = $region25
    $region24: #{chatglm_forward.1} parent=1 // pred_region
      _
    $region25: #{chatglm_forward.1} parent=1 // pred_fallthru
      _
    // Predicated region
    $region26: #{chatglm_forward.1} parent=1 // pred_check
      _
    $region27: #{chatglm_forward.1} parent=1 // pred_check_branch
      %32 = sbr.rel (0) target = $region29
    $region28: #{chatglm_forward.1} parent=1 // pred_region
      %s34 = ssub.s32 512, 512
      %35 = vsyncadd [#allocation3], %s34
      %s36 = sshll.u32 [#allocation2], 4
      %s37 = int_to_ptr.vmem [resolvable:$true] %s36
      %42 = dma.hbm_to_vmem [thread:$0]  %s6, 512, %s37, [#allocation3], 64, 64, 4
    $region29: #{chatglm_forward.1} parent=1 // pred_fallthru
      _
    // Predicated region
    $region30: #{chatglm_forward.1} parent=1 // pred_check
      _
    $region31: #{chatglm_forward.1} parent=1 // pred_check_branch
      %44 = sbr.rel (0) target = $region33
    $region32: #{chatglm_forward.1} parent=1 // pred_region
      _
    $region33: #{chatglm_forward.1} parent=1 // pred_fallthru
      _
    // Predicated region
    $region34: #{chatglm_forward.1} parent=1 // pred_check
      _
    $region35: #{chatglm_forward.1} parent=1 // pred_check_branch
      %46 = sbr.rel (0) target = $region37
    $region36: #{chatglm_forward.1} parent=1 // pred_region
      %s48 = ssub.s32 4096, 4096
      %49 = vsyncadd [#allocation6], %s48
      %s50 = sshll.u32 [#allocation5], 4
      %s51 = int_to_ptr.vmem [resolvable:$true] %s50
      %56 = dma.hbm_to_vmem [thread:$0]  %s8, 4096, %s51, [#allocation6], 128, 128, 8
    $region37: #{chatglm_forward.1} parent=1 // pred_fallthru
      _
    // Predicated region
    $region38: #{chatglm_forward.1} parent=1 // pred_check
      _
    $region39: #{chatglm_forward.1} parent=1 // pred_check_branch
      %58 = sbr.rel (0) target = $region41
    $region40: #{chatglm_forward.1} parent=1 // pred_region
      %s60 = ssub.s32 2048, 2048
      %61 = vsyncadd [#allocation6], %s60
      %s62 = sshll.u32 [#allocation7], 4
      %s63 = int_to_ptr.vmem [resolvable:$true] %s62
      %68 = dma.hbm_to_vmem [thread:$0]  %s9, 2048, %s63, [#allocation6], 64, 64, 4
    $region41: #{chatglm_forward.1} parent=1 // pred_fallthru
      _
    // Predicated region
    $region42: #{chatglm_forward.1} parent=1 // pred_check
      _
    $region43: #{chatglm_forward.1} parent=1 // pred_check_branch
      %70 = sbr.rel (0) target = $region45
    $region44: #{chatglm_forward.1} parent=1 // pred_region
      _
    $region45: #{chatglm_forward.1} parent=1 // pred_fallthru
      _
    // Predicated region
    $region46: #{chatglm_forward.1} parent=1 // pred_check
      _
    $region47: #{chatglm_forward.1} parent=1 // pred_check_branch
      %72 = sbr.rel (0) target = $region49
    $region48: #{chatglm_forward.1} parent=1 // pred_region
      %73 = dma.done [#allocation3], 512
    $region49: #{chatglm_forward.1} parent=1 // pred_fallthru
      _
    // Predicated region
    $region50: #{chatglm_forward.1} parent=1 // pred_check
      _
    $region51: #{chatglm_forward.1} parent=1 // pred_check_branch
      %75 = sbr.rel (0) target = $region53
    $region52: #{chatglm_forward.1} parent=1 // pred_region
      %76 = dma.done [#allocation6], 4096
    $region53: #{chatglm_forward.1} parent=1 // pred_fallthru
      _
    // Predicated region
    $region54: #{chatglm_forward.1} parent=1 // pred_check
      _
    $region55: #{chatglm_forward.1} parent=1 // pred_check_branch
      %78 = sbr.rel (0) target = $region57
    $region56: #{chatglm_forward.1} parent=1 // pred_region
      %79 = dma.done [#allocation6], 2048
    $region57: #{chatglm_forward.1} parent=1 // pred_fallthru
      _
    %v81 = vld [vmem:[%s0] sm:$0xff]
    %v82 = vlaneseq
    %v83 = vshrl.u32 %v82, 7
    %v84 = vlaneseq
    %v85 = vand.u32 %v84, 127
    %vm86 = vcmp.le.s32.totalorder %v85, %v83
    %vm87 = vcmp.lt.s32.totalorder %v85, 0
    %v88 = vsub.s32 0, %v85
    %v89 = vsel %vm87, %v88, %v85
    %v90 = vshrl.u32 %v89, 1
    %v91 = vand.u32 %v89, 1
    %v92 = vsub.s32 0, %v91
    %v93 = vsel %vm87, %v92, %v91
    %vm94 = vcmp.ne.s32.totalorder %v93, 0
    %vm95 = vcmp.lt.s32.totalorder %v93, 0
    %vm96 = vmand %vm95, %vm94
    %v97 = vadd.s32 %v93, 2
    %v98 = vsel %vm96, %v97, %v93
    %vm99 = vcmp.eq.s32.totalorder %v98, 0
    %v100 = vadd.s32 %v85, 1
    %v101 = vsub.s32 %v85, 1
    %v102 = vsel %vm99, %v100, %v101
    %103 = vrot.lane.b32.xlu0 %v85, 127
    %v104 = vpop.permute.xlu0 %103
    %vm105 = vcmp.eq.s32.totalorder %v104, %v102
    %v106 = vld [vmem:[%s1] sm:$0xff]
    %v107 = vld [vmem:[%s2] sm:$0xff]
    %v108 = vsel %vm105, %v107, 0.0
    %v109 = vsel %vm105, 0.0, %v107
    %v110 = vld [vmem:[%s3] sm:$0x1]
    %v111 = vmul.f32 %v81, %v81
    %112 = vadd.xlane.f32.xlu0 %v111
    %v113 = vpop.xlane.xlu0 %112
    %v114 = vmul.f32 %v113, 0.03125
    %v115 = vadd.f32 %v114, 1e-05
    %v116 = vrsqrt.pop %v115
    %v117 = vmul.f32 %v81, %v116
    %v119 = vlaneseq
    %v120 = vshrl.u32 %v119, 7
    %v121 = vsub.s32 0, %v120
    %v122 = vrot.slane %v110, %v121
    %v124 = vmul.f32 %v117, %v122
    %v125 = vpack.c.bf16 %v124, %v124
    %v126 = vld [vmem:[%s4] sm:$0xff]
    %v127 = vld [vmem:[%s4 + $0x8] sm:$0xf]
    %v128 = vld [vmem:[%s4 + $0xc] sm:$0xff]
    %v129 = vld [vmem:[%s4 + $0x14] sm:$0xf]
    %v130 = vld [vmem:[%s4 + $0x18] sm:$0xff]
    %v131 = vld [vmem:[%s4 + $0x20] sm:$0xf]
    %v132 = vld [vmem:[%s4 + $0x24] sm:$0xff]
    %v133 = vld [vmem:[%s4 + $0x2c] sm:$0xf]
    %v134 = vld [vmem:[%s4 + $0x30] sm:$0xff]
    %v135 = vld [vmem:[%s4 + $0x38] sm:$0xf]
    %v136 = vld [vmem:[%s4 + $0x3c] sm:$0xff]
    %v137 = vld [vmem:[%s4 + $0x44] sm:$0xf]
    %v138 = vld [vmem:[%s4 + $0x48] sm:$0xff]
    %v139 = vld [vmem:[%s4 + $0x50] sm:$0xf]
    %v140 = vld [vmem:[%s4 + $0x54] sm:$0xff]
    %v141 = vld [vmem:[%s4 + $0x5c] sm:$0xf]
    %v142 = vld [vmem:[%s4 + $0x60] sm:$0xff]
    %v143 = vld [vmem:[%s4 + $0x68] sm:$0xf]
    %v144 = vld [vmem:[%s4 + $0x6c] sm:$0xff]
    %v145 = vld [vmem:[%s4 + $0x74] sm:$0xf]
    %v146 = vld [vmem:[%s4 + $0x78] sm:$0xff]
    %v147 = vld [vmem:[%s4 + $0x80] sm:$0xf]
    %v148 = vld [vmem:[%s4 + $0x84] sm:$0xff]
    %v149 = vld [vmem:[%s4 + $0x8c] sm:$0xf]
    %v150 = vld [vmem:[%s4 + $0x90] sm:$0xff]
    %v151 = vld [vmem:[%s4 + $0x98] sm:$0xf]
    %v152 = vld [vmem:[%s4 + $0x9c] sm:$0xff]
    %v153 = vld [vmem:[%s4 + $0xa4] sm:$0xf]
    %v154 = vld [vmem:[%s4 + $0xa8] sm:$0xff]
    %v155 = vld [vmem:[%s4 + $0xb0] sm:$0xf]
    %v156 = vld [vmem:[%s4 + $0xb4] sm:$0xff]
    %v157 = vld [vmem:[%s4 + $0xbc] sm:$0xf]
    %v158 = vld [vmem:[%s5] sm:$0x7]
    %v160 = vlaneseq
    %v161 = vshrl.u32 %v160, 7
    %v162 = vsub.s32 0, %v161
    %v163 = vrot.slane %v158, %v162
    %v164 = vlaneseq
    %v165 = vshrl.u32 %v164, 7
    %v166 = vsub.s32 1, %v165
    %v167 = vrot.slane %v158, %v166
    %v168 = vlaneseq
    %v169 = vshrl.u32 %v168, 7
    %v170 = vsub.s32 2, %v169
    %v171 = vrot.slane %v158, %v170
    %v207 = vunpack.c.l.b16 %v126
    %v208 = vunpack.c.h.b16 %v126
    %v209 = vunpack.c.l.b16 %v127
    %v210 = vunpack.c.l.b16 %v128
    %v211 = vunpack.c.h.b16 %v128
    %v212 = vunpack.c.l.b16 %v129
    %v213 = vunpack.c.l.b16 %v130
    %v214 = vunpack.c.h.b16 %v130
    %v215 = vunpack.c.l.b16 %v131
    %v216 = vunpack.c.l.b16 %v132
    %v217 = vunpack.c.h.b16 %v132
    %v218 = vunpack.c.l.b16 %v133
    %v219 = vunpack.c.l.b16 %v134
    %v220 = vunpack.c.h.b16 %v134
    %v221 = vunpack.c.l.b16 %v135
    %v222 = vunpack.c.l.b16 %v136
    %v223 = vunpack.c.h.b16 %v136
    %v224 = vunpack.c.l.b16 %v137
    %v225 = vunpack.c.l.b16 %v138
    %v226 = vunpack.c.h.b16 %v138
    %v227 = vunpack.c.l.b16 %v139
    %v228 = vunpack.c.l.b16 %v140
    %v229 = vunpack.c.h.b16 %v140
    %v230 = vunpack.c.l.b16 %v141
    %v231 = vunpack.c.l.b16 %v142
    %v232 = vunpack.c.h.b16 %v142
    %v233 = vunpack.c.l.b16 %v143
    %v234 = vunpack.c.l.b16 %v144
    %v235 = vunpack.c.h.b16 %v144
    %v236 = vunpack.c.l.b16 %v145
    %v237 = vunpack.c.l.b16 %v146
    %v238 = vunpack.c.h.b16 %v146
    %v239 = vunpack.c.l.b16 %v147
    %v240 = vunpack.c.l.b16 %v148
    %v241 = vunpack.c.h.b16 %v148
    %v242 = vunpack.c.l.b16 %v149
    %v243 = vunpack.c.l.b16 %v150
    %v244 = vunpack.c.h.b16 %v150
    %v245 = vunpack.c.l.b16 %v151
    %v246 = vunpack.c.l.b16 %v152
    %v247 = vunpack.c.h.b16 %v152
    %v248 = vunpack.c.l.b16 %v153
    %v249 = vunpack.c.l.b16 %v154
    %v250 = vunpack.c.h.b16 %v154
    %v251 = vunpack.c.l.b16 %v155
    %v252 = vunpack.c.l.b16 %v156
    %v253 = vunpack.c.h.b16 %v156
    %v254 = vunpack.c.l.b16 %v157
    %v255 = vpack.c.b16 %v210, %v207
    %v256 = vpack.c.b16 %v211, %v208
    %v257 = vpack.c.b16 %v212, %v209
    %v258 = vpack.c.b16 %v216, %v213
    %v259 = vpack.c.b16 %v217, %v214
    %v260 = vpack.c.b16 %v218, %v215
    %v261 = vpack.c.b16 %v222, %v219
    %v262 = vpack.c.b16 %v223, %v220
    %v263 = vpack.c.b16 %v224, %v221
    %v264 = vpack.c.b16 %v228, %v225
    %v265 = vpack.c.b16 %v229, %v226
    %v266 = vpack.c.b16 %v230, %v227
    %v267 = vpack.c.b16 %v234, %v231
    %v268 = vpack.c.b16 %v235, %v232
    %v269 = vpack.c.b16 %v236, %v233
    %v270 = vpack.c.b16 %v240, %v237
    %v271 = vpack.c.b16 %v241, %v238
    %v272 = vpack.c.b16 %v242, %v239
    %v273 = vpack.c.b16 %v246, %v243
    %v274 = vpack.c.b16 %v247, %v244
    %v275 = vpack.c.b16 %v248, %v245
    %v276 = vpack.c.b16 %v252, %v249
    %v277 = vpack.c.b16 %v253, %v250
    %v278 = vpack.c.b16 %v254, %v251
    %303 = vmatprep.subr.bf16.mxu0 %v277
    %304 = vmatpush1.bf16.msra.mxu0 %v276
    %305 = vmatprep.subr.bf16.mxu0 %v274
    %306 = vmatpush1.bf16.msra.mxu0 %v273
    %307 = vmatprep.subr.bf16.mxu0 %v271
    %308 = vmatpush1.bf16.msra.mxu0 %v270
    %309 = vmatprep.subr.bf16.mxu0 %v268
    %310 = vmatpush1.bf16.msra.mxu0 %v267
    %311 = vmatprep.subr.bf16.mxu0 %v265
    %312 = vmatpush1.bf16.msra.mxu0 %v264
    %313 = vmatprep.subr.bf16.mxu0 %v262
    %314 = vmatpush1.bf16.msra.mxu0 %v261
    %315 = vmatprep.subr.bf16.mxu0 %v259
    %316 = vmatpush1.bf16.msra.mxu0 %v258
    %317 = vmatprep.subr.bf16.mxu0 %v256
    %318 = vmatpush1.bf16.msra.mxu0 %v255
    %319 = vmatprep.subr.bf16.mxu0 0
    %320 = vmatpush2.bf16.msra.mxu0 0
    %321 = vmatprep.subr.bf16.mxu0 0
    %322 = vmatpush2.bf16.msra.mxu0 0
    %323 = vmatprep.subr.bf16.mxu0 0
    %324 = vmatpush2.bf16.msra.mxu0 0
    %325 = vmatprep.subr.bf16.mxu0 0
    %326 = vmatpush2.bf16.msra.mxu0 0
    %327 = vmatprep.subr.bf16.mxu0 0
    %328 = vmatpush2.bf16.msra.mxu0 0
    %329 = vmatprep.subr.bf16.mxu0 0
    %330 = vmatpush2.bf16.msra.mxu0 0
    %331 = vmatprep.subr.bf16.mxu0 0
    %332 = vmatpush2.bf16.msra.mxu0 0
    %333 = vmatprep.subr.bf16.mxu0 0
    %334 = vmatpush2.bf16.msra.mxu0 0
    %335 = vmatprep.mubr.bf16.mxu0 0
    %336 = vmatmul.mubr.bf16.gmra.mxu0 %v125
    %v337 = vpop.f32.mrf.mxu0
    %v338 = vadd.f32 %v163, %v337
    %v339 = vpop.f32.mrf.mxu0
    %v340 = vadd.f32 %v167, %v339
    %v341 = vpop.f32.mrf.mxu0
    %v342 = vpop.f32.mrf.mxu0
    %343 = vdwg.mxu0
    %344 = vmatprep.subr.bf16.mxu0 0
    %345 = vmatpush1.bf16.msra.mxu0 %v278
    %346 = vmatprep.subr.bf16.mxu0 0
    %347 = vmatpush1.bf16.msra.mxu0 %v275
    %348 = vmatprep.subr.bf16.mxu0 0
    %349 = vmatpush1.bf16.msra.mxu0 %v272
    %350 = vmatprep.subr.bf16.mxu0 0
    %351 = vmatpush1.bf16.msra.mxu0 %v269
    %352 = vmatprep.subr.bf16.mxu0 0
    %353 = vmatpush1.bf16.msra.mxu0 %v266
    %354 = vmatprep.subr.bf16.mxu0 0
    %355 = vmatpush1.bf16.msra.mxu0 %v263
    %356 = vmatprep.subr.bf16.mxu0 0
    %357 = vmatpush1.bf16.msra.mxu0 %v260
    %358 = vmatprep.subr.bf16.mxu0 0
    %359 = vmatpush1.bf16.msra.mxu0 %v257
    %360 = vmatprep.subr.bf16.mxu0 0
    %361 = vmatpush2.bf16.msra.mxu0 0
    %362 = vmatprep.subr.bf16.mxu0 0
    %363 = vmatpush2.bf16.msra.mxu0 0
    %364 = vmatprep.subr.bf16.mxu0 0
    %365 = vmatpush2.bf16.msra.mxu0 0
    %366 = vmatprep.subr.bf16.mxu0 0
    %367 = vmatpush2.bf16.msra.mxu0 0
    %368 = vmatprep.subr.bf16.mxu0 0
    %369 = vmatpush2.bf16.msra.mxu0 0
    %370 = vmatprep.subr.bf16.mxu0 0
    %371 = vmatpush2.bf16.msra.mxu0 0
    %372 = vmatprep.subr.bf16.mxu0 0
    %373 = vmatpush2.bf16.msra.mxu0 0
    %374 = vmatprep.subr.bf16.mxu0 0
    %375 = vmatpush2.bf16.msra.mxu0 0
    %376 = vmatprep.mubr.bf16.mxu0 0
    %377 = vmatmul.mubr.bf16.gmra.mxu0 %v125
    %v378 = vpop.f32.mrf.mxu0
    %v379 = vadd.f32 %v171, %v378
    %v380 = vpop.f32.mrf.mxu0
    %v381 = vpop.f32.mrf.mxu0
    %v382 = vpop.f32.mrf.mxu0
    %383 = vdwg.mxu0
    %v384 = vmul.f32 %v338, %v106
    %385 = vrot.lane.b32.xlu0 %v338, 127
    %v386 = vpop.permute.xlu0 %385
    %v387 = vmul.f32 %v386, %v108
    %v388 = vadd.f32 %v384, %v387
    %389 = vrot.lane.b32.xlu0 %v338, 1
    %v390 = vpop.permute.xlu0 %389
    %v391 = vmul.f32 %v390, %v109
    %v392 = vadd.f32 %v388, %v391
    %v393 = vmul.f32 %v340, %v106
    %394 = vrot.lane.b32.xlu0 %v340, 127
    %v395 = vpop.permute.xlu0 %394
    %v396 = vmul.f32 %v395, %v108
    %v397 = vadd.f32 %v393, %v396
    %398 = vrot.lane.b32.xlu0 %v340, 1
    %v399 = vpop.permute.xlu0 %398
    %v400 = vmul.f32 %v399, %v109
    %v401 = vadd.f32 %v397, %v400
    %v402 = vld [vmem:[#allocation2] sm:$0xf]
    %v403 = vld [vmem:[#allocation2 + $0x4] sm:$0xf]
    %v404 = vld [vmem:[#allocation2 + $0x8] sm:$0xf]
    %v405 = vld [vmem:[#allocation2 + $0xc] sm:$0xf]
    %v406 = vpack.c.bf16 %v392, %v392
    %v407 = vpack.c.bf16 %v401, %v401
    %v408 = vpack.c.bf16 %v379, %v379
    %vm409 = vcmask 64512
    %v411 = vsel %vm409, %v406, 0
    %v414 = vsel %vm409, %v407, 0
    %416 = vmatprep.subr.bf16.mxu0 0
    %417 = vmatpush1.bf16.xpose.msra.mxu0 0
    %418 = vmatprep.subr.bf16.mxu0 0
    %419 = vmatpush1.bf16.xpose.msra.mxu0 0
    %420 = vmatprep.subr.bf16.mxu0 0
    %421 = vmatpush1.bf16.xpose.msra.mxu0 0
    %422 = vmatprep.subr.bf16.mxu0 0
    %423 = vmatpush1.bf16.xpose.msra.mxu0 0
    %424 = vmatprep.subr.bf16.mxu0 0
    %425 = vmatpush1.bf16.xpose.msra.mxu0 0
    %426 = vmatprep.subr.bf16.mxu0 0
    %427 = vmatpush1.bf16.xpose.msra.mxu0 0
    %428 = vmatprep.subr.bf16.mxu0 0
    %429 = vmatpush1.bf16.xpose.msra.mxu0 0
    %430 = vmatprep.subr.bf16.mxu0 0
    %431 = vmatpush1.bf16.xpose.msra.mxu0 %v414
    %432 = vmatprep.subr.bf16.mxu0 0
    %433 = vmatpush2.bf16.xpose.msra.mxu0 0
    %434 = vmatprep.subr.bf16.mxu0 0
    %435 = vmatpush2.bf16.xpose.msra.mxu0 0
    %436 = vmatprep.subr.bf16.mxu0 0
    %437 = vmatpush2.bf16.xpose.msra.mxu0 0
    %438 = vmatprep.subr.bf16.mxu0 0
    %439 = vmatpush2.bf16.xpose.msra.mxu0 0
    %440 = vmatprep.subr.bf16.mxu0 0
    %441 = vmatpush2.bf16.xpose.msra.mxu0 0
    %442 = vmatprep.subr.bf16.mxu0 0
    %443 = vmatpush2.bf16.xpose.msra.mxu0 0
    %444 = vmatprep.subr.bf16.mxu0 0
    %445 = vmatpush2.bf16.xpose.msra.mxu0 0
    %446 = vmatprep.subr.bf16.mxu0 0
    %447 = vmatpush2.bf16.xpose.msra.mxu0 0
    %448 = vmatprep.mubr.bf16.mxu0 0
    %449 = vmatmul.mubr.bf16.gmra.mxu0 %v411
    %v450 = vpop.f32.mrf.mxu0
    %v451 = vadd.f32 0.0, %v450
    %v452 = vpop.f32.mrf.mxu0
    %v453 = vpop.f32.mrf.mxu0
    %v454 = vpop.f32.mrf.mxu0
    %455 = vdwg.mxu0
    %v456 = vmul.f32 %v451, 0.35355338
    %v457 = vsel %vm86, %v456, -1e+30
    %v458 = vsel %vm409, %v457, -inf
    %459 = vmax.xlane.f32.xlu0 %v458
    %v460 = vpop.xlane.xlu0 %459
    %v461 = vsub.f32 %v457, %v460
    %v462 = vmul.f32 %v461, 1.442695
    %v463 = vpow.pop %v462
    %v464 = vsel %vm409, %v463, 0.0
    %465 = vadd.xlane.f32.xlu0 %v464
    %v466 = vpop.xlane.xlu0 %465
    %v467 = vpack.c.bf16 %v463, %v463
    %v469 = vsel %vm409, %v467, 0
    %vm471 = vcmask 1043456
    %v473 = vsel %vm471, %v408, 0
    %475 = vmatprep.subr.bf16.mxu0 0
    %476 = vmatpush1.bf16.msra.mxu0 0
    %477 = vmatprep.subr.bf16.mxu0 0
    %478 = vmatpush1.bf16.msra.mxu0 0
    %479 = vmatprep.subr.bf16.mxu0 0
    %480 = vmatpush1.bf16.msra.mxu0 0
    %481 = vmatprep.subr.bf16.mxu0 0
    %482 = vmatpush1.bf16.msra.mxu0 0
    %483 = vmatprep.subr.bf16.mxu0 0
    %484 = vmatpush1.bf16.msra.mxu0 0
    %485 = vmatprep.subr.bf16.mxu0 0
    %486 = vmatpush1.bf16.msra.mxu0 0
    %487 = vmatprep.subr.bf16.mxu0 0
    %488 = vmatpush1.bf16.msra.mxu0 0
    %489 = vmatprep.subr.bf16.mxu0 0
    %490 = vmatpush1.bf16.msra.mxu0 %v473
    %491 = vmatprep.subr.bf16.mxu0 0
    %492 = vmatpush2.bf16.msra.mxu0 0
    %493 = vmatprep.subr.bf16.mxu0 0
    %494 = vmatpush2.bf16.msra.mxu0 0
    %495 = vmatprep.subr.bf16.mxu0 0
    %496 = vmatpush2.bf16.msra.mxu0 0
    %497 = vmatprep.subr.bf16.mxu0 0
    %498 = vmatpush2.bf16.msra.mxu0 0
    %499 = vmatprep.subr.bf16.mxu0 0
    %500 = vmatpush2.bf16.msra.mxu0 0
    %501 = vmatprep.subr.bf16.mxu0 0
    %502 = vmatpush2.bf16.msra.mxu0 0
    %503 = vmatprep.subr.bf16.mxu0 0
    %504 = vmatpush2.bf16.msra.mxu0 0
    %505 = vmatprep.subr.bf16.mxu0 0
    %506 = vmatpush2.bf16.msra.mxu0 0
    %507 = vmatprep.mubr.bf16.mxu0 0
    %508 = vmatmul.mubr.bf16.gmra.mxu0 %v469
    %v509 = vpop.f32.mrf.mxu0
    %v510 = vadd.f32 0.0, %v509
    %v511 = vpop.f32.mrf.mxu0
    %v512 = vpop.f32.mrf.mxu0
    %v513 = vpop.f32.mrf.mxu0
    %514 = vdwg.mxu0
    %v515 = vrcp.pop %v466
    %v516 = vmul.f32 %v510, %v515
    %v517 = vpack.c.bf16 %v516, %v516
    %519 = vrot.lane.b32.xlu0 %v406, 120
    %v520 = vpop.permute.xlu0 %519
    %v522 = vsel %vm409, %v520, 0
    %524 = vmatprep.subr.bf16.mxu0 0
    %525 = vmatpush1.bf16.xpose.msra.mxu0 0
    %526 = vmatprep.subr.bf16.mxu0 0
    %527 = vmatpush1.bf16.xpose.msra.mxu0 0
    %528 = vmatprep.subr.bf16.mxu0 0
    %529 = vmatpush1.bf16.xpose.msra.mxu0 0
    %530 = vmatprep.subr.bf16.mxu0 0
    %531 = vmatpush1.bf16.xpose.msra.mxu0 0
    %532 = vmatprep.subr.bf16.mxu0 0
    %533 = vmatpush1.bf16.xpose.msra.mxu0 0
    %534 = vmatprep.subr.bf16.mxu0 0
    %535 = vmatpush1.bf16.xpose.msra.mxu0 0
    %536 = vmatprep.subr.bf16.mxu0 0
    %537 = vmatpush1.bf16.xpose.msra.mxu0 0
    %538 = vmatprep.subr.bf16.mxu0 0
    %539 = vmatpush1.bf16.xpose.msra.mxu0 %v414
    %540 = vmatprep.subr.bf16.mxu0 0
    %541 = vmatpush2.bf16.xpose.msra.mxu0 0
    %542 = vmatprep.subr.bf16.mxu0 0
    %543 = vmatpush2.bf16.xpose.msra.mxu0 0
    %544 = vmatprep.subr.bf16.mxu0 0
    %545 = vmatpush2.bf16.xpose.msra.mxu0 0
    %546 = vmatprep.subr.bf16.mxu0 0
    %547 = vmatpush2.bf16.xpose.msra.mxu0 0
    %548 = vmatprep.subr.bf16.mxu0 0
    %549 = vmatpush2.bf16.xpose.msra.mxu0 0
    %550 = vmatprep.subr.bf16.mxu0 0
    %551 = vmatpush2.bf16.xpose.msra.mxu0 0
    %552 = vmatprep.subr.bf16.mxu0 0
    %553 = vmatpush2.bf16.xpose.msra.mxu0 0
    %554 = vmatprep.subr.bf16.mxu0 0
    %555 = vmatpush2.bf16.xpose.msra.mxu0 0
    %556 = vmatprep.mubr.bf16.mxu0 0
    %557 = vmatmul.mubr.bf16.gmra.mxu0 %v522
    %v558 = vpop.f32.mrf.mxu0
    %v559 = vadd.f32 0.0, %v558
    %v560 = vpop.f32.mrf.mxu0
    %v561 = vpop.f32.mrf.mxu0
    %v562 = vpop.f32.mrf.mxu0
    %563 = vdwg.mxu0
    %v564 = vmul.f32 %v559, 0.35355338
    %v565 = vsel %vm86, %v564, -1e+30
    %v566 = vsel %vm409, %v565, -inf
    %567 = vmax.xlane.f32.xlu0 %v566
    %v568 = vpop.xlane.xlu0 %567
    %v569 = vsub.f32 %v565, %v568
    %v570 = vmul.f32 %v569, 1.442695
    %v571 = vpow.pop %v570
    %v572 = vsel %vm409, %v571, 0.0
    %573 = vadd.xlane.f32.xlu0 %v572
    %v574 = vpop.xlane.xlu0 %573
    %v575 = vpack.c.bf16 %v571, %v571
    %v577 = vsel %vm409, %v575, 0
    %579 = vmatprep.subr.bf16.mxu0 0
    %580 = vmatpush1.bf16.msra.mxu0 0
    %581 = vmatprep.subr.bf16.mxu0 0
    %582 = vmatpush1.bf16.msra.mxu0 0
    %583 = vmatprep.subr.bf16.mxu0 0
    %584 = vmatpush1.bf16.msra.mxu0 0
    %585 = vmatprep.subr.bf16.mxu0 0
    %586 = vmatpush1.bf16.msra.mxu0 0
    %587 = vmatprep.subr.bf16.mxu0 0
    %588 = vmatpush1.bf16.msra.mxu0 0
    %589 = vmatprep.subr.bf16.mxu0 0
    %590 = vmatpush1.bf16.msra.mxu0 0
    %591 = vmatprep.subr.bf16.mxu0 0
    %592 = vmatpush1.bf16.msra.mxu0 0
    %593 = vmatprep.subr.bf16.mxu0 0
    %594 = vmatpush1.bf16.msra.mxu0 %v473
    %595 = vmatprep.subr.bf16.mxu0 0
    %596 = vmatpush2.bf16.msra.mxu0 0
    %597 = vmatprep.subr.bf16.mxu0 0
    %598 = vmatpush2.bf16.msra.mxu0 0
    %599 = vmatprep.subr.bf16.mxu0 0
    %600 = vmatpush2.bf16.msra.mxu0 0
    %601 = vmatprep.subr.bf16.mxu0 0
    %602 = vmatpush2.bf16.msra.mxu0 0
    %603 = vmatprep.subr.bf16.mxu0 0
    %604 = vmatpush2.bf16.msra.mxu0 0
    %605 = vmatprep.subr.bf16.mxu0 0
    %606 = vmatpush2.bf16.msra.mxu0 0
    %607 = vmatprep.subr.bf16.mxu0 0
    %608 = vmatpush2.bf16.msra.mxu0 0
    %609 = vmatprep.subr.bf16.mxu0 0
    %610 = vmatpush2.bf16.msra.mxu0 0
    %611 = vmatprep.mubr.bf16.mxu0 0
    %612 = vmatmul.mubr.bf16.gmra.mxu0 %v577
    %v613 = vpop.f32.mrf.mxu0
    %v614 = vadd.f32 0.0, %v613
    %v615 = vpop.f32.mrf.mxu0
    %v616 = vpop.f32.mrf.mxu0
    %v617 = vpop.f32.mrf.mxu0
    %618 = vdwg.mxu0
    %v619 = vrcp.pop %v574
    %v620 = vmul.f32 %v614, %v619
    %v621 = vpack.c.bf16 %v620, %v620
    %v623 = vsel %vm409, %v621, 0
    %v626 = vsel %vm471, %v403, 0
    %628 = vmatprep.subr.bf16.mxu0 0
    %629 = vmatpush1.bf16.msra.mxu0 0
    %630 = vmatprep.subr.bf16.mxu0 0
    %631 = vmatpush1.bf16.msra.mxu0 0
    %632 = vmatprep.subr.bf16.mxu0 0
    %633 = vmatpush1.bf16.msra.mxu0 0
    %634 = vmatprep.subr.bf16.mxu0 0
    %635 = vmatpush1.bf16.msra.mxu0 0
    %636 = vmatprep.subr.bf16.mxu0 0
    %637 = vmatpush1.bf16.msra.mxu0 0
    %638 = vmatprep.subr.bf16.mxu0 0
    %639 = vmatpush1.bf16.msra.mxu0 0
    %640 = vmatprep.subr.bf16.mxu0 0
    %641 = vmatpush1.bf16.msra.mxu0 0
    %642 = vmatprep.subr.bf16.mxu0 0
    %643 = vmatpush1.bf16.msra.mxu0 %v626
    %644 = vmatprep.subr.bf16.mxu0 0
    %645 = vmatpush2.bf16.msra.mxu0 0
    %646 = vmatprep.subr.bf16.mxu0 0
    %647 = vmatpush2.bf16.msra.mxu0 0
    %648 = vmatprep.subr.bf16.mxu0 0
    %649 = vmatpush2.bf16.msra.mxu0 0
    %650 = vmatprep.subr.bf16.mxu0 0
    %651 = vmatpush2.bf16.msra.mxu0 0
    %652 = vmatprep.subr.bf16.mxu0 0
    %653 = vmatpush2.bf16.msra.mxu0 0
    %654 = vmatprep.subr.bf16.mxu0 0
    %655 = vmatpush2.bf16.msra.mxu0 0
    %656 = vmatprep.subr.bf16.mxu0 0
    %657 = vmatpush2.bf16.msra.mxu0 0
    %658 = vmatprep.subr.bf16.mxu0 0
    %659 = vmatpush2.bf16.msra.mxu0 0
    %660 = vmatprep.mubr.bf16.mxu0 0
    %661 = vmatmul.mubr.bf16.gmra.mxu0 %v623
    %v662 = vpop.f32.mrf.mxu0
    %v663 = vadd.f32 0.0, %v662
    %v664 = vpop.f32.mrf.mxu0
    %v665 = vpop.f32.mrf.mxu0
    %v666 = vpop.f32.mrf.mxu0
    %667 = vdwg.mxu0
    %v669 = vsel %vm409, %v517, 0
    %v672 = vsel %vm471, %v402, 0
    %674 = vmatprep.subr.bf16.mxu0 0
    %675 = vmatpush1.bf16.msra.mxu0 0
    %676 = vmatprep.subr.bf16.mxu0 0
    %677 = vmatpush1.bf16.msra.mxu0 0
    %678 = vmatprep.subr.bf16.mxu0 0
    %679 = vmatpush1.bf16.msra.mxu0 0
    %680 = vmatprep.subr.bf16.mxu0 0
    %681 = vmatpush1.bf16.msra.mxu0 0
    %682 = vmatprep.subr.bf16.mxu0 0
    %683 = vmatpush1.bf16.msra.mxu0 0
    %684 = vmatprep.subr.bf16.mxu0 0
    %685 = vmatpush1.bf16.msra.mxu0 0
    %686 = vmatprep.subr.bf16.mxu0 0
    %687 = vmatpush1.bf16.msra.mxu0 0
    %688 = vmatprep.subr.bf16.mxu0 0
    %689 = vmatpush1.bf16.msra.mxu0 %v672
    %690 = vmatprep.subr.bf16.mxu0 0
    %691 = vmatpush2.bf16.msra.mxu0 0
    %692 = vmatprep.subr.bf16.mxu0 0
    %693 = vmatpush2.bf16.msra.mxu0 0
    %694 = vmatprep.subr.bf16.mxu0 0
    %695 = vmatpush2.bf16.msra.mxu0 0
    %696 = vmatprep.subr.bf16.mxu0 0
    %697 = vmatpush2.bf16.msra.mxu0 0
    %698 = vmatprep.subr.bf16.mxu0 0
    %699 = vmatpush2.bf16.msra.mxu0 0
    %700 = vmatprep.subr.bf16.mxu0 0
    %701 = vmatpush2.bf16.msra.mxu0 0
    %702 = vmatprep.subr.bf16.mxu0 0
    %703 = vmatpush2.bf16.msra.mxu0 0
    %704 = vmatprep.subr.bf16.mxu0 0
    %705 = vmatpush2.bf16.msra.mxu0 0
    %706 = vmatprep.mubr.bf16.mxu0 0
    %707 = vmatmul.mubr.bf16.gmra.mxu0 %v669
    %v708 = vpop.f32.mrf.mxu0
    %v709 = vadd.f32 %v663, %v708
    %v710 = vpop.f32.mrf.mxu0
    %v711 = vpop.f32.mrf.mxu0
    %v712 = vpop.f32.mrf.mxu0
    %713 = vdwg.mxu0
    %714 = vrot.lane.b32.xlu0 %v406, 112
    %v715 = vpop.permute.xlu0 %714
    %717 = vrot.lane.b32.xlu0 %v407, 120
    %v718 = vpop.permute.xlu0 %717
    %v720 = vsel %vm409, %v715, 0
    %v723 = vsel %vm409, %v718, 0
    %725 = vmatprep.subr.bf16.mxu0 0
    %726 = vmatpush1.bf16.xpose.msra.mxu0 0
    %727 = vmatprep.subr.bf16.mxu0 0
    %728 = vmatpush1.bf16.xpose.msra.mxu0 0
    %729 = vmatprep.subr.bf16.mxu0 0
    %730 = vmatpush1.bf16.xpose.msra.mxu0 0
    %731 = vmatprep.subr.bf16.mxu0 0
    %732 = vmatpush1.bf16.xpose.msra.mxu0 0
    %733 = vmatprep.subr.bf16.mxu0 0
    %734 = vmatpush1.bf16.xpose.msra.mxu0 0
    %735 = vmatprep.subr.bf16.mxu0 0
    %736 = vmatpush1.bf16.xpose.msra.mxu0 0
    %737 = vmatprep.subr.bf16.mxu0 0
    %738 = vmatpush1.bf16.xpose.msra.mxu0 0
    %739 = vmatprep.subr.bf16.mxu0 0
    %740 = vmatpush1.bf16.xpose.msra.mxu0 %v723
    %741 = vmatprep.subr.bf16.mxu0 0
    %742 = vmatpush2.bf16.xpose.msra.mxu0 0
    %743 = vmatprep.subr.bf16.mxu0 0
    %744 = vmatpush2.bf16.xpose.msra.mxu0 0
    %745 = vmatprep.subr.bf16.mxu0 0
    %746 = vmatpush2.bf16.xpose.msra.mxu0 0
    %747 = vmatprep.subr.bf16.mxu0 0
    %748 = vmatpush2.bf16.xpose.msra.mxu0 0
    %749 = vmatprep.subr.bf16.mxu0 0
    %750 = vmatpush2.bf16.xpose.msra.mxu0 0
    %751 = vmatprep.subr.bf16.mxu0 0
    %752 = vmatpush2.bf16.xpose.msra.mxu0 0
    %753 = vmatprep.subr.bf16.mxu0 0
    %754 = vmatpush2.bf16.xpose.msra.mxu0 0
    %755 = vmatprep.subr.bf16.mxu0 0
    %756 = vmatpush2.bf16.xpose.msra.mxu0 0
    %757 = vmatprep.mubr.bf16.mxu0 0
    %758 = vmatmul.mubr.bf16.gmra.mxu0 %v720
    %v759 = vpop.f32.mrf.mxu0
    %v760 = vadd.f32 0.0, %v759
    %v761 = vpop.f32.mrf.mxu0
    %v762 = vpop.f32.mrf.mxu0
    %v763 = vpop.f32.mrf.mxu0
    %764 = vdwg.mxu0
    %v765 = vmul.f32 %v760, 0.35355338
    %v766 = vsel %vm86, %v765, -1e+30
    %v767 = vsel %vm409, %v766, -inf
    %768 = vmax.xlane.f32.xlu0 %v767
    %v769 = vpop.xlane.xlu0 %768
    %v770 = vsub.f32 %v766, %v769
    %v771 = vmul.f32 %v770, 1.442695
    %v772 = vpow.pop %v771
    %v773 = vsel %vm409, %v772, 0.0
    %774 = vadd.xlane.f32.xlu0 %v773
    %v775 = vpop.xlane.xlu0 %774
    %v776 = vpack.c.bf16 %v772, %v772
    %778 = vrot.lane.b32.xlu0 %v408, 120
    %v779 = vpop.permute.xlu0 %778
    %v781 = vsel %vm409, %v776, 0
    %v784 = vsel %vm471, %v779, 0
    %786 = vmatprep.subr.bf16.mxu0 0
    %787 = vmatpush1.bf16.msra.mxu0 0
    %788 = vmatprep.subr.bf16.mxu0 0
    %789 = vmatpush1.bf16.msra.mxu0 0
    %790 = vmatprep.subr.bf16.mxu0 0
    %791 = vmatpush1.bf16.msra.mxu0 0
    %792 = vmatprep.subr.bf16.mxu0 0
    %793 = vmatpush1.bf16.msra.mxu0 0
    %794 = vmatprep.subr.bf16.mxu0 0
    %795 = vmatpush1.bf16.msra.mxu0 0
    %796 = vmatprep.subr.bf16.mxu0 0
    %797 = vmatpush1.bf16.msra.mxu0 0
    %798 = vmatprep.subr.bf16.mxu0 0
    %799 = vmatpush1.bf16.msra.mxu0 0
    %800 = vmatprep.subr.bf16.mxu0 0
    %801 = vmatpush1.bf16.msra.mxu0 %v784
    %802 = vmatprep.subr.bf16.mxu0 0
    %803 = vmatpush2.bf16.msra.mxu0 0
    %804 = vmatprep.subr.bf16.mxu0 0
    %805 = vmatpush2.bf16.msra.mxu0 0
    %806 = vmatprep.subr.bf16.mxu0 0
    %807 = vmatpush2.bf16.msra.mxu0 0
    %808 = vmatprep.subr.bf16.mxu0 0
    %809 = vmatpush2.bf16.msra.mxu0 0
    %810 = vmatprep.subr.bf16.mxu0 0
    %811 = vmatpush2.bf16.msra.mxu0 0
    %812 = vmatprep.subr.bf16.mxu0 0
    %813 = vmatpush2.bf16.msra.mxu0 0
    %814 = vmatprep.subr.bf16.mxu0 0
    %815 = vmatpush2.bf16.msra.mxu0 0
    %816 = vmatprep.subr.bf16.mxu0 0
    %817 = vmatpush2.bf16.msra.mxu0 0
    %818 = vmatprep.mubr.bf16.mxu0 0
    %819 = vmatmul.mubr.bf16.gmra.mxu0 %v781
    %v820 = vpop.f32.mrf.mxu0
    %v821 = vadd.f32 0.0, %v820
    %v822 = vpop.f32.mrf.mxu0
    %v823 = vpop.f32.mrf.mxu0
    %v824 = vpop.f32.mrf.mxu0
    %825 = vdwg.mxu0
    %v826 = vrcp.pop %v775
    %v827 = vmul.f32 %v821, %v826
    %v828 = vpack.c.bf16 %v827, %v827
    %v830 = vsel %vm409, %v828, 0
    %v833 = vsel %vm471, %v404, 0
    %835 = vmatprep.subr.bf16.mxu0 0
    %836 = vmatpush1.bf16.msra.mxu0 0
    %837 = vmatprep.subr.bf16.mxu0 0
    %838 = vmatpush1.bf16.msra.mxu0 0
    %839 = vmatprep.subr.bf16.mxu0 0
    %840 = vmatpush1.bf16.msra.mxu0 0
    %841 = vmatprep.subr.bf16.mxu0 0
    %842 = vmatpush1.bf16.msra.mxu0 0
    %843 = vmatprep.subr.bf16.mxu0 0
    %844 = vmatpush1.bf16.msra.mxu0 0
    %845 = vmatprep.subr.bf16.mxu0 0
    %846 = vmatpush1.bf16.msra.mxu0 0
    %847 = vmatprep.subr.bf16.mxu0 0
    %848 = vmatpush1.bf16.msra.mxu0 0
    %849 = vmatprep.subr.bf16.mxu0 0
    %850 = vmatpush1.bf16.msra.mxu0 %v833
    %851 = vmatprep.subr.bf16.mxu0 0
    %852 = vmatpush2.bf16.msra.mxu0 0
    %853 = vmatprep.subr.bf16.mxu0 0
    %854 = vmatpush2.bf16.msra.mxu0 0
    %855 = vmatprep.subr.bf16.mxu0 0
    %856 = vmatpush2.bf16.msra.mxu0 0
    %857 = vmatprep.subr.bf16.mxu0 0
    %858 = vmatpush2.bf16.msra.mxu0 0
    %859 = vmatprep.subr.bf16.mxu0 0
    %860 = vmatpush2.bf16.msra.mxu0 0
    %861 = vmatprep.subr.bf16.mxu0 0
    %862 = vmatpush2.bf16.msra.mxu0 0
    %863 = vmatprep.subr.bf16.mxu0 0
    %864 = vmatpush2.bf16.msra.mxu0 0
    %865 = vmatprep.subr.bf16.mxu0 0
    %866 = vmatpush2.bf16.msra.mxu0 0
    %867 = vmatprep.mubr.bf16.mxu0 0
    %868 = vmatmul.mubr.bf16.gmra.mxu0 %v830
    %v869 = vpop.f32.mrf.mxu0
    %v870 = vadd.f32 0.0, %v869
    %v871 = vpop.f32.mrf.mxu0
    %v872 = vpop.f32.mrf.mxu0
    %v873 = vpop.f32.mrf.mxu0
    %874 = vdwg.mxu0
    %v875 = vadd.f32 %v709, %v870
    %876 = vrot.lane.b32.xlu0 %v406, 104
    %v877 = vpop.permute.xlu0 %876
    %v879 = vsel %vm409, %v877, 0
    %881 = vmatprep.subr.bf16.mxu0 0
    %882 = vmatpush1.bf16.xpose.msra.mxu0 0
    %883 = vmatprep.subr.bf16.mxu0 0
    %884 = vmatpush1.bf16.xpose.msra.mxu0 0
    %885 = vmatprep.subr.bf16.mxu0 0
    %886 = vmatpush1.bf16.xpose.msra.mxu0 0
    %887 = vmatprep.subr.bf16.mxu0 0
    %888 = vmatpush1.bf16.xpose.msra.mxu0 0
    %889 = vmatprep.subr.bf16.mxu0 0
    %890 = vmatpush1.bf16.xpose.msra.mxu0 0
    %891 = vmatprep.subr.bf16.mxu0 0
    %892 = vmatpush1.bf16.xpose.msra.mxu0 0
    %893 = vmatprep.subr.bf16.mxu0 0
    %894 = vmatpush1.bf16.xpose.msra.mxu0 0
    %895 = vmatprep.subr.bf16.mxu0 0
    %896 = vmatpush1.bf16.xpose.msra.mxu0 %v723
    %897 = vmatprep.subr.bf16.mxu0 0
    %898 = vmatpush2.bf16.xpose.msra.mxu0 0
    %899 = vmatprep.subr.bf16.mxu0 0
    %900 = vmatpush2.bf16.xpose.msra.mxu0 0
    %901 = vmatprep.subr.bf16.mxu0 0
    %902 = vmatpush2.bf16.xpose.msra.mxu0 0
    %903 = vmatprep.subr.bf16.mxu0 0
    %904 = vmatpush2.bf16.xpose.msra.mxu0 0
    %905 = vmatprep.subr.bf16.mxu0 0
    %906 = vmatpush2.bf16.xpose.msra.mxu0 0
    %907 = vmatprep.subr.bf16.mxu0 0
    %908 = vmatpush2.bf16.xpose.msra.mxu0 0
    %909 = vmatprep.subr.bf16.mxu0 0
    %910 = vmatpush2.bf16.xpose.msra.mxu0 0
    %911 = vmatprep.subr.bf16.mxu0 0
    %912 = vmatpush2.bf16.xpose.msra.mxu0 0
    %913 = vmatprep.mubr.bf16.mxu0 0
    %914 = vmatmul.mubr.bf16.gmra.mxu0 %v879
    %v915 = vpop.f32.mrf.mxu0
    %v916 = vadd.f32 0.0, %v915
    %v917 = vpop.f32.mrf.mxu0
    %v918 = vpop.f32.mrf.mxu0
    %v919 = vpop.f32.mrf.mxu0
    %920 = vdwg.mxu0
    %v921 = vmul.f32 %v916, 0.35355338
    %v922 = vsel %vm86, %v921, -1e+30
    %v923 = vsel %vm409, %v922, -inf
    %924 = vmax.xlane.f32.xlu0 %v923
    %v925 = vpop.xlane.xlu0 %924
    %v926 = vsub.f32 %v922, %v925
    %v927 = vmul.f32 %v926, 1.442695
    %v928 = vpow.pop %v927
    %v929 = vsel %vm409, %v928, 0.0
    %930 = vadd.xlane.f32.xlu0 %v929
    %v931 = vpop.xlane.xlu0 %930
    %v932 = vpack.c.bf16 %v928, %v928
    %v934 = vsel %vm409, %v932, 0
    %936 = vmatprep.subr.bf16.mxu0 0
    %937 = vmatpush1.bf16.msra.mxu0 0
    %938 = vmatprep.subr.bf16.mxu0 0
    %939 = vmatpush1.bf16.msra.mxu0 0
    %940 = vmatprep.subr.bf16.mxu0 0
    %941 = vmatpush1.bf16.msra.mxu0 0
    %942 = vmatprep.subr.bf16.mxu0 0
    %943 = vmatpush1.bf16.msra.mxu0 0
    %944 = vmatprep.subr.bf16.mxu0 0
    %945 = vmatpush1.bf16.msra.mxu0 0
    %946 = vmatprep.subr.bf16.mxu0 0
    %947 = vmatpush1.bf16.msra.mxu0 0
    %948 = vmatprep.subr.bf16.mxu0 0
    %949 = vmatpush1.bf16.msra.mxu0 0
    %950 = vmatprep.subr.bf16.mxu0 0
    %951 = vmatpush1.bf16.msra.mxu0 %v784
    %952 = vmatprep.subr.bf16.mxu0 0
    %953 = vmatpush2.bf16.msra.mxu0 0
    %954 = vmatprep.subr.bf16.mxu0 0
    %955 = vmatpush2.bf16.msra.mxu0 0
    %956 = vmatprep.subr.bf16.mxu0 0
    %957 = vmatpush2.bf16.msra.mxu0 0
    %958 = vmatprep.subr.bf16.mxu0 0
    %959 = vmatpush2.bf16.msra.mxu0 0
    %960 = vmatprep.subr.bf16.mxu0 0
    %961 = vmatpush2.bf16.msra.mxu0 0
    %962 = vmatprep.subr.bf16.mxu0 0
    %963 = vmatpush2.bf16.msra.mxu0 0
    %964 = vmatprep.subr.bf16.mxu0 0
    %965 = vmatpush2.bf16.msra.mxu0 0
    %966 = vmatprep.subr.bf16.mxu0 0
    %967 = vmatpush2.bf16.msra.mxu0 0
    %968 = vmatprep.mubr.bf16.mxu0 0
    %969 = vmatmul.mubr.bf16.gmra.mxu0 %v934
    %v970 = vpop.f32.mrf.mxu0
    %v971 = vadd.f32 0.0, %v970
    %v972 = vpop.f32.mrf.mxu0
    %v973 = vpop.f32.mrf.mxu0
    %v974 = vpop.f32.mrf.mxu0
    %975 = vdwg.mxu0
    %v976 = vrcp.pop %v931
    %v977 = vmul.f32 %v971, %v976
    %v978 = vpack.c.bf16 %v977, %v977
    %v980 = vsel %vm409, %v978, 0
    %v983 = vsel %vm471, %v405, 0
    %985 = vmatprep.subr.bf16.mxu0 0
    %986 = vmatpush1.bf16.msra.mxu0 0
    %987 = vmatprep.subr.bf16.mxu0 0
    %988 = vmatpush1.bf16.msra.mxu0 0
    %989 = vmatprep.subr.bf16.mxu0 0
    %990 = vmatpush1.bf16.msra.mxu0 0
    %991 = vmatprep.subr.bf16.mxu0 0
    %992 = vmatpush1.bf16.msra.mxu0 0
    %993 = vmatprep.subr.bf16.mxu0 0
    %994 = vmatpush1.bf16.msra.mxu0 0
    %995 = vmatprep.subr.bf16.mxu0 0
    %996 = vmatpush1.bf16.msra.mxu0 0
    %997 = vmatprep.subr.bf16.mxu0 0
    %998 = vmatpush1.bf16.msra.mxu0 0
    %999 = vmatprep.subr.bf16.mxu0 0
    %1000 = vmatpush1.bf16.msra.mxu0 %v983
    %1001 = vmatprep.subr.bf16.mxu0 0
    %1002 = vmatpush2.bf16.msra.mxu0 0
    %1003 = vmatprep.subr.bf16.mxu0 0
    %1004 = vmatpush2.bf16.msra.mxu0 0
    %1005 = vmatprep.subr.bf16.mxu0 0
    %1006 = vmatpush2.bf16.msra.mxu0 0
    %1007 = vmatprep.subr.bf16.mxu0 0
    %1008 = vmatpush2.bf16.msra.mxu0 0
    %1009 = vmatprep.subr.bf16.mxu0 0
    %1010 = vmatpush2.bf16.msra.mxu0 0
    %1011 = vmatprep.subr.bf16.mxu0 0
    %1012 = vmatpush2.bf16.msra.mxu0 0
    %1013 = vmatprep.subr.bf16.mxu0 0
    %1014 = vmatpush2.bf16.msra.mxu0 0
    %1015 = vmatprep.subr.bf16.mxu0 0
    %1016 = vmatpush2.bf16.msra.mxu0 0
    %1017 = vmatprep.mubr.bf16.mxu0 0
    %1018 = vmatmul.mubr.bf16.gmra.mxu0 %v980
    %v1019 = vpop.f32.mrf.mxu0
    %v1020 = vadd.f32 0.0, %v1019
    %v1021 = vpop.f32.mrf.mxu0
    %v1022 = vpop.f32.mrf.mxu0
    %v1023 = vpop.f32.mrf.mxu0
    %1024 = vdwg.mxu0
    %v1025 = vadd.f32 %v875, %v1020
    %v1026 = vadd.f32 %v81, %v1025
    %v1027 = vld [vmem:[%s7] sm:$0x1]
    %v1028 = vmul.f32 %v1026, %v1026
    %1029 = vadd.xlane.f32.xlu0 %v1028
    %v1030 = vpop.xlane.xlu0 %1029
    %v1031 = vmul.f32 %v1030, 0.03125
    %v1032 = vadd.f32 %v1031, 1e-05
    %v1033 = vrsqrt.pop %v1032
    %v1034 = vmul.f32 %v1026, %v1033
    %v1036 = vlaneseq
    %v1037 = vshrl.u32 %v1036, 7
    %v1038 = vsub.s32 0, %v1037
    %v1039 = vrot.slane %v1027, %v1038
    %v1041 = vmul.f32 %v1034, %v1039
    %v1042 = vpack.c.bf16 %v1041, %v1041
    %v1043 = vld [vmem:[#allocation5] sm:$0xff]
    %v1044 = vld [vmem:[#allocation5 + $0x8] sm:$0xff]
    %v1045 = vld [vmem:[#allocation5 + $0x10] sm:$0xff]
    %v1046 = vld [vmem:[#allocation5 + $0x18] sm:$0xff]
    %v1047 = vld [vmem:[#allocation5 + $0x20] sm:$0xff]
    %v1048 = vld [vmem:[#allocation5 + $0x28] sm:$0xff]
    %v1049 = vld [vmem:[#allocation5 + $0x30] sm:$0xff]
    %v1050 = vld [vmem:[#allocation5 + $0x38] sm:$0xff]
    %v1051 = vld [vmem:[#allocation5 + $0x40] sm:$0xff]
    %v1052 = vld [vmem:[#allocation5 + $0x48] sm:$0xff]
    %v1053 = vld [vmem:[#allocation5 + $0x50] sm:$0xff]
    %v1054 = vld [vmem:[#allocation5 + $0x58] sm:$0xff]
    %v1055 = vld [vmem:[#allocation5 + $0x60] sm:$0xff]
    %v1056 = vld [vmem:[#allocation5 + $0x68] sm:$0xff]
    %v1057 = vld [vmem:[#allocation5 + $0x70] sm:$0xff]
    %v1058 = vld [vmem:[#allocation5 + $0x78] sm:$0xff]
    %v1075 = vunpack.c.l.b16 %v1043
    %v1076 = vunpack.c.h.b16 %v1043
    %v1077 = vunpack.c.l.b16 %v1044
    %v1078 = vunpack.c.h.b16 %v1044
    %v1079 = vunpack.c.l.b16 %v1045
    %v1080 = vunpack.c.h.b16 %v1045
    %v1081 = vunpack.c.l.b16 %v1046
    %v1082 = vunpack.c.h.b16 %v1046
    %v1083 = vunpack.c.l.b16 %v1047
    %v1084 = vunpack.c.h.b16 %v1047
    %v1085 = vunpack.c.l.b16 %v1048
    %v1086 = vunpack.c.h.b16 %v1048
    %v1087 = vunpack.c.l.b16 %v1049
    %v1088 = vunpack.c.h.b16 %v1049
    %v1089 = vunpack.c.l.b16 %v1050
    %v1090 = vunpack.c.h.b16 %v1050
    %v1091 = vunpack.c.l.b16 %v1051
    %v1092 = vunpack.c.h.b16 %v1051
    %v1093 = vunpack.c.l.b16 %v1052
    %v1094 = vunpack.c.h.b16 %v1052
    %v1095 = vunpack.c.l.b16 %v1053
    %v1096 = vunpack.c.h.b16 %v1053
    %v1097 = vunpack.c.l.b16 %v1054
    %v1098 = vunpack.c.h.b16 %v1054
    %v1099 = vunpack.c.l.b16 %v1055
    %v1100 = vunpack.c.h.b16 %v1055
    %v1101 = vunpack.c.l.b16 %v1056
    %v1102 = vunpack.c.h.b16 %v1056
    %v1103 = vunpack.c.l.b16 %v1057
    %v1104 = vunpack.c.h.b16 %v1057
    %v1105 = vunpack.c.l.b16 %v1058
    %v1106 = vunpack.c.h.b16 %v1058
    %v1107 = vpack.c.b16 %v1077, %v1075
    %v1108 = vpack.c.b16 %v1078, %v1076
    %v1109 = vpack.c.b16 %v1081, %v1079
    %v1110 = vpack.c.b16 %v1082, %v1080
    %v1111 = vpack.c.b16 %v1085, %v1083
    %v1112 = vpack.c.b16 %v1086, %v1084
    %v1113 = vpack.c.b16 %v1089, %v1087
    %v1114 = vpack.c.b16 %v1090, %v1088
    %v1115 = vpack.c.b16 %v1093, %v1091
    %v1116 = vpack.c.b16 %v1094, %v1092
    %v1117 = vpack.c.b16 %v1097, %v1095
    %v1118 = vpack.c.b16 %v1098, %v1096
    %v1119 = vpack.c.b16 %v1101, %v1099
    %v1120 = vpack.c.b16 %v1102, %v1100
    %v1121 = vpack.c.b16 %v1105, %v1103
    %v1122 = vpack.c.b16 %v1106, %v1104
    %1139 = vmatprep.subr.bf16.mxu0 %v1122
    %1140 = vmatpush1.bf16.msra.mxu0 %v1121
    %1141 = vmatprep.subr.bf16.mxu0 %v1120
    %1142 = vmatpush1.bf16.msra.mxu0 %v1119
    %1143 = vmatprep.subr.bf16.mxu0 %v1118
    %1144 = vmatpush1.bf16.msra.mxu0 %v1117
    %1145 = vmatprep.subr.bf16.mxu0 %v1116
    %1146 = vmatpush1.bf16.msra.mxu0 %v1115
    %1147 = vmatprep.subr.bf16.mxu0 %v1114
    %1148 = vmatpush1.bf16.msra.mxu0 %v1113
    %1149 = vmatprep.subr.bf16.mxu0 %v1112
    %1150 = vmatpush1.bf16.msra.mxu0 %v1111
    %1151 = vmatprep.subr.bf16.mxu0 %v1110
    %1152 = vmatpush1.bf16.msra.mxu0 %v1109
    %1153 = vmatprep.subr.bf16.mxu0 %v1108
    %1154 = vmatpush1.bf16.msra.mxu0 %v1107
    %1155 = vmatprep.subr.bf16.mxu0 0
    %1156 = vmatpush2.bf16.msra.mxu0 0
    %1157 = vmatprep.subr.bf16.mxu0 0
    %1158 = vmatpush2.bf16.msra.mxu0 0
    %1159 = vmatprep.subr.bf16.mxu0 0
    %1160 = vmatpush2.bf16.msra.mxu0 0
    %1161 = vmatprep.subr.bf16.mxu0 0
    %1162 = vmatpush2.bf16.msra.mxu0 0
    %1163 = vmatprep.subr.bf16.mxu0 0
    %1164 = vmatpush2.bf16.msra.mxu0 0
    %1165 = vmatprep.subr.bf16.mxu0 0
    %1166 = vmatpush2.bf16.msra.mxu0 0
    %1167 = vmatprep.subr.bf16.mxu0 0
    %1168 = vmatpush2.bf16.msra.mxu0 0
    %1169 = vmatprep.subr.bf16.mxu0 0
    %1170 = vmatpush2.bf16.msra.mxu0 0
    %1171 = vmatprep.mubr.bf16.mxu0 0
    %1172 = vmatmul.mubr.bf16.gmra.mxu0 %v1042
    %v1173 = vpop.f32.mrf.mxu0
    %v1174 = vadd.f32 0.0, %v1173
    %v1175 = vpop.f32.mrf.mxu0
    %v1176 = vadd.f32 0.0, %v1175
    %v1177 = vpop.f32.mrf.mxu0
    %v1178 = vpop.f32.mrf.mxu0
    %1179 = vdwg.mxu0
    %v1180 = vxor.u32 %v1174, 2147483648
    %v1181 = vmul.f32 %v1180, 1.442695
    %v1182 = vpow.pop %v1181
    %v1183 = vadd.f32 %v1182, 1.0
    %v1184 = vrcp.pop %v1183
    %v1185 = vmul.f32 1.0, %v1184
    %v1186 = vmul.f32 %v1174, %v1185
    %v1187 = vmul.f32 %v1186, %v1176
    %v1188 = vpack.c.bf16 %v1187, %v1187
    %v1189 = vld [vmem:[#allocation7] sm:$0xf]
    %v1190 = vld [vmem:[#allocation7 + $0x4] sm:$0xf]
    %v1191 = vld [vmem:[#allocation7 + $0x8] sm:$0xf]
    %v1192 = vld [vmem:[#allocation7 + $0xc] sm:$0xf]
    %v1193 = vld [vmem:[#allocation7 + $0x10] sm:$0xf]
    %v1194 = vld [vmem:[#allocation7 + $0x14] sm:$0xf]
    %v1195 = vld [vmem:[#allocation7 + $0x18] sm:$0xf]
    %v1196 = vld [vmem:[#allocation7 + $0x1c] sm:$0xf]
    %v1197 = vld [vmem:[#allocation7 + $0x20] sm:$0xf]
    %v1198 = vld [vmem:[#allocation7 + $0x24] sm:$0xf]
    %v1199 = vld [vmem:[#allocation7 + $0x28] sm:$0xf]
    %v1200 = vld [vmem:[#allocation7 + $0x2c] sm:$0xf]
    %v1201 = vld [vmem:[#allocation7 + $0x30] sm:$0xf]
    %v1202 = vld [vmem:[#allocation7 + $0x34] sm:$0xf]
    %v1203 = vld [vmem:[#allocation7 + $0x38] sm:$0xf]
    %v1204 = vld [vmem:[#allocation7 + $0x3c] sm:$0xf]
    %v1221 = vunpack.c.l.b16 %v1189
    %v1222 = vunpack.c.l.b16 %v1190
    %v1223 = vunpack.c.l.b16 %v1191
    %v1224 = vunpack.c.l.b16 %v1192
    %v1225 = vunpack.c.l.b16 %v1193
    %v1226 = vunpack.c.l.b16 %v1194
    %v1227 = vunpack.c.l.b16 %v1195
    %v1228 = vunpack.c.l.b16 %v1196
    %v1229 = vunpack.c.l.b16 %v1197
    %v1230 = vunpack.c.l.b16 %v1198
    %v1231 = vunpack.c.l.b16 %v1199
    %v1232 = vunpack.c.l.b16 %v1200
    %v1233 = vunpack.c.l.b16 %v1201
    %v1234 = vunpack.c.l.b16 %v1202
    %v1235 = vunpack.c.l.b16 %v1203
    %v1236 = vunpack.c.l.b16 %v1204
    %v1237 = vpack.c.b16 %v1222, %v1221
    %v1238 = vpack.c.b16 %v1224, %v1223
    %v1239 = vpack.c.b16 %v1226, %v1225
    %v1240 = vpack.c.b16 %v1228, %v1227
    %v1241 = vpack.c.b16 %v1230, %v1229
    %v1242 = vpack.c.b16 %v1232, %v1231
    %v1243 = vpack.c.b16 %v1234, %v1233
    %v1244 = vpack.c.b16 %v1236, %v1235
    %1253 = vmatprep.subr.bf16.mxu0 0
    %1254 = vmatpush1.bf16.msra.mxu0 %v1244
    %1255 = vmatprep.subr.bf16.mxu0 0
    %1256 = vmatpush1.bf16.msra.mxu0 %v1243
    %1257 = vmatprep.subr.bf16.mxu0 0
    %1258 = vmatpush1.bf16.msra.mxu0 %v1242
    %1259 = vmatprep.subr.bf16.mxu0 0
    %1260 = vmatpush1.bf16.msra.mxu0 %v1241
    %1261 = vmatprep.subr.bf16.mxu0 0
    %1262 = vmatpush1.bf16.msra.mxu0 %v1240
    %1263 = vmatprep.subr.bf16.mxu0 0
    %1264 = vmatpush1.bf16.msra.mxu0 %v1239
    %1265 = vmatprep.subr.bf16.mxu0 0
    %1266 = vmatpush1.bf16.msra.mxu0 %v1238
    %1267 = vmatprep.subr.bf16.mxu0 0
    %1268 = vmatpush1.bf16.msra.mxu0 %v1237
    %1269 = vmatprep.subr.bf16.mxu0 0
    %1270 = vmatpush2.bf16.msra.mxu0 0
    %1271 = vmatprep.subr.bf16.mxu0 0
    %1272 = vmatpush2.bf16.msra.mxu0 0
    %1273 = vmatprep.subr.bf16.mxu0 0
    %1274 = vmatpush2.bf16.msra.mxu0 0
    %1275 = vmatprep.subr.bf16.mxu0 0
    %1276 = vmatpush2.bf16.msra.mxu0 0
    %1277 = vmatprep.subr.bf16.mxu0 0
    %1278 = vmatpush2.bf16.msra.mxu0 0
    %1279 = vmatprep.subr.bf16.mxu0 0
    %1280 = vmatpush2.bf16.msra.mxu0 0
    %1281 = vmatprep.subr.bf16.mxu0 0
    %1282 = vmatpush2.bf16.msra.mxu0 0
    %1283 = vmatprep.subr.bf16.mxu0 0
    %1284 = vmatpush2.bf16.msra.mxu0 0
    %1285 = vmatprep.mubr.bf16.mxu0 0
    %1286 = vmatmul.mubr.bf16.gmra.mxu0 %v1188
    %v1287 = vpop.f32.mrf.mxu0
    %v1288 = vadd.f32 0.0, %v1287
    %v1289 = vpop.f32.mrf.mxu0
    %v1290 = vpop.f32.mrf.mxu0
    %v1291 = vpop.f32.mrf.mxu0
    %1292 = vdwg.mxu0
    %v1293 = vadd.f32 %v1026, %v1288
    %s1294 = scalar_lea.vmem %s3, 1
    %v1295 = vld [vmem:[%s1294] sm:$0x1]
    %v1296 = vmul.f32 %v1293, %v1293
    %1297 = vadd.xlane.f32.xlu0 %v1296
    %v1298 = vpop.xlane.xlu0 %1297
    %v1299 = vmul.f32 %v1298, 0.03125
    %v1300 = vadd.f32 %v1299, 1e-05
    %v1301 = vrsqrt.pop %v1300
    %v1302 = vmul.f32 %v1293, %v1301
    %v1304 = vlaneseq
    %v1305 = vshrl.u32 %v1304, 7
    %v1306 = vsub.s32 0, %v1305
    %v1307 = vrot.slane %v1295, %v1306
    %v1309 = vmul.f32 %v1302, %v1307
    %v1310 = vpack.c.bf16 %v1309, %v1309
    %s1311 = scalar_lea.vmem %s4, 192
    %v1312 = vld [vmem:[%s1311] sm:$0xff]
    %v1313 = vld [vmem:[%s1311 + $0x8] sm:$0xf]
    %v1314 = vld [vmem:[%s1311 + $0xc] sm:$0xff]
    %v1315 = vld [vmem:[%s1311 + $0x14] sm:$0xf]
    %v1316 = vld [vmem:[%s1311 + $0x18] sm:$0xff]
    %v1317 = vld [vmem:[%s1311 + $0x20] sm:$0xf]
    %v1318 = vld [vmem:[%s1311 + $0x24] sm:$0xff]
    %v1319 = vld [vmem:[%s1311 + $0x2c] sm:$0xf]
    %v1320 = vld [vmem:[%s1311 + $0x30] sm:$0xff]
    %v1321 = vld [vmem:[%s1311 + $0x38] sm:$0xf]
    %v1322 = vld [vmem:[%s1311 + $0x3c] sm:$0xff]
    %v1323 = vld [vmem:[%s1311 + $0x44] sm:$0xf]
    %v1324 = vld [vmem:[%s1311 + $0x48] sm:$0xff]
    %v1325 = vld [vmem:[%s1311 + $0x50] sm:$0xf]
    %v1326 = vld [vmem:[%s1311 + $0x54] sm:$0xff]
    %v1327 = vld [vmem:[%s1311 + $0x5c] sm:$0xf]
    %v1328 = vld [vmem:[%s1311 + $0x60] sm:$0xff]
    %v1329 = vld [vmem:[%s1311 + $0x68] sm:$0xf]
    %v1330 = vld [vmem:[%s1311 + $0x6c] sm:$0xff]
    %v1331 = vld [vmem:[%s1311 + $0x74] sm:$0xf]
    %v1332 = vld [vmem:[%s1311 + $0x78] sm:$0xff]
    %v1333 = vld [vmem:[%s1311 + $0x80] sm:$0xf]
    %v1334 = vld [vmem:[%s1311 + $0x84] sm:$0xff]
    %v1335 = vld [vmem:[%s1311 + $0x8c] sm:$0xf]
    %v1336 = vld [vmem:[%s1311 + $0x90] sm:$0xff]
    %v1337 = vld [vmem:[%s1311 + $0x98] sm:$0xf]
    %v1338 = vld [vmem:[%s1311 + $0x9c] sm:$0xff]
    %v1339 = vld [vmem:[%s1311 + $0xa4] sm:$0xf]
    %v1340 = vld [vmem:[%s1311 + $0xa8] sm:$0xff]
    %v1341 = vld [vmem:[%s1311 + $0xb0] sm:$0xf]
    %v1342 = vld [vmem:[%s1311 + $0xb4] sm:$0xff]
    %v1343 = vld [vmem:[%s1311 + $0xbc] sm:$0xf]
    %s1344 = scalar_lea.vmem %s5, 3
    %v1345 = vld [vmem:[%s1344] sm:$0x7]
    %v1347 = vlaneseq
    %v1348 = vshrl.u32 %v1347, 7
    %v1349 = vsub.s32 0, %v1348
    %v1350 = vrot.slane %v1345, %v1349
    %v1351 = vlaneseq
    %v1352 = vshrl.u32 %v1351, 7
    %v1353 = vsub.s32 1, %v1352
    %v1354 = vrot.slane %v1345, %v1353
    %v1355 = vlaneseq
    %v1356 = vshrl.u32 %v1355, 7
    %v1357 = vsub.s32 2, %v1356
    %v1358 = vrot.slane %v1345, %v1357
    %v1394 = vunpack.c.l.b16 %v1312
    %v1395 = vunpack.c.h.b16 %v1312
    %v1396 = vunpack.c.l.b16 %v1313
    %v1397 = vunpack.c.l.b16 %v1314
    %v1398 = vunpack.c.h.b16 %v1314
    %v1399 = vunpack.c.l.b16 %v1315
    %v1400 = vunpack.c.l.b16 %v1316
    %v1401 = vunpack.c.h.b16 %v1316
    %v1402 = vunpack.c.l.b16 %v1317
    %v1403 = vunpack.c.l.b16 %v1318
    %v1404 = vunpack.c.h.b16 %v1318
    %v1405 = vunpack.c.l.b16 %v1319
    %v1406 = vunpack.c.l.b16 %v1320
    %v1407 = vunpack.c.h.b16 %v1320
    %v1408 = vunpack.c.l.b16 %v1321
    %v1409 = vunpack.c.l.b16 %v1322
    %v1410 = vunpack.c.h.b16 %v1322
    %v1411 = vunpack.c.l.b16 %v1323
    %v1412 = vunpack.c.l.b16 %v1324
    %v1413 = vunpack.c.h.b16 %v1324
    %v1414 = vunpack.c.l.b16 %v1325
    %v1415 = vunpack.c.l.b16 %v1326
    %v1416 = vunpack.c.h.b16 %v1326
    %v1417 = vunpack.c.l.b16 %v1327
    %v1418 = vunpack.c.l.b16 %v1328
    %v1419 = vunpack.c.h.b16 %v1328
    %v1420 = vunpack.c.l.b16 %v1329
    %v1421 = vunpack.c.l.b16 %v1330
    %v1422 = vunpack.c.h.b16 %v1330
    %v1423 = vunpack.c.l.b16 %v1331
    %v1424 = vunpack.c.l.b16 %v1332
    %v1425 = vunpack.c.h.b16 %v1332
    %v1426 = vunpack.c.l.b16 %v1333
    %v1427 = vunpack.c.l.b16 %v1334
    %v1428 = vunpack.c.h.b16 %v1334
    %v1429 = vunpack.c.l.b16 %v1335
    %v1430 = vunpack.c.l.b16 %v1336
    %v1431 = vunpack.c.h.b16 %v1336
    %v1432 = vunpack.c.l.b16 %v1337
    %v1433 = vunpack.c.l.b16 %v1338
    %v1434 = vunpack.c.h.b16 %v1338
    %v1435 = vunpack.c.l.b16 %v1339
    %v1436 = vunpack.c.l.b16 %v1340
    %v1437 = vunpack.c.h.b16 %v1340
    %v1438 = vunpack.c.l.b16 %v1341
    %v1439 = vunpack.c.l.b16 %v1342
    %v1440 = vunpack.c.h.b16 %v1342
    %v1441 = vunpack.c.l.b16 %v1343
    %v1442 = vpack.c.b16 %v1397, %v1394
    %v1443 = vpack.c.b16 %v1398, %v1395
    %v1444 = vpack.c.b16 %v1399, %v1396
    %v1445 = vpack.c.b16 %v1403, %v1400
    %v1446 = vpack.c.b16 %v1404, %v1401
    %v1447 = vpack.c.b16 %v1405, %v1402
    %v1448 = vpack.c.b16 %v1409, %v1406
    %v1449 = vpack.c.b16 %v1410, %v1407
    %v1450 = vpack.c.b16 %v1411, %v1408
    %v1451 = vpack.c.b16 %v1415, %v1412
    %v1452 = vpack.c.b16 %v1416, %v1413
    %v1453 = vpack.c.b16 %v1417, %v1414
    %v1454 = vpack.c.b16 %v1421, %v1418
    %v1455 = vpack.c.b16 %v1422, %v1419
    %v1456 = vpack.c.b16 %v1423, %v1420
    %v1457 = vpack.c.b16 %v1427, %v1424
    %v1458 = vpack.c.b16 %v1428, %v1425
    %v1459 = vpack.c.b16 %v1429, %v1426
    %v1460 = vpack.c.b16 %v1433, %v1430
    %v1461 = vpack.c.b16 %v1434, %v1431
    %v1462 = vpack.c.b16 %v1435, %v1432
    %v1463 = vpack.c.b16 %v1439, %v1436
    %v1464 = vpack.c.b16 %v1440, %v1437
    %v1465 = vpack.c.b16 %v1441, %v1438
    %1490 = vmatprep.subr.bf16.mxu0 %v1464
    %1491 = vmatpush1.bf16.msra.mxu0 %v1463
    %1492 = vmatprep.subr.bf16.mxu0 %v1461
    %1493 = vmatpush1.bf16.msra.mxu0 %v1460
    %1494 = vmatprep.subr.bf16.mxu0 %v1458
    %1495 = vmatpush1.bf16.msra.mxu0 %v1457
    %1496 = vmatprep.subr.bf16.mxu0 %v1455
    %1497 = vmatpush1.bf16.msra.mxu0 %v1454
    %1498 = vmatprep.subr.bf16.mxu0 %v1452
    %1499 = vmatpush1.bf16.msra.mxu0 %v1451
    %1500 = vmatprep.subr.bf16.mxu0 %v1449
    %1501 = vmatpush1.bf16.msra.mxu0 %v1448
    %1502 = vmatprep.subr.bf16.mxu0 %v1446
    %1503 = vmatpush1.bf16.msra.mxu0 %v1445
    %1504 = vmatprep.subr.bf16.mxu0 %v1443
    %1505 = vmatpush1.bf16.msra.mxu0 %v1442
    %1506 = vmatprep.subr.bf16.mxu0 0
    %1507 = vmatpush2.bf16.msra.mxu0 0
    %1508 = vmatprep.subr.bf16.mxu0 0
    %1509 = vmatpush2.bf16.msra.mxu0 0
    %1510 = vmatprep.subr.bf16.mxu0 0
    %1511 = vmatpush2.bf16.msra.mxu0 0
    %1512 = vmatprep.subr.bf16.mxu0 0
    %1513 = vmatpush2.bf16.msra.mxu0 0
    %1514 = vmatprep.subr.bf16.mxu0 0
    %1515 = vmatpush2.bf16.msra.mxu0 0
    %1516 = vmatprep.subr.bf16.mxu0 0
    %1517 = vmatpush2.bf16.msra.mxu0 0
    %1518 = vmatprep.subr.bf16.mxu0 0
    %1519 = vmatpush2.bf16.msra.mxu0 0
    %1520 = vmatprep.subr.bf16.mxu0 0
    %1521 = vmatpush2.bf16.msra.mxu0 0
    %1522 = vmatprep.mubr.bf16.mxu0 0
    %1523 = vmatmul.mubr.bf16.gmra.mxu0 %v1310
    %v1524 = vpop.f32.mrf.mxu0
    %v1525 = vadd.f32 %v1350, %v1524
    %v1526 = vpop.f32.mrf.mxu0
    %v1527 = vadd.f32 %v1354, %v1526
    %v1528 = vpop.f32.mrf.mxu0
    %v1529 = vpop.f32.mrf.mxu0
    %1530 = vdwg.mxu0
    %1531 = vmatprep.subr.bf16.mxu0 0
    %1532 = vmatpush1.bf16.msra.mxu0 %v1465
    %1533 = vmatprep.subr.bf16.mxu0 0
    %1534 = vmatpush1.bf16.msra.mxu0 %v1462
    %1535 = vmatprep.subr.bf16.mxu0 0
    %1536 = vmatpush1.bf16.msra.mxu0 %v1459
    %1537 = vmatprep.subr.bf16.mxu0 0
    %1538 = vmatpush1.bf16.msra.mxu0 %v1456
    %1539 = vmatprep.subr.bf16.mxu0 0
    %1540 = vmatpush1.bf16.msra.mxu0 %v1453
    %1541 = vmatprep.subr.bf16.mxu0 0
    %1542 = vmatpush1.bf16.msra.mxu0 %v1450
    %1543 = vmatprep.subr.bf16.mxu0 0
    %1544 = vmatpush1.bf16.msra.mxu0 %v1447
    %1545 = vmatprep.subr.bf16.mxu0 0
    %1546 = vmatpush1.bf16.msra.mxu0 %v1444
    %1547 = vmatprep.subr.bf16.mxu0 0
    %1548 = vmatpush2.bf16.msra.mxu0 0
    %1549 = vmatprep.subr.bf16.mxu0 0
    %1550 = vmatpush2.bf16.msra.mxu0 0
    %1551 = vmatprep.subr.bf16.mxu0 0
    %1552 = vmatpush2.bf16.msra.mxu0 0
    %1553 = vmatprep.subr.bf16.mxu0 0
    %1554 = vmatpush2.bf16.msra.mxu0 0
    %1555 = vmatprep.subr.bf16.mxu0 0
    %1556 = vmatpush2.bf16.msra.mxu0 0
    %1557 = vmatprep.subr.bf16.mxu0 0
    %1558 = vmatpush2.bf16.msra.mxu0 0
    %1559 = vmatprep.subr.bf16.mxu0 0
    %1560 = vmatpush2.bf16.msra.mxu0 0
    %1561 = vmatprep.subr.bf16.mxu0 0
    %1562 = vmatpush2.bf16.msra.mxu0 0
    %1563 = vmatprep.mubr.bf16.mxu0 0
    %1564 = vmatmul.mubr.bf16.gmra.mxu0 %v1310
    %v1565 = vpop.f32.mrf.mxu0
    %v1566 = vadd.f32 %v1358, %v1565
    %v1567 = vpop.f32.mrf.mxu0
    %v1568 = vpop.f32.mrf.mxu0
    %v1569 = vpop.f32.mrf.mxu0
    %1570 = vdwg.mxu0
    %v1571 = vmul.f32 %v1525, %v106
    %1572 = vrot.lane.b32.xlu0 %v1525, 127
    %v1573 = vpop.permute.xlu0 %1572
    %v1574 = vmul.f32 %v1573, %v108
    %v1575 = vadd.f32 %v1571, %v1574
    %1576 = vrot.lane.b32.xlu0 %v1525, 1
    %v1577 = vpop.permute.xlu0 %1576
    %v1578 = vmul.f32 %v1577, %v109
    %v1579 = vadd.f32 %v1575, %v1578
    %v1580 = vmul.f32 %v1527, %v106
    %1581 = vrot.lane.b32.xlu0 %v1527, 127
    %v1582 = vpop.permute.xlu0 %1581
    %v1583 = vmul.f32 %v1582, %v108
    %v1584 = vadd.f32 %v1580, %v1583
    %1585 = vrot.lane.b32.xlu0 %v1527, 1
    %v1586 = vpop.permute.xlu0 %1585
    %v1587 = vmul.f32 %v1586, %v109
    %v1588 = vadd.f32 %v1584, %v1587
    %s1589 = scalar_lea.vmem [#allocation2], 16
    %v1590 = vld [vmem:[%s1589] sm:$0xf]
    %v1591 = vld [vmem:[%s1589 + $0x4] sm:$0xf]
    %v1592 = vld [vmem:[%s1589 + $0x8] sm:$0xf]
    %v1593 = vld [vmem:[%s1589 + $0xc] sm:$0xf]
    %v1594 = vpack.c.bf16 %v1579, %v1579
    %v1595 = vpack.c.bf16 %v1588, %v1588
    %v1596 = vpack.c.bf16 %v1566, %v1566
    %v1598 = vsel %vm409, %v1594, 0
    %v1601 = vsel %vm409, %v1595, 0
    %1603 = vmatprep.subr.bf16.mxu0 0
    %1604 = vmatpush1.bf16.xpose.msra.mxu0 0
    %1605 = vmatprep.subr.bf16.mxu0 0
    %1606 = vmatpush1.bf16.xpose.msra.mxu0 0
    %1607 = vmatprep.subr.bf16.mxu0 0
    %1608 = vmatpush1.bf16.xpose.msra.mxu0 0
    %1609 = vmatprep.subr.bf16.mxu0 0
    %1610 = vmatpush1.bf16.xpose.msra.mxu0 0
    %1611 = vmatprep.subr.bf16.mxu0 0
    %1612 = vmatpush1.bf16.xpose.msra.mxu0 0
    %1613 = vmatprep.subr.bf16.mxu0 0
    %1614 = vmatpush1.bf16.xpose.msra.mxu0 0
    %1615 = vmatprep.subr.bf16.mxu0 0
    %1616 = vmatpush1.bf16.xpose.msra.mxu0 0
    %1617 = vmatprep.subr.bf16.mxu0 0
    %1618 = vmatpush1.bf16.xpose.msra.mxu0 %v1601
    %1619 = vmatprep.subr.bf16.mxu0 0
    %1620 = vmatpush2.bf16.xpose.msra.mxu0 0
    %1621 = vmatprep.subr.bf16.mxu0 0
    %1622 = vmatpush2.bf16.xpose.msra.mxu0 0
    %1623 = vmatprep.subr.bf16.mxu0 0
    %1624 = vmatpush2.bf16.xpose.msra.mxu0 0
    %1625 = vmatprep.subr.bf16.mxu0 0
    %1626 = vmatpush2.bf16.xpose.msra.mxu0 0
    %1627 = vmatprep.subr.bf16.mxu0 0
    %1628 = vmatpush2.bf16.xpose.msra.mxu0 0
    %1629 = vmatprep.subr.bf16.mxu0 0
    %1630 = vmatpush2.bf16.xpose.msra.mxu0 0
    %1631 = vmatprep.subr.bf16.mxu0 0
    %1632 = vmatpush2.bf16.xpose.msra.mxu0 0
    %1633 = vmatprep.subr.bf16.mxu0 0
    %1634 = vmatpush2.bf16.xpose.msra.mxu0 0
    %1635 = vmatprep.mubr.bf16.mxu0 0
    %1636 = vmatmul.mubr.bf16.gmra.mxu0 %v1598
    %v1637 = vpop.f32.mrf.mxu0
    %v1638 = vadd.f32 0.0, %v1637
    %v1639 = vpop.f32.mrf.mxu0
    %v1640 = vpop.f32.mrf.mxu0
    %v1641 = vpop.f32.mrf.mxu0
    %1642 = vdwg.mxu0
    %v1643 = vmul.f32 %v1638, 0.35355338
    %v1644 = vsel %vm86, %v1643, -1e+30
    %v1645 = vsel %vm409, %v1644, -inf
    %1646 = vmax.xlane.f32.xlu0 %v1645
    %v1647 = vpop.xlane.xlu0 %1646
    %v1648 = vsub.f32 %v1644, %v1647
    %v1649 = vmul.f32 %v1648, 1.442695
    %v1650 = vpow.pop %v1649
    %v1651 = vsel %vm409, %v1650, 0.0
    %1652 = vadd.xlane.f32.xlu0 %v1651
    %v1653 = vpop.xlane.xlu0 %1652
    %v1654 = vpack.c.bf16 %v1650, %v1650
    %v1656 = vsel %vm409, %v1654, 0
    %v1659 = vsel %vm471, %v1596, 0
    %1661 = vmatprep.subr.bf16.mxu0 0
    %1662 = vmatpush1.bf16.msra.mxu0 0
    %1663 = vmatprep.subr.bf16.mxu0 0
    %1664 = vmatpush1.bf16.msra.mxu0 0
    %1665 = vmatprep.subr.bf16.mxu0 0
    %1666 = vmatpush1.bf16.msra.mxu0 0
    %1667 = vmatprep.subr.bf16.mxu0 0
    %1668 = vmatpush1.bf16.msra.mxu0 0
    %1669 = vmatprep.subr.bf16.mxu0 0
    %1670 = vmatpush1.bf16.msra.mxu0 0
    %1671 = vmatprep.subr.bf16.mxu0 0
    %1672 = vmatpush1.bf16.msra.mxu0 0
    %1673 = vmatprep.subr.bf16.mxu0 0
    %1674 = vmatpush1.bf16.msra.mxu0 0
    %1675 = vmatprep.subr.bf16.mxu0 0
    %1676 = vmatpush1.bf16.msra.mxu0 %v1659
    %1677 = vmatprep.subr.bf16.mxu0 0
    %1678 = vmatpush2.bf16.msra.mxu0 0
    %1679 = vmatprep.subr.bf16.mxu0 0
    %1680 = vmatpush2.bf16.msra.mxu0 0
    %1681 = vmatprep.subr.bf16.mxu0 0
    %1682 = vmatpush2.bf16.msra.mxu0 0
    %1683 = vmatprep.subr.bf16.mxu0 0
    %1684 = vmatpush2.bf16.msra.mxu0 0
    %1685 = vmatprep.subr.bf16.mxu0 0
    %1686 = vmatpush2.bf16.msra.mxu0 0
    %1687 = vmatprep.subr.bf16.mxu0 0
    %1688 = vmatpush2.bf16.msra.mxu0 0
    %1689 = vmatprep.subr.bf16.mxu0 0
    %1690 = vmatpush2.bf16.msra.mxu0 0
    %1691 = vmatprep.subr.bf16.mxu0 0
    %1692 = vmatpush2.bf16.msra.mxu0 0
    %1693 = vmatprep.mubr.bf16.mxu0 0
    %1694 = vmatmul.mubr.bf16.gmra.mxu0 %v1656
    %v1695 = vpop.f32.mrf.mxu0
    %v1696 = vadd.f32 0.0, %v1695
    %v1697 = vpop.f32.mrf.mxu0
    %v1698 = vpop.f32.mrf.mxu0
    %v1699 = vpop.f32.mrf.mxu0
    %1700 = vdwg.mxu0
    %v1701 = vrcp.pop %v1653
    %v1702 = vmul.f32 %v1696, %v1701
    %v1703 = vpack.c.bf16 %v1702, %v1702
    %1705 = vrot.lane.b32.xlu0 %v1594, 120
    %v1706 = vpop.permute.xlu0 %1705
    %v1708 = vsel %vm409, %v1706, 0
    %1710 = vmatprep.subr.bf16.mxu0 0
    %1711 = vmatpush1.bf16.xpose.msra.mxu0 0
    %1712 = vmatprep.subr.bf16.mxu0 0
    %1713 = vmatpush1.bf16.xpose.msra.mxu0 0
    %1714 = vmatprep.subr.bf16.mxu0 0
    %1715 = vmatpush1.bf16.xpose.msra.mxu0 0
    %1716 = vmatprep.subr.bf16.mxu0 0
    %1717 = vmatpush1.bf16.xpose.msra.mxu0 0
    %1718 = vmatprep.subr.bf16.mxu0 0
    %1719 = vmatpush1.bf16.xpose.msra.mxu0 0
    %1720 = vmatprep.subr.bf16.mxu0 0
    %1721 = vmatpush1.bf16.xpose.msra.mxu0 0
    %1722 = vmatprep.subr.bf16.mxu0 0
    %1723 = vmatpush1.bf16.xpose.msra.mxu0 0
    %1724 = vmatprep.subr.bf16.mxu0 0
    %1725 = vmatpush1.bf16.xpose.msra.mxu0 %v1601
    %1726 = vmatprep.subr.bf16.mxu0 0
    %1727 = vmatpush2.bf16.xpose.msra.mxu0 0
    %1728 = vmatprep.subr.bf16.mxu0 0
    %1729 = vmatpush2.bf16.xpose.msra.mxu0 0
    %1730 = vmatprep.subr.bf16.mxu0 0
    %1731 = vmatpush2.bf16.xpose.msra.mxu0 0
    %1732 = vmatprep.subr.bf16.mxu0 0
    %1733 = vmatpush2.bf16.xpose.msra.mxu0 0
    %1734 = vmatprep.subr.bf16.mxu0 0
    %1735 = vmatpush2.bf16.xpose.msra.mxu0 0
    %1736 = vmatprep.subr.bf16.mxu0 0
    %1737 = vmatpush2.bf16.xpose.msra.mxu0 0
    %1738 = vmatprep.subr.bf16.mxu0 0
    %1739 = vmatpush2.bf16.xpose.msra.mxu0 0
    %1740 = vmatprep.subr.bf16.mxu0 0
    %1741 = vmatpush2.bf16.xpose.msra.mxu0 0
    %1742 = vmatprep.mubr.bf16.mxu0 0
    %1743 = vmatmul.mubr.bf16.gmra.mxu0 %v1708
    %v1744 = vpop.f32.mrf.mxu0
    %v1745 = vadd.f32 0.0, %v1744
    %v1746 = vpop.f32.mrf.mxu0
    %v1747 = vpop.f32.mrf.mxu0
    %v1748 = vpop.f32.mrf.mxu0
    %1749 = vdwg.mxu0
    %v1750 = vmul.f32 %v1745, 0.35355338
    %v1751 = vsel %vm86, %v1750, -1e+30
    %v1752 = vsel %vm409, %v1751, -inf
    %1753 = vmax.xlane.f32.xlu0 %v1752
    %v1754 = vpop.xlane.xlu0 %1753
    %v1755 = vsub.f32 %v1751, %v1754
    %v1756 = vmul.f32 %v1755, 1.442695
    %v1757 = vpow.pop %v1756
    %v1758 = vsel %vm409, %v1757, 0.0
    %1759 = vadd.xlane.f32.xlu0 %v1758
    %v1760 = vpop.xlane.xlu0 %1759
    %v1761 = vpack.c.bf16 %v1757, %v1757
    %v1763 = vsel %vm409, %v1761, 0
    %1765 = vmatprep.subr.bf16.mxu0 0
    %1766 = vmatpush1.bf16.msra.mxu0 0
    %1767 = vmatprep.subr.bf16.mxu0 0
    %1768 = vmatpush1.bf16.msra.mxu0 0
    %1769 = vmatprep.subr.bf16.mxu0 0
    %1770 = vmatpush1.bf16.msra.mxu0 0
    %1771 = vmatprep.subr.bf16.mxu0 0
    %1772 = vmatpush1.bf16.msra.mxu0 0
    %1773 = vmatprep.subr.bf16.mxu0 0
    %1774 = vmatpush1.bf16.msra.mxu0 0
    %1775 = vmatprep.subr.bf16.mxu0 0
    %1776 = vmatpush1.bf16.msra.mxu0 0
    %1777 = vmatprep.subr.bf16.mxu0 0
    %1778 = vmatpush1.bf16.msra.mxu0 0
    %1779 = vmatprep.subr.bf16.mxu0 0
    %1780 = vmatpush1.bf16.msra.mxu0 %v1659
    %1781 = vmatprep.subr.bf16.mxu0 0
    %1782 = vmatpush2.bf16.msra.mxu0 0
    %1783 = vmatprep.subr.bf16.mxu0 0
    %1784 = vmatpush2.bf16.msra.mxu0 0
    %1785 = vmatprep.subr.bf16.mxu0 0
    %1786 = vmatpush2.bf16.msra.mxu0 0
    %1787 = vmatprep.subr.bf16.mxu0 0
    %1788 = vmatpush2.bf16.msra.mxu0 0
    %1789 = vmatprep.subr.bf16.mxu0 0
    %1790 = vmatpush2.bf16.msra.mxu0 0
    %1791 = vmatprep.subr.bf16.mxu0 0
    %1792 = vmatpush2.bf16.msra.mxu0 0
    %1793 = vmatprep.subr.bf16.mxu0 0
    %1794 = vmatpush2.bf16.msra.mxu0 0
    %1795 = vmatprep.subr.bf16.mxu0 0
    %1796 = vmatpush2.bf16.msra.mxu0 0
    %1797 = vmatprep.mubr.bf16.mxu0 0
    %1798 = vmatmul.mubr.bf16.gmra.mxu0 %v1763
    %v1799 = vpop.f32.mrf.mxu0
    %v1800 = vadd.f32 0.0, %v1799
    %v1801 = vpop.f32.mrf.mxu0
    %v1802 = vpop.f32.mrf.mxu0
    %v1803 = vpop.f32.mrf.mxu0
    %1804 = vdwg.mxu0
    %v1805 = vrcp.pop %v1760
    %v1806 = vmul.f32 %v1800, %v1805
    %v1807 = vpack.c.bf16 %v1806, %v1806
    %v1809 = vsel %vm409, %v1807, 0
    %v1812 = vsel %vm471, %v1591, 0
    %1814 = vmatprep.subr.bf16.mxu0 0
    %1815 = vmatpush1.bf16.msra.mxu0 0
    %1816 = vmatprep.subr.bf16.mxu0 0
    %1817 = vmatpush1.bf16.msra.mxu0 0
    %1818 = vmatprep.subr.bf16.mxu0 0
    %1819 = vmatpush1.bf16.msra.mxu0 0
    %1820 = vmatprep.subr.bf16.mxu0 0
    %1821 = vmatpush1.bf16.msra.mxu0 0
    %1822 = vmatprep.subr.bf16.mxu0 0
    %1823 = vmatpush1.bf16.msra.mxu0 0
    %1824 = vmatprep.subr.bf16.mxu0 0
    %1825 = vmatpush1.bf16.msra.mxu0 0
    %1826 = vmatprep.subr.bf16.mxu0 0
    %1827 = vmatpush1.bf16.msra.mxu0 0
    %1828 = vmatprep.subr.bf16.mxu0 0
    %1829 = vmatpush1.bf16.msra.mxu0 %v1812
    %1830 = vmatprep.subr.bf16.mxu0 0
    %1831 = vmatpush2.bf16.msra.mxu0 0
    %1832 = vmatprep.subr.bf16.mxu0 0
    %1833 = vmatpush2.bf16.msra.mxu0 0
    %1834 = vmatprep.subr.bf16.mxu0 0
    %1835 = vmatpush2.bf16.msra.mxu0 0
    %1836 = vmatprep.subr.bf16.mxu0 0
    %1837 = vmatpush2.bf16.msra.mxu0 0
    %1838 = vmatprep.subr.bf16.mxu0 0
    %1839 = vmatpush2.bf16.msra.mxu0 0
    %1840 = vmatprep.subr.bf16.mxu0 0
    %1841 = vmatpush2.bf16.msra.mxu0 0
    %1842 = vmatprep.subr.bf16.mxu0 0
    %1843 = vmatpush2.bf16.msra.mxu0 0
    %1844 = vmatprep.subr.bf16.mxu0 0
    %1845 = vmatpush2.bf16.msra.mxu0 0
    %1846 = vmatprep.mubr.bf16.mxu0 0
    %1847 = vmatmul.mubr.bf16.gmra.mxu0 %v1809
    %v1848 = vpop.f32.mrf.mxu0
    %v1849 = vadd.f32 0.0, %v1848
    %v1850 = vpop.f32.mrf.mxu0
    %v1851 = vpop.f32.mrf.mxu0
    %v1852 = vpop.f32.mrf.mxu0
    %1853 = vdwg.mxu0
    %v1855 = vsel %vm409, %v1703, 0
    %v1858 = vsel %vm471, %v1590, 0
    %1860 = vmatprep.subr.bf16.mxu0 0
    %1861 = vmatpush1.bf16.msra.mxu0 0
    %1862 = vmatprep.subr.bf16.mxu0 0
    %1863 = vmatpush1.bf16.msra.mxu0 0
    %1864 = vmatprep.subr.bf16.mxu0 0
    %1865 = vmatpush1.bf16.msra.mxu0 0
    %1866 = vmatprep.subr.bf16.mxu0 0
    %1867 = vmatpush1.bf16.msra.mxu0 0
    %1868 = vmatprep.subr.bf16.mxu0 0
    %1869 = vmatpush1.bf16.msra.mxu0 0
    %1870 = vmatprep.subr.bf16.mxu0 0
    %1871 = vmatpush1.bf16.msra.mxu0 0
    %1872 = vmatprep.subr.bf16.mxu0 0
    %1873 = vmatpush1.bf16.msra.mxu0 0
    %1874 = vmatprep.subr.bf16.mxu0 0
    %1875 = vmatpush1.bf16.msra.mxu0 %v1858
    %1876 = vmatprep.subr.bf16.mxu0 0
    %1877 = vmatpush2.bf16.msra.mxu0 0
    %1878 = vmatprep.subr.bf16.mxu0 0
    %1879 = vmatpush2.bf16.msra.mxu0 0
    %1880 = vmatprep.subr.bf16.mxu0 0
    %1881 = vmatpush2.bf16.msra.mxu0 0
    %1882 = vmatprep.subr.bf16.mxu0 0
    %1883 = vmatpush2.bf16.msra.mxu0 0
    %1884 = vmatprep.subr.bf16.mxu0 0
    %1885 = vmatpush2.bf16.msra.mxu0 0
    %1886 = vmatprep.subr.bf16.mxu0 0
    %1887 = vmatpush2.bf16.msra.mxu0 0
    %1888 = vmatprep.subr.bf16.mxu0 0
    %1889 = vmatpush2.bf16.msra.mxu0 0
    %1890 = vmatprep.subr.bf16.mxu0 0
    %1891 = vmatpush2.bf16.msra.mxu0 0
    %1892 = vmatprep.mubr.bf16.mxu0 0
    %1893 = vmatmul.mubr.bf16.gmra.mxu0 %v1855
    %v1894 = vpop.f32.mrf.mxu0
    %v1895 = vadd.f32 %v1849, %v1894
    %v1896 = vpop.f32.mrf.mxu0
    %v1897 = vpop.f32.mrf.mxu0
    %v1898 = vpop.f32.mrf.mxu0
    %1899 = vdwg.mxu0
    %1900 = vrot.lane.b32.xlu0 %v1594, 112
    %v1901 = vpop.permute.xlu0 %1900
    %1903 = vrot.lane.b32.xlu0 %v1595, 120
    %v1904 = vpop.permute.xlu0 %1903
    %v1906 = vsel %vm409, %v1901, 0
    %v1909 = vsel %vm409, %v1904, 0
    %1911 = vmatprep.subr.bf16.mxu0 0
    %1912 = vmatpush1.bf16.xpose.msra.mxu0 0
    %1913 = vmatprep.subr.bf16.mxu0 0
    %1914 = vmatpush1.bf16.xpose.msra.mxu0 0
    %1915 = vmatprep.subr.bf16.mxu0 0
    %1916 = vmatpush1.bf16.xpose.msra.mxu0 0
    %1917 = vmatprep.subr.bf16.mxu0 0
    %1918 = vmatpush1.bf16.xpose.msra.mxu0 0
    %1919 = vmatprep.subr.bf16.mxu0 0
    %1920 = vmatpush1.bf16.xpose.msra.mxu0 0
    %1921 = vmatprep.subr.bf16.mxu0 0
    %1922 = vmatpush1.bf16.xpose.msra.mxu0 0
    %1923 = vmatprep.subr.bf16.mxu0 0
    %1924 = vmatpush1.bf16.xpose.msra.mxu0 0
    %1925 = vmatprep.subr.bf16.mxu0 0
    %1926 = vmatpush1.bf16.xpose.msra.mxu0 %v1909
    %1927 = vmatprep.subr.bf16.mxu0 0
    %1928 = vmatpush2.bf16.xpose.msra.mxu0 0
    %1929 = vmatprep.subr.bf16.mxu0 0
    %1930 = vmatpush2.bf16.xpose.msra.mxu0 0
    %1931 = vmatprep.subr.bf16.mxu0 0
    %1932 = vmatpush2.bf16.xpose.msra.mxu0 0
    %1933 = vmatprep.subr.bf16.mxu0 0
    %1934 = vmatpush2.bf16.xpose.msra.mxu0 0
    %1935 = vmatprep.subr.bf16.mxu0 0
    %1936 = vmatpush2.bf16.xpose.msra.mxu0 0
    %1937 = vmatprep.subr.bf16.mxu0 0
    %1938 = vmatpush2.bf16.xpose.msra.mxu0 0
    %1939 = vmatprep.subr.bf16.mxu0 0
    %1940 = vmatpush2.bf16.xpose.msra.mxu0 0
    %1941 = vmatprep.subr.bf16.mxu0 0
    %1942 = vmatpush2.bf16.xpose.msra.mxu0 0
    %1943 = vmatprep.mubr.bf16.mxu0 0
    %1944 = vmatmul.mubr.bf16.gmra.mxu0 %v1906
    %v1945 = vpop.f32.mrf.mxu0
    %v1946 = vadd.f32 0.0, %v1945
    %v1947 = vpop.f32.mrf.mxu0
    %v1948 = vpop.f32.mrf.mxu0
    %v1949 = vpop.f32.mrf.mxu0
    %1950 = vdwg.mxu0
    %v1951 = vmul.f32 %v1946, 0.35355338
    %v1952 = vsel %vm86, %v1951, -1e+30
    %v1953 = vsel %vm409, %v1952, -inf
    %1954 = vmax.xlane.f32.xlu0 %v1953
    %v1955 = vpop.xlane.xlu0 %1954
    %v1956 = vsub.f32 %v1952, %v1955
    %v1957 = vmul.f32 %v1956, 1.442695
    %v1958 = vpow.pop %v1957
    %v1959 = vsel %vm409, %v1958, 0.0
    %1960 = vadd.xlane.f32.xlu0 %v1959
    %v1961 = vpop.xlane.xlu0 %1960
    %v1962 = vpack.c.bf16 %v1958, %v1958
    %1964 = vrot.lane.b32.xlu0 %v1596, 120
    %v1965 = vpop.permute.xlu0 %1964
    %v1967 = vsel %vm409, %v1962, 0
    %v1970 = vsel %vm471, %v1965, 0
    %1972 = vmatprep.subr.bf16.mxu0 0
    %1973 = vmatpush1.bf16.msra.mxu0 0
    %1974 = vmatprep.subr.bf16.mxu0 0
    %1975 = vmatpush1.bf16.msra.mxu0 0
    %1976 = vmatprep.subr.bf16.mxu0 0
    %1977 = vmatpush1.bf16.msra.mxu0 0
    %1978 = vmatprep.subr.bf16.mxu0 0
    %1979 = vmatpush1.bf16.msra.mxu0 0
    %1980 = vmatprep.subr.bf16.mxu0 0
    %1981 = vmatpush1.bf16.msra.mxu0 0
    %1982 = vmatprep.subr.bf16.mxu0 0
    %1983 = vmatpush1.bf16.msra.mxu0 0
    %1984 = vmatprep.subr.bf16.mxu0 0
    %1985 = vmatpush1.bf16.msra.mxu0 0
    %1986 = vmatprep.subr.bf16.mxu0 0
    %1987 = vmatpush1.bf16.msra.mxu0 %v1970
    %1988 = vmatprep.subr.bf16.mxu0 0
    %1989 = vmatpush2.bf16.msra.mxu0 0
    %1990 = vmatprep.subr.bf16.mxu0 0
    %1991 = vmatpush2.bf16.msra.mxu0 0
    %1992 = vmatprep.subr.bf16.mxu0 0
    %1993 = vmatpush2.bf16.msra.mxu0 0
    %1994 = vmatprep.subr.bf16.mxu0 0
    %1995 = vmatpush2.bf16.msra.mxu0 0
    %1996 = vmatprep.subr.bf16.mxu0 0
    %1997 = vmatpush2.bf16.msra.mxu0 0
    %1998 = vmatprep.subr.bf16.mxu0 0
    %1999 = vmatpush2.bf16.msra.mxu0 0
    %2000 = vmatprep.subr.bf16.mxu0 0
    %2001 = vmatpush2.bf16.msra.mxu0 0
    %2002 = vmatprep.subr.bf16.mxu0 0
    %2003 = vmatpush2.bf16.msra.mxu0 0
    %2004 = vmatprep.mubr.bf16.mxu0 0
    %2005 = vmatmul.mubr.bf16.gmra.mxu0 %v1967
    %v2006 = vpop.f32.mrf.mxu0
    %v2007 = vadd.f32 0.0, %v2006
    %v2008 = vpop.f32.mrf.mxu0
    %v2009 = vpop.f32.mrf.mxu0
    %v2010 = vpop.f32.mrf.mxu0
    %2011 = vdwg.mxu0
    %v2012 = vrcp.pop %v1961
    %v2013 = vmul.f32 %v2007, %v2012
    %v2014 = vpack.c.bf16 %v2013, %v2013
    %v2016 = vsel %vm409, %v2014, 0
    %v2019 = vsel %vm471, %v1592, 0
    %2021 = vmatprep.subr.bf16.mxu0 0
    %2022 = vmatpush1.bf16.msra.mxu0 0
    %2023 = vmatprep.subr.bf16.mxu0 0
    %2024 = vmatpush1.bf16.msra.mxu0 0
    %2025 = vmatprep.subr.bf16.mxu0 0
    %2026 = vmatpush1.bf16.msra.mxu0 0
    %2027 = vmatprep.subr.bf16.mxu0 0
    %2028 = vmatpush1.bf16.msra.mxu0 0
    %2029 = vmatprep.subr.bf16.mxu0 0
    %2030 = vmatpush1.bf16.msra.mxu0 0
    %2031 = vmatprep.subr.bf16.mxu0 0
    %2032 = vmatpush1.bf16.msra.mxu0 0
    %2033 = vmatprep.subr.bf16.mxu0 0
    %2034 = vmatpush1.bf16.msra.mxu0 0
    %2035 = vmatprep.subr.bf16.mxu0 0
    %2036 = vmatpush1.bf16.msra.mxu0 %v2019
    %2037 = vmatprep.subr.bf16.mxu0 0
    %2038 = vmatpush2.bf16.msra.mxu0 0
    %2039 = vmatprep.subr.bf16.mxu0 0
    %2040 = vmatpush2.bf16.msra.mxu0 0
    %2041 = vmatprep.subr.bf16.mxu0 0
    %2042 = vmatpush2.bf16.msra.mxu0 0
    %2043 = vmatprep.subr.bf16.mxu0 0
    %2044 = vmatpush2.bf16.msra.mxu0 0
    %2045 = vmatprep.subr.bf16.mxu0 0
    %2046 = vmatpush2.bf16.msra.mxu0 0
    %2047 = vmatprep.subr.bf16.mxu0 0
    %2048 = vmatpush2.bf16.msra.mxu0 0
    %2049 = vmatprep.subr.bf16.mxu0 0
    %2050 = vmatpush2.bf16.msra.mxu0 0
    %2051 = vmatprep.subr.bf16.mxu0 0
    %2052 = vmatpush2.bf16.msra.mxu0 0
    %2053 = vmatprep.mubr.bf16.mxu0 0
    %2054 = vmatmul.mubr.bf16.gmra.mxu0 %v2016
    %v2055 = vpop.f32.mrf.mxu0
    %v2056 = vadd.f32 0.0, %v2055
    %v2057 = vpop.f32.mrf.mxu0
    %v2058 = vpop.f32.mrf.mxu0
    %v2059 = vpop.f32.mrf.mxu0
    %2060 = vdwg.mxu0
    %v2061 = vadd.f32 %v1895, %v2056
    %2062 = vrot.lane.b32.xlu0 %v1594, 104
    %v2063 = vpop.permute.xlu0 %2062
    %v2065 = vsel %vm409, %v2063, 0
    %2067 = vmatprep.subr.bf16.mxu0 0
    %2068 = vmatpush1.bf16.xpose.msra.mxu0 0
    %2069 = vmatprep.subr.bf16.mxu0 0
    %2070 = vmatpush1.bf16.xpose.msra.mxu0 0
    %2071 = vmatprep.subr.bf16.mxu0 0
    %2072 = vmatpush1.bf16.xpose.msra.mxu0 0
    %2073 = vmatprep.subr.bf16.mxu0 0
    %2074 = vmatpush1.bf16.xpose.msra.mxu0 0
    %2075 = vmatprep.subr.bf16.mxu0 0
    %2076 = vmatpush1.bf16.xpose.msra.mxu0 0
    %2077 = vmatprep.subr.bf16.mxu0 0
    %2078 = vmatpush1.bf16.xpose.msra.mxu0 0
    %2079 = vmatprep.subr.bf16.mxu0 0
    %2080 = vmatpush1.bf16.xpose.msra.mxu0 0
    %2081 = vmatprep.subr.bf16.mxu0 0
    %2082 = vmatpush1.bf16.xpose.msra.mxu0 %v1909
    %2083 = vmatprep.subr.bf16.mxu0 0
    %2084 = vmatpush2.bf16.xpose.msra.mxu0 0
    %2085 = vmatprep.subr.bf16.mxu0 0
    %2086 = vmatpush2.bf16.xpose.msra.mxu0 0
    %2087 = vmatprep.subr.bf16.mxu0 0
    %2088 = vmatpush2.bf16.xpose.msra.mxu0 0
    %2089 = vmatprep.subr.bf16.mxu0 0
    %2090 = vmatpush2.bf16.xpose.msra.mxu0 0
    %2091 = vmatprep.subr.bf16.mxu0 0
    %2092 = vmatpush2.bf16.xpose.msra.mxu0 0
    %2093 = vmatprep.subr.bf16.mxu0 0
    %2094 = vmatpush2.bf16.xpose.msra.mxu0 0
    %2095 = vmatprep.subr.bf16.mxu0 0
    %2096 = vmatpush2.bf16.xpose.msra.mxu0 0
    %2097 = vmatprep.subr.bf16.mxu0 0
    %2098 = vmatpush2.bf16.xpose.msra.mxu0 0
    %2099 = vmatprep.mubr.bf16.mxu0 0
    %2100 = vmatmul.mubr.bf16.gmra.mxu0 %v2065
    %v2101 = vpop.f32.mrf.mxu0
    %v2102 = vadd.f32 0.0, %v2101
    %v2103 = vpop.f32.mrf.mxu0
    %v2104 = vpop.f32.mrf.mxu0
    %v2105 = vpop.f32.mrf.mxu0
    %2106 = vdwg.mxu0
    %v2107 = vmul.f32 %v2102, 0.35355338
    %v2108 = vsel %vm86, %v2107, -1e+30
    %v2109 = vsel %vm409, %v2108, -inf
    %2110 = vmax.xlane.f32.xlu0 %v2109
    %v2111 = vpop.xlane.xlu0 %2110
    %v2112 = vsub.f32 %v2108, %v2111
    %v2113 = vmul.f32 %v2112, 1.442695
    %v2114 = vpow.pop %v2113
    %v2115 = vsel %vm409, %v2114, 0.0
    %2116 = vadd.xlane.f32.xlu0 %v2115
    %v2117 = vpop.xlane.xlu0 %2116
    %v2118 = vpack.c.bf16 %v2114, %v2114
    %v2120 = vsel %vm409, %v2118, 0
    %2122 = vmatprep.subr.bf16.mxu0 0
    %2123 = vmatpush1.bf16.msra.mxu0 0
    %2124 = vmatprep.subr.bf16.mxu0 0
    %2125 = vmatpush1.bf16.msra.mxu0 0
    %2126 = vmatprep.subr.bf16.mxu0 0
    %2127 = vmatpush1.bf16.msra.mxu0 0
    %2128 = vmatprep.subr.bf16.mxu0 0
    %2129 = vmatpush1.bf16.msra.mxu0 0
    %2130 = vmatprep.subr.bf16.mxu0 0
    %2131 = vmatpush1.bf16.msra.mxu0 0
    %2132 = vmatprep.subr.bf16.mxu0 0
    %2133 = vmatpush1.bf16.msra.mxu0 0
    %2134 = vmatprep.subr.bf16.mxu0 0
    %2135 = vmatpush1.bf16.msra.mxu0 0
    %2136 = vmatprep.subr.bf16.mxu0 0
    %2137 = vmatpush1.bf16.msra.mxu0 %v1970
    %2138 = vmatprep.subr.bf16.mxu0 0
    %2139 = vmatpush2.bf16.msra.mxu0 0
    %2140 = vmatprep.subr.bf16.mxu0 0
    %2141 = vmatpush2.bf16.msra.mxu0 0
    %2142 = vmatprep.subr.bf16.mxu0 0
    %2143 = vmatpush2.bf16.msra.mxu0 0
    %2144 = vmatprep.subr.bf16.mxu0 0
    %2145 = vmatpush2.bf16.msra.mxu0 0
    %2146 = vmatprep.subr.bf16.mxu0 0
    %2147 = vmatpush2.bf16.msra.mxu0 0
    %2148 = vmatprep.subr.bf16.mxu0 0
    %2149 = vmatpush2.bf16.msra.mxu0 0
    %2150 = vmatprep.subr.bf16.mxu0 0
    %2151 = vmatpush2.bf16.msra.mxu0 0
    %2152 = vmatprep.subr.bf16.mxu0 0
    %2153 = vmatpush2.bf16.msra.mxu0 0
    %2154 = vmatprep.mubr.bf16.mxu0 0
    %2155 = vmatmul.mubr.bf16.gmra.mxu0 %v2120
    %v2156 = vpop.f32.mrf.mxu0
    %v2157 = vadd.f32 0.0, %v2156
    %v2158 = vpop.f32.mrf.mxu0
    %v2159 = vpop.f32.mrf.mxu0
    %v2160 = vpop.f32.mrf.mxu0
    %2161 = vdwg.mxu0
    %v2162 = vrcp.pop %v2117
    %v2163 = vmul.f32 %v2157, %v2162
    %v2164 = vpack.c.bf16 %v2163, %v2163
    %v2166 = vsel %vm409, %v2164, 0
    %v2169 = vsel %vm471, %v1593, 0
    %2171 = vmatprep.subr.bf16.mxu0 0
    %2172 = vmatpush1.bf16.msra.mxu0 0
    %2173 = vmatprep.subr.bf16.mxu0 0
    %2174 = vmatpush1.bf16.msra.mxu0 0
    %2175 = vmatprep.subr.bf16.mxu0 0
    %2176 = vmatpush1.bf16.msra.mxu0 0
    %2177 = vmatprep.subr.bf16.mxu0 0
    %2178 = vmatpush1.bf16.msra.mxu0 0
    %2179 = vmatprep.subr.bf16.mxu0 0
    %2180 = vmatpush1.bf16.msra.mxu0 0
    %2181 = vmatprep.subr.bf16.mxu0 0
    %2182 = vmatpush1.bf16.msra.mxu0 0
    %2183 = vmatprep.subr.bf16.mxu0 0
    %2184 = vmatpush1.bf16.msra.mxu0 0
    %2185 = vmatprep.subr.bf16.mxu0 0
    %2186 = vmatpush1.bf16.msra.mxu0 %v2169
    %2187 = vmatprep.subr.bf16.mxu0 0
    %2188 = vmatpush2.bf16.msra.mxu0 0
    %2189 = vmatprep.subr.bf16.mxu0 0
    %2190 = vmatpush2.bf16.msra.mxu0 0
    %2191 = vmatprep.subr.bf16.mxu0 0
    %2192 = vmatpush2.bf16.msra.mxu0 0
    %2193 = vmatprep.subr.bf16.mxu0 0
    %2194 = vmatpush2.bf16.msra.mxu0 0
    %2195 = vmatprep.subr.bf16.mxu0 0
    %2196 = vmatpush2.bf16.msra.mxu0 0
    %2197 = vmatprep.subr.bf16.mxu0 0
    %2198 = vmatpush2.bf16.msra.mxu0 0
    %2199 = vmatprep.subr.bf16.mxu0 0
    %2200 = vmatpush2.bf16.msra.mxu0 0
    %2201 = vmatprep.subr.bf16.mxu0 0
    %2202 = vmatpush2.bf16.msra.mxu0 0
    %2203 = vmatprep.mubr.bf16.mxu0 0
    %2204 = vmatmul.mubr.bf16.gmra.mxu0 %v2166
    %v2205 = vpop.f32.mrf.mxu0
    %v2206 = vadd.f32 0.0, %v2205
    %v2207 = vpop.f32.mrf.mxu0
    %v2208 = vpop.f32.mrf.mxu0
    %v2209 = vpop.f32.mrf.mxu0
    %2210 = vdwg.mxu0
    %v2211 = vadd.f32 %v2061, %v2206
    %v2212 = vadd.f32 %v1293, %v2211
    %s2213 = scalar_lea.vmem %s7, 1
    %v2214 = vld [vmem:[%s2213] sm:$0x1]
    %v2215 = vmul.f32 %v2212, %v2212
    %2216 = vadd.xlane.f32.xlu0 %v2215
    %v2217 = vpop.xlane.xlu0 %2216
    %v2218 = vmul.f32 %v2217, 0.03125
    %v2219 = vadd.f32 %v2218, 1e-05
    %v2220 = vrsqrt.pop %v2219
    %v2221 = vmul.f32 %v2212, %v2220
    %v2223 = vlaneseq
    %v2224 = vshrl.u32 %v2223, 7
    %v2225 = vsub.s32 0, %v2224
    %v2226 = vrot.slane %v2214, %v2225
    %v2228 = vmul.f32 %v2221, %v2226
    %v2229 = vpack.c.bf16 %v2228, %v2228
    %s2230 = scalar_lea.vmem [#allocation5], 128
    %v2231 = vld [vmem:[%s2230] sm:$0xff]
    %v2232 = vld [vmem:[%s2230 + $0x8] sm:$0xff]
    %v2233 = vld [vmem:[%s2230 + $0x10] sm:$0xff]
    %v2234 = vld [vmem:[%s2230 + $0x18] sm:$0xff]
    %v2235 = vld [vmem:[%s2230 + $0x20] sm:$0xff]
    %v2236 = vld [vmem:[%s2230 + $0x28] sm:$0xff]
    %v2237 = vld [vmem:[%s2230 + $0x30] sm:$0xff]
    %v2238 = vld [vmem:[%s2230 + $0x38] sm:$0xff]
    %v2239 = vld [vmem:[%s2230 + $0x40] sm:$0xff]
    %v2240 = vld [vmem:[%s2230 + $0x48] sm:$0xff]
    %v2241 = vld [vmem:[%s2230 + $0x50] sm:$0xff]
    %v2242 = vld [vmem:[%s2230 + $0x58] sm:$0xff]
    %v2243 = vld [vmem:[%s2230 + $0x60] sm:$0xff]
    %v2244 = vld [vmem:[%s2230 + $0x68] sm:$0xff]
    %v2245 = vld [vmem:[%s2230 + $0x70] sm:$0xff]
    %v2246 = vld [vmem:[%s2230 + $0x78] sm:$0xff]
    %v2263 = vunpack.c.l.b16 %v2231
    %v2264 = vunpack.c.h.b16 %v2231
    %v2265 = vunpack.c.l.b16 %v2232
    %v2266 = vunpack.c.h.b16 %v2232
    %v2267 = vunpack.c.l.b16 %v2233
    %v2268 = vunpack.c.h.b16 %v2233
    %v2269 = vunpack.c.l.b16 %v2234
    %v2270 = vunpack.c.h.b16 %v2234
    %v2271 = vunpack.c.l.b16 %v2235
    %v2272 = vunpack.c.h.b16 %v2235
    %v2273 = vunpack.c.l.b16 %v2236
    %v2274 = vunpack.c.h.b16 %v2236
    %v2275 = vunpack.c.l.b16 %v2237
    %v2276 = vunpack.c.h.b16 %v2237
    %v2277 = vunpack.c.l.b16 %v2238
    %v2278 = vunpack.c.h.b16 %v2238
    %v2279 = vunpack.c.l.b16 %v2239
    %v2280 = vunpack.c.h.b16 %v2239
    %v2281 = vunpack.c.l.b16 %v2240
    %v2282 = vunpack.c.h.b16 %v2240
    %v2283 = vunpack.c.l.b16 %v2241
    %v2284 = vunpack.c.h.b16 %v2241
    %v2285 = vunpack.c.l.b16 %v2242
    %v2286 = vunpack.c.h.b16 %v2242
    %v2287 = vunpack.c.l.b16 %v2243
    %v2288 = vunpack.c.h.b16 %v2243
    %v2289 = vunpack.c.l.b16 %v2244
    %v2290 = vunpack.c.h.b16 %v2244
    %v2291 = vunpack.c.l.b16 %v2245
    %v2292 = vunpack.c.h.b16 %v2245
    %v2293 = vunpack.c.l.b16 %v2246
    %v2294 = vunpack.c.h.b16 %v2246
    %v2295 = vpack.c.b16 %v2265, %v2263
    %v2296 = vpack.c.b16 %v2266, %v2264
    %v2297 = vpack.c.b16 %v2269, %v2267
    %v2298 = vpack.c.b16 %v2270, %v2268
    %v2299 = vpack.c.b16 %v2273, %v2271
    %v2300 = vpack.c.b16 %v2274, %v2272
    %v2301 = vpack.c.b16 %v2277, %v2275
    %v2302 = vpack.c.b16 %v2278, %v2276
    %v2303 = vpack.c.b16 %v2281, %v2279
    %v2304 = vpack.c.b16 %v2282, %v2280
    %v2305 = vpack.c.b16 %v2285, %v2283
    %v2306 = vpack.c.b16 %v2286, %v2284
    %v2307 = vpack.c.b16 %v2289, %v2287
    %v2308 = vpack.c.b16 %v2290, %v2288
    %v2309 = vpack.c.b16 %v2293, %v2291
    %v2310 = vpack.c.b16 %v2294, %v2292
    %2327 = vmatprep.subr.bf16.mxu0 %v2310
    %2328 = vmatpush1.bf16.msra.mxu0 %v2309
    %2329 = vmatprep.subr.bf16.mxu0 %v2308
    %2330 = vmatpush1.bf16.msra.mxu0 %v2307
    %2331 = vmatprep.subr.bf16.mxu0 %v2306
    %2332 = vmatpush1.bf16.msra.mxu0 %v2305
    %2333 = vmatprep.subr.bf16.mxu0 %v2304
    %2334 = vmatpush1.bf16.msra.mxu0 %v2303
    %2335 = vmatprep.subr.bf16.mxu0 %v2302
    %2336 = vmatpush1.bf16.msra.mxu0 %v2301
    %2337 = vmatprep.subr.bf16.mxu0 %v2300
    %2338 = vmatpush1.bf16.msra.mxu0 %v2299
    %2339 = vmatprep.subr.bf16.mxu0 %v2298
    %2340 = vmatpush1.bf16.msra.mxu0 %v2297
    %2341 = vmatprep.subr.bf16.mxu0 %v2296
    %2342 = vmatpush1.bf16.msra.mxu0 %v2295
    %2343 = vmatprep.subr.bf16.mxu0 0
    %2344 = vmatpush2.bf16.msra.mxu0 0
    %2345 = vmatprep.subr.bf16.mxu0 0
    %2346 = vmatpush2.bf16.msra.mxu0 0
    %2347 = vmatprep.subr.bf16.mxu0 0
    %2348 = vmatpush2.bf16.msra.mxu0 0
    %2349 = vmatprep.subr.bf16.mxu0 0
    %2350 = vmatpush2.bf16.msra.mxu0 0
    %2351 = vmatprep.subr.bf16.mxu0 0
    %2352 = vmatpush2.bf16.msra.mxu0 0
    %2353 = vmatprep.subr.bf16.mxu0 0
    %2354 = vmatpush2.bf16.msra.mxu0 0
    %2355 = vmatprep.subr.bf16.mxu0 0
    %2356 = vmatpush2.bf16.msra.mxu0 0
    %2357 = vmatprep.subr.bf16.mxu0 0
    %2358 = vmatpush2.bf16.msra.mxu0 0
    %2359 = vmatprep.mubr.bf16.mxu0 0
    %2360 = vmatmul.mubr.bf16.gmra.mxu0 %v2229
    %v2361 = vpop.f32.mrf.mxu0
    %v2362 = vadd.f32 0.0, %v2361
    %v2363 = vpop.f32.mrf.mxu0
    %v2364 = vadd.f32 0.0, %v2363
    %v2365 = vpop.f32.mrf.mxu0
    %v2366 = vpop.f32.mrf.mxu0
    %2367 = vdwg.mxu0
    %v2368 = vxor.u32 %v2362, 2147483648
    %v2369 = vmul.f32 %v2368, 1.442695
    %v2370 = vpow.pop %v2369
    %v2371 = vadd.f32 %v2370, 1.0
    %v2372 = vrcp.pop %v2371
    %v2373 = vmul.f32 1.0, %v2372
    %v2374 = vmul.f32 %v2362, %v2373
    %v2375 = vmul.f32 %v2374, %v2364
    %v2376 = vpack.c.bf16 %v2375, %v2375
    %s2377 = scalar_lea.vmem [#allocation7], 64
    %v2378 = vld [vmem:[%s2377] sm:$0xf]
    %v2379 = vld [vmem:[%s2377 + $0x4] sm:$0xf]
    %v2380 = vld [vmem:[%s2377 + $0x8] sm:$0xf]
    %v2381 = vld [vmem:[%s2377 + $0xc] sm:$0xf]
    %v2382 = vld [vmem:[%s2377 + $0x10] sm:$0xf]
    %v2383 = vld [vmem:[%s2377 + $0x14] sm:$0xf]
    %v2384 = vld [vmem:[%s2377 + $0x18] sm:$0xf]
    %v2385 = vld [vmem:[%s2377 + $0x1c] sm:$0xf]
    %v2386 = vld [vmem:[%s2377 + $0x20] sm:$0xf]
    %v2387 = vld [vmem:[%s2377 + $0x24] sm:$0xf]
    %v2388 = vld [vmem:[%s2377 + $0x28] sm:$0xf]
    %v2389 = vld [vmem:[%s2377 + $0x2c] sm:$0xf]
    %v2390 = vld [vmem:[%s2377 + $0x30] sm:$0xf]
    %v2391 = vld [vmem:[%s2377 + $0x34] sm:$0xf]
    %v2392 = vld [vmem:[%s2377 + $0x38] sm:$0xf]
    %v2393 = vld [vmem:[%s2377 + $0x3c] sm:$0xf]
    %v2410 = vunpack.c.l.b16 %v2378
    %v2411 = vunpack.c.l.b16 %v2379
    %v2412 = vunpack.c.l.b16 %v2380
    %v2413 = vunpack.c.l.b16 %v2381
    %v2414 = vunpack.c.l.b16 %v2382
    %v2415 = vunpack.c.l.b16 %v2383
    %v2416 = vunpack.c.l.b16 %v2384
    %v2417 = vunpack.c.l.b16 %v2385
    %v2418 = vunpack.c.l.b16 %v2386
    %v2419 = vunpack.c.l.b16 %v2387
    %v2420 = vunpack.c.l.b16 %v2388
    %v2421 = vunpack.c.l.b16 %v2389
    %v2422 = vunpack.c.l.b16 %v2390
    %v2423 = vunpack.c.l.b16 %v2391
    %v2424 = vunpack.c.l.b16 %v2392
    %v2425 = vunpack.c.l.b16 %v2393
    %v2426 = vpack.c.b16 %v2411, %v2410
    %v2427 = vpack.c.b16 %v2413, %v2412
    %v2428 = vpack.c.b16 %v2415, %v2414
    %v2429 = vpack.c.b16 %v2417, %v2416
    %v2430 = vpack.c.b16 %v2419, %v2418
    %v2431 = vpack.c.b16 %v2421, %v2420
    %v2432 = vpack.c.b16 %v2423, %v2422
    %v2433 = vpack.c.b16 %v2425, %v2424
    %2442 = vmatprep.subr.bf16.mxu0 0
    %2443 = vmatpush1.bf16.msra.mxu0 %v2433
    %2444 = vmatprep.subr.bf16.mxu0 0
    %2445 = vmatpush1.bf16.msra.mxu0 %v2432
    %2446 = vmatprep.subr.bf16.mxu0 0
    %2447 = vmatpush1.bf16.msra.mxu0 %v2431
    %2448 = vmatprep.subr.bf16.mxu0 0
    %2449 = vmatpush1.bf16.msra.mxu0 %v2430
    %2450 = vmatprep.subr.bf16.mxu0 0
    %2451 = vmatpush1.bf16.msra.mxu0 %v2429
    %2452 = vmatprep.subr.bf16.mxu0 0
    %2453 = vmatpush1.bf16.msra.mxu0 %v2428
    %2454 = vmatprep.subr.bf16.mxu0 0
    %2455 = vmatpush1.bf16.msra.mxu0 %v2427
    %2456 = vmatprep.subr.bf16.mxu0 0
    %2457 = vmatpush1.bf16.msra.mxu0 %v2426
    %2458 = vmatprep.subr.bf16.mxu0 0
    %2459 = vmatpush2.bf16.msra.mxu0 0
    %2460 = vmatprep.subr.bf16.mxu0 0
    %2461 = vmatpush2.bf16.msra.mxu0 0
    %2462 = vmatprep.subr.bf16.mxu0 0
    %2463 = vmatpush2.bf16.msra.mxu0 0
    %2464 = vmatprep.subr.bf16.mxu0 0
    %2465 = vmatpush2.bf16.msra.mxu0 0
    %2466 = vmatprep.subr.bf16.mxu0 0
    %2467 = vmatpush2.bf16.msra.mxu0 0
    %2468 = vmatprep.subr.bf16.mxu0 0
    %2469 = vmatpush2.bf16.msra.mxu0 0
    %2470 = vmatprep.subr.bf16.mxu0 0
    %2471 = vmatpush2.bf16.msra.mxu0 0
    %2472 = vmatprep.subr.bf16.mxu0 0
    %2473 = vmatpush2.bf16.msra.mxu0 0
    %2474 = vmatprep.mubr.bf16.mxu0 0
    %2475 = vmatmul.mubr.bf16.gmra.mxu0 %v2376
    %v2476 = vpop.f32.mrf.mxu0
    %v2477 = vadd.f32 0.0, %v2476
    %v2478 = vpop.f32.mrf.mxu0
    %v2479 = vpop.f32.mrf.mxu0
    %v2480 = vpop.f32.mrf.mxu0
    %2481 = vdwg.mxu0
    %v2482 = vadd.f32 %v2212, %v2477
    %v2483 = vld [vmem:[%s10] sm:$0x1]
    %v2484 = vmul.f32 %v2482, %v2482
    %2485 = vadd.xlane.f32.xlu0 %v2484
    %v2486 = vpop.xlane.xlu0 %2485
    %v2487 = vmul.f32 %v2486, 0.03125
    %v2488 = vadd.f32 %v2487, 1e-05
    %v2489 = vrsqrt.pop %v2488
    %v2490 = vmul.f32 %v2482, %v2489
    %v2492 = vlaneseq
    %v2493 = vshrl.u32 %v2492, 7
    %v2494 = vsub.s32 0, %v2493
    %v2495 = vrot.slane %v2483, %v2494
    %v2497 = vmul.f32 %v2490, %v2495
    %2498 = vst [vmem:[#allocation8] sm:$0xff] %v2497
    // Predicated region
    $region58: #{chatglm_forward.1} parent=1 // pred_check
      _
    $region59: #{chatglm_forward.1} parent=1 // pred_check_branch
      %2500 = sbr.rel (0) target = $region61
    $region60: #{chatglm_forward.1} parent=1 // pred_region
      %s2502 = ssub.s32 128, 128
      %2503 = vsyncadd [#allocation4], %s2502
      %s2505 = sshll.u32 [#allocation8], 4
      %s2506 = int_to_ptr.vmem [resolvable:$true] %s2505
      %2508 = dma.vmem_to_hbm [thread:$0]  %s2506, 128, %s11, [#allocation4]
    $region61: #{chatglm_forward.1} parent=1 // pred_fallthru
      _
    // Predicated region
    $region62: #{chatglm_forward.1} parent=1 // pred_check
      _
    $region63: #{chatglm_forward.1} parent=1 // pred_check_branch
      %2510 = sbr.rel (0) target = $region65
    $region64: #{chatglm_forward.1} parent=1 // pred_region
      %2511 = dma.done [#allocation4], 128
    $region65: #{chatglm_forward.1} parent=1 // pred_fallthru
      _
    %2512 = vsyncpa [#allocation3], 1
    %2513 = vsyncpa [#allocation6], 1
    %2514 = vsyncpa [#allocation4], 1

</llo_original>
